<compile_context>
chip_gen: v7x
topology: tpu7x:2x2x1
jax: 0.10.0
libtpu: 0.0.40
codegen_flags: <defaults>
</compile_context>

<pallas_src>
import jax
import jax.numpy as jnp
from jax.experimental import pallas as pl
from jax.experimental.pallas import tpu as pltpu

NEG_SLOPE = 0.2
BN_EPS = 1e-5


def _linear_bf16(x_f32, w_ref, b_ref):
    """bf16 MXU matmul with f32 accumulation + f32 bias."""
    return jnp.dot(x_f32.astype(jnp.bfloat16), w_ref[...],
                   preferred_element_type=jnp.float32) + b_ref[...]


# --------------------------------------------------------------------------
# Stage 1: attention branch + residual + full-batch diversity scaling.
# Ungridded (whole batch resident) because std reduces over the batch axis.
# --------------------------------------------------------------------------
def attention_enhance_kernel(x_ref, aw1_ref, ab1_ref, aw2_ref, ab2_ref,
                             enh_ref):
    x = x_ref[...]                                               # (B, D) f32

    h = jnp.maximum(_linear_bf16(x, aw1_ref, ab1_ref), 0.0)      # ReLU
    logits = _linear_bf16(h, aw2_ref, ab2_ref)                   # (B, D)
    logits = logits - jnp.max(logits, axis=1, keepdims=True)     # stable softmax
    e = jnp.exp(logits)
    attn = e / jnp.sum(e, axis=1, keepdims=True)                 # Softmax(dim=1)

    enhanced = x + x * attn                                      # residual attn
    b = enhanced.shape[0]
    mean = jnp.mean(enhanced, axis=0, keepdims=True)
    var = jnp.sum((enhanced - mean) ** 2, axis=0, keepdims=True) / (b - 1)
    enh_ref[...] = enhanced * (1.0 + 0.1 * jnp.sqrt(var))        # torch.std (unbiased)


# --------------------------------------------------------------------------
# Stage 2: main MLP.  Gridded over batch tiles; weights held resident.
# BN(eval) is already folded into the weights/biases; Dropout is identity.
# --------------------------------------------------------------------------
def mlp_kernel(enh_ref,
               w1_ref, b1_ref, w2_ref, b2_ref, w3_ref, b3_ref,
               w4_ref, b4_ref, w5_ref, b5_ref, w6_ref, b6_ref,
               out_ref):
    def block(y, w_ref, b_ref):
        y = _linear_bf16(y, w_ref, b_ref)          # Linear + folded BN(eval)
        return jnp.where(y > 0, y, NEG_SLOPE * y)  # LeakyReLU(0.2)

    y = block(enh_ref[...], w1_ref, b1_ref)        # D   -> 768
    y = block(y,            w2_ref, b2_ref)        # 768 -> 512
    y = block(y,            w3_ref, b3_ref)        # 512 -> 384
    y = block(y,            w4_ref, b4_ref)        # 384 -> 256
    y = block(y,            w5_ref, b5_ref)        # 256 -> 128
    # Final 128 -> 1 as VPU multiply + lane reduction (avoids an N=1 MXU pass).
    out_ref[...] = jnp.sum(y * w6_ref[...], axis=1, keepdims=True) + b6_ref[...]


# --------------------------------------------------------------------------
# Parameters: kaiming-normal-style init (fan_in, leaky_relu gain), bias=0.01,
# eval-mode BN folded into the hidden layers, large weights cast to bf16.
# --------------------------------------------------------------------------
def init_params(key, input_dim):
    gain = (2.0 / (1.0 + NEG_SLOPE ** 2)) ** 0.5
    bn_scale = 1.0 / (1.0 + BN_EPS) ** 0.5          # eval BN with fresh stats

    def make(k, din, dout):
        w = jax.random.normal(k, (din, dout), dtype=jnp.float32) * (gain / din ** 0.5)
        b = jnp.full((1, dout), 0.01, dtype=jnp.float32)
        return w, b

    keys = jax.random.split(key, 8)
    aw1, ab1 = make(keys[0], input_dim, 128)
    aw2, ab2 = make(keys[1], 128, input_dim)
    w1, b1 = make(keys[2], input_dim, 768)
    w2, b2 = make(keys[3], 768, 512)
    w3, b3 = make(keys[4], 512, 384)
    w4, b4 = make(keys[5], 384, 256)
    w5, b5 = make(keys[6], 256, 128)
    w6, b6 = make(keys[7], 128, 1)

    # Fold eval-mode BatchNorm1d (mean=0, var=1, gamma=1, beta=0) into Linear.
    folded = [(w * bn_scale, b * bn_scale)
              for (w, b) in ((w1, b1), (w2, b2), (w3, b3), (w4, b4), (w5, b5))]
    (w1, b1), (w2, b2), (w3, b3), (w4, b4), (w5, b5) = folded

    bf16 = lambda a: a.astype(jnp.bfloat16)
    attn_params = (bf16(aw1), ab1, bf16(aw2), ab2)
    mlp_params = (bf16(w1), b1, bf16(w2), b2, bf16(w3), b3,
                  bf16(w4), b4, bf16(w5), b5,
                  w6.reshape(1, 128), b6.reshape(1, 1))   # final layer stays f32 (tiny)
    return attn_params, mlp_params


# --------------------------------------------------------------------------
# Wrapper
# --------------------------------------------------------------------------
@jax.jit
def enhanced_upvote_predictor(x, attn_params, mlp_params):
    batch, input_dim = x.shape
    assert batch >= 2, "unbiased std over dim=0 requires batch >= 2"

    vmem = pl.BlockSpec(memory_space=pltpu.MemorySpace.VMEM)

    # Stage 1: ungridded — needs the whole batch for the std reduction.
    enhanced = pl.pallas_call(
        attention_enhance_kernel,
        out_shape=jax.ShapeDtypeStruct((batch, input_dim), jnp.float32),
        in_specs=[vmem] * 5,
        out_specs=vmem,
    )(x, *attn_params)

    # Stage 2: 1-D grid over batch tiles; weights resident via index_map (0,0).
    tile_b = 128 if (batch % 128 == 0) else batch
    grid = (batch // tile_b,)
    weight_specs = [pl.BlockSpec(p.shape, lambda i: (0, 0)) for p in mlp_params]

    out = pl.pallas_call(
        mlp_kernel,
        out_shape=jax.ShapeDtypeStruct((batch, 1), jnp.float32),
        grid=grid,
        in_specs=[pl.BlockSpec((tile_b, input_dim), lambda i: (i, 0))] + weight_specs,
        out_specs=pl.BlockSpec((tile_b, 1), lambda i: (i, 0)),
        compiler_params=pltpu.CompilerParams(
            dimension_semantics=("parallel",),      # shards batch tiles on v7x's 2 TCs
            vmem_limit_bytes=32 << 20,
        ),
    )(enhanced, *mlp_params)
    return out


if __name__ == "__main__":
    key = jax.random.PRNGKey(0)
    batch, input_dim = 8, 256

    key, xk = jax.random.split(key)
    x = jax.random.normal(xk, (batch, input_dim), dtype=jnp.float32)

    attn_params, mlp_params = init_params(key, input_dim)

    out = enhanced_upvote_predictor(x, attn_params, mlp_params)
    jax.block_until_ready(out)

    assert out.shape == (batch, 1) and out.dtype == jnp.float32
    assert bool(jnp.all(jnp.isfinite(out)))
    print("KERNEL_OK")
</pallas_src>

<mosaic_0001>
module attributes {stable_mosaic.version = 11 : i64} {
  func.func @mlp_kernel(%arg0: i32, %arg1: memref<8x256xf32, #tpu.memory_space<vmem>>, %arg2: memref<256x768xbf16, #tpu.memory_space<vmem>>, %arg3: memref<1x768xf32, #tpu.memory_space<vmem>>, %arg4: memref<768x512xbf16, #tpu.memory_space<vmem>>, %arg5: memref<1x512xf32, #tpu.memory_space<vmem>>, %arg6: memref<512x384xbf16, #tpu.memory_space<vmem>>, %arg7: memref<1x384xf32, #tpu.memory_space<vmem>>, %arg8: memref<384x256xbf16, #tpu.memory_space<vmem>>, %arg9: memref<1x256xf32, #tpu.memory_space<vmem>>, %arg10: memref<256x128xbf16, #tpu.memory_space<vmem>>, %arg11: memref<1x128xf32, #tpu.memory_space<vmem>>, %arg12: memref<1x128xf32, #tpu.memory_space<vmem>>, %arg13: memref<1x1xf32, #tpu.memory_space<vmem>>, %arg14: memref<8x1xf32, #tpu.memory_space<vmem>>) attributes {dimension_semantics = [#tpu.dimension_semantics<parallel>], iteration_bounds = array<i64: 1>, scalar_prefetch = 0 : i64, scratch_operands = 0 : i64, tpu.core_type = #tpu.core_type<tc>, window_params = [{transform_indices = @transform_0, window_bounds = array<i64: 8, 256>}, {pipeline_mode = #tpu.pipeline_mode<synchronous>, transform_indices = @transform_1, window_bounds = array<i64: 256, 768>}, {pipeline_mode = #tpu.pipeline_mode<synchronous>, transform_indices = @transform_2, window_bounds = array<i64: 1, 768>}, {pipeline_mode = #tpu.pipeline_mode<synchronous>, transform_indices = @transform_3, window_bounds = array<i64: 768, 512>}, {pipeline_mode = #tpu.pipeline_mode<synchronous>, transform_indices = @transform_4, window_bounds = array<i64: 1, 512>}, {pipeline_mode = #tpu.pipeline_mode<synchronous>, transform_indices = @transform_5, window_bounds = array<i64: 512, 384>}, {pipeline_mode = #tpu.pipeline_mode<synchronous>, transform_indices = @transform_6, window_bounds = array<i64: 1, 384>}, {pipeline_mode = #tpu.pipeline_mode<synchronous>, transform_indices = @transform_7, window_bounds = array<i64: 384, 256>}, {pipeline_mode = #tpu.pipeline_mode<synchronous>, transform_indices = @transform_8, window_bounds = array<i64: 1, 256>}, {pipeline_mode = #tpu.pipeline_mode<synchronous>, transform_indices = @transform_9, window_bounds = array<i64: 256, 128>}, {pipeline_mode = #tpu.pipeline_mode<synchronous>, transform_indices = @transform_10, window_bounds = array<i64: 1, 128>}, {pipeline_mode = #tpu.pipeline_mode<synchronous>, transform_indices = @transform_11, window_bounds = array<i64: 1, 128>}, {pipeline_mode = #tpu.pipeline_mode<synchronous>, transform_indices = @transform_12, window_bounds = array<i64: 1, 1>}, {transform_indices = @transform_13, window_bounds = array<i64: 8, 1>}]} {
    %c0 = arith.constant 0 : index
    %c0_0 = arith.constant 0 : index
    %0 = vector.load %arg1[%c0, %c0_0] : memref<8x256xf32, #tpu.memory_space<vmem>>, vector<8x256xf32>
    %1 = arith.truncf %0 : vector<8x256xf32> to vector<8x256xbf16>
    %c0_1 = arith.constant 0 : index
    %c0_2 = arith.constant 0 : index
    %2 = vector.load %arg2[%c0_1, %c0_2] : memref<256x768xbf16, #tpu.memory_space<vmem>>, vector<256x768xbf16>
    %cst = arith.constant dense<0.000000e+00> : vector<8x768xf32>
    %3 = tpu.matmul %1, %2, %cst {dimension_numbers = #tpu.dot_dimension_numbers<[1], [0], [0], [1], [0, 0, 1, 1], [], []>} : vector<8x256xbf16>, vector<256x768xbf16>, vector<8x768xf32> -> vector<8x768xf32>
    %c0_3 = arith.constant 0 : index
    %c0_4 = arith.constant 0 : index
    %4 = vector.load %arg3[%c0_3, %c0_4] : memref<1x768xf32, #tpu.memory_space<vmem>>, vector<1x768xf32>
    %5 = vector.broadcast %4 : vector<1x768xf32> to vector<8x768xf32>
    %6 = arith.addf %3, %5 : vector<8x768xf32>
    %cst_5 = arith.constant 0.000000e+00 : f32
    %7 = vector.broadcast %cst_5 : f32 to vector<8x768xf32>
    %8 = arith.cmpf ogt, %6, %7 : vector<8x768xf32>
    %cst_6 = arith.constant 2.000000e-01 : f32
    %9 = vector.broadcast %cst_6 : f32 to vector<8x768xf32>
    %10 = arith.mulf %9, %6 : vector<8x768xf32>
    %11 = arith.select %8, %6, %10 : vector<8x768xi1>, vector<8x768xf32>
    %12 = arith.truncf %11 : vector<8x768xf32> to vector<8x768xbf16>
    %c0_7 = arith.constant 0 : index
    %c0_8 = arith.constant 0 : index
    %13 = vector.load %arg4[%c0_7, %c0_8] : memref<768x512xbf16, #tpu.memory_space<vmem>>, vector<768x512xbf16>
    %cst_9 = arith.constant dense<0.000000e+00> : vector<8x512xf32>
    %14 = tpu.matmul %12, %13, %cst_9 {dimension_numbers = #tpu.dot_dimension_numbers<[1], [0], [0], [1], [0, 0, 1, 1], [], []>} : vector<8x768xbf16>, vector<768x512xbf16>, vector<8x512xf32> -> vector<8x512xf32>
    %c0_10 = arith.constant 0 : index
    %c0_11 = arith.constant 0 : index
    %15 = vector.load %arg5[%c0_10, %c0_11] : memref<1x512xf32, #tpu.memory_space<vmem>>, vector<1x512xf32>
    %16 = vector.broadcast %15 : vector<1x512xf32> to vector<8x512xf32>
    %17 = arith.addf %14, %16 : vector<8x512xf32>
    %cst_12 = arith.constant 0.000000e+00 : f32
    %18 = vector.broadcast %cst_12 : f32 to vector<8x512xf32>
    %19 = arith.cmpf ogt, %17, %18 : vector<8x512xf32>
    %cst_13 = arith.constant 2.000000e-01 : f32
    %20 = vector.broadcast %cst_13 : f32 to vector<8x512xf32>
    %21 = arith.mulf %20, %17 : vector<8x512xf32>
    %22 = arith.select %19, %17, %21 : vector<8x512xi1>, vector<8x512xf32>
    %23 = arith.truncf %22 : vector<8x512xf32> to vector<8x512xbf16>
    %c0_14 = arith.constant 0 : index
    %c0_15 = arith.constant 0 : index
    %24 = vector.load %arg6[%c0_14, %c0_15] : memref<512x384xbf16, #tpu.memory_space<vmem>>, vector<512x384xbf16>
    %cst_16 = arith.constant dense<0.000000e+00> : vector<8x384xf32>
    %25 = tpu.matmul %23, %24, %cst_16 {dimension_numbers = #tpu.dot_dimension_numbers<[1], [0], [0], [1], [0, 0, 1, 1], [], []>} : vector<8x512xbf16>, vector<512x384xbf16>, vector<8x384xf32> -> vector<8x384xf32>
    %c0_17 = arith.constant 0 : index
    %c0_18 = arith.constant 0 : index
    %26 = vector.load %arg7[%c0_17, %c0_18] : memref<1x384xf32, #tpu.memory_space<vmem>>, vector<1x384xf32>
    %27 = vector.broadcast %26 : vector<1x384xf32> to vector<8x384xf32>
    %28 = arith.addf %25, %27 : vector<8x384xf32>
    %cst_19 = arith.constant 0.000000e+00 : f32
    %29 = vector.broadcast %cst_19 : f32 to vector<8x384xf32>
    %30 = arith.cmpf ogt, %28, %29 : vector<8x384xf32>
    %cst_20 = arith.constant 2.000000e-01 : f32
    %31 = vector.broadcast %cst_20 : f32 to vector<8x384xf32>
    %32 = arith.mulf %31, %28 : vector<8x384xf32>
    %33 = arith.select %30, %28, %32 : vector<8x384xi1>, vector<8x384xf32>
    %34 = arith.truncf %33 : vector<8x384xf32> to vector<8x384xbf16>
    %c0_21 = arith.constant 0 : index
    %c0_22 = arith.constant 0 : index
    %35 = vector.load %arg8[%c0_21, %c0_22] : memref<384x256xbf16, #tpu.memory_space<vmem>>, vector<384x256xbf16>
    %cst_23 = arith.constant dense<0.000000e+00> : vector<8x256xf32>
    %36 = tpu.matmul %34, %35, %cst_23 {dimension_numbers = #tpu.dot_dimension_numbers<[1], [0], [0], [1], [0, 0, 1, 1], [], []>} : vector<8x384xbf16>, vector<384x256xbf16>, vector<8x256xf32> -> vector<8x256xf32>
    %c0_24 = arith.constant 0 : index
    %c0_25 = arith.constant 0 : index
    %37 = vector.load %arg9[%c0_24, %c0_25] : memref<1x256xf32, #tpu.memory_space<vmem>>, vector<1x256xf32>
    %38 = vector.broadcast %37 : vector<1x256xf32> to vector<8x256xf32>
    %39 = arith.addf %36, %38 : vector<8x256xf32>
    %cst_26 = arith.constant 0.000000e+00 : f32
    %40 = vector.broadcast %cst_26 : f32 to vector<8x256xf32>
    %41 = arith.cmpf ogt, %39, %40 : vector<8x256xf32>
    %cst_27 = arith.constant 2.000000e-01 : f32
    %42 = vector.broadcast %cst_27 : f32 to vector<8x256xf32>
    %43 = arith.mulf %42, %39 : vector<8x256xf32>
    %44 = arith.select %41, %39, %43 : vector<8x256xi1>, vector<8x256xf32>
    %45 = arith.truncf %44 : vector<8x256xf32> to vector<8x256xbf16>
    %c0_28 = arith.constant 0 : index
    %c0_29 = arith.constant 0 : index
    %46 = vector.load %arg10[%c0_28, %c0_29] : memref<256x128xbf16, #tpu.memory_space<vmem>>, vector<256x128xbf16>
    %cst_30 = arith.constant dense<0.000000e+00> : vector<8x128xf32>
    %47 = tpu.matmul %45, %46, %cst_30 {dimension_numbers = #tpu.dot_dimension_numbers<[1], [0], [0], [1], [0, 0, 1, 1], [], []>} : vector<8x256xbf16>, vector<256x128xbf16>, vector<8x128xf32> -> vector<8x128xf32>
    %c0_31 = arith.constant 0 : index
    %c0_32 = arith.constant 0 : index
    %48 = vector.load %arg11[%c0_31, %c0_32] : memref<1x128xf32, #tpu.memory_space<vmem>>, vector<1x128xf32>
    %49 = vector.broadcast %48 : vector<1x128xf32> to vector<8x128xf32>
    %50 = arith.addf %47, %49 : vector<8x128xf32>
    %cst_33 = arith.constant 0.000000e+00 : f32
    %51 = vector.broadcast %cst_33 : f32 to vector<8x128xf32>
    %52 = arith.cmpf ogt, %50, %51 : vector<8x128xf32>
    %cst_34 = arith.constant 2.000000e-01 : f32
    %53 = vector.broadcast %cst_34 : f32 to vector<8x128xf32>
    %54 = arith.mulf %53, %50 : vector<8x128xf32>
    %55 = arith.select %52, %50, %54 : vector<8x128xi1>, vector<8x128xf32>
    %c0_35 = arith.constant 0 : index
    %c0_36 = arith.constant 0 : index
    %56 = vector.load %arg12[%c0_35, %c0_36] : memref<1x128xf32, #tpu.memory_space<vmem>>, vector<1x128xf32>
    %57 = vector.broadcast %56 : vector<1x128xf32> to vector<8x128xf32>
    %58 = arith.mulf %55, %57 : vector<8x128xf32>
    %cst_37 = arith.constant dense<0.000000e+00> : vector<8xf32>
    %59 = vector.multi_reduction <add>, %58, %cst_37 [1] : vector<8x128xf32> to vector<8xf32>
    %60 = vector.shape_cast %59 : vector<8xf32> to vector<8x1xf32>
    %c0_38 = arith.constant 0 : index
    %c0_39 = arith.constant 0 : index
    %61 = vector.load %arg13[%c0_38, %c0_39] : memref<1x1xf32, #tpu.memory_space<vmem>>, vector<1x1xf32>
    %62 = vector.broadcast %61 : vector<1x1xf32> to vector<8x1xf32>
    %63 = arith.addf %60, %62 : vector<8x1xf32>
    %c0_40 = arith.constant 0 : index
    %c0_41 = arith.constant 0 : index
    %64 = vector.load %arg14[%c0_40, %c0_41] : memref<8x1xf32, #tpu.memory_space<vmem>>, vector<8x1xf32>
    tpu.vector_store %arg14[%c0_40, %c0_41], %63 {strides = array<i32>} : memref<8x1xf32, #tpu.memory_space<vmem>>, vector<8x1xf32>,
    return
  }
  func.func @transform_0(%arg0: i32) -> (i32, i32) {
    %c0_i32 = arith.constant 0 : i32
    %c0_i32_0 = arith.constant 0 : i32
    return %arg0, %c0_i32 : i32, i32
  }
  func.func @transform_1(%arg0: i32) -> (i32, i32) {
    %c0_i32 = arith.constant 0 : i32
    %c0_i32_0 = arith.constant 0 : i32
    %c0_i32_1 = arith.constant 0 : i32
    return %c0_i32, %c0_i32_0 : i32, i32
  }
  func.func @transform_2(%arg0: i32) -> (i32, i32) {
    %c0_i32 = arith.constant 0 : i32
    %c0_i32_0 = arith.constant 0 : i32
    %c0_i32_1 = arith.constant 0 : i32
    return %c0_i32, %c0_i32_0 : i32, i32
  }
  func.func @transform_3(%arg0: i32) -> (i32, i32) {
    %c0_i32 = arith.constant 0 : i32
    %c0_i32_0 = arith.constant 0 : i32
    %c0_i32_1 = arith.constant 0 : i32
    return %c0_i32, %c0_i32_0 : i32, i32
  }
  func.func @transform_4(%arg0: i32) -> (i32, i32) {
    %c0_i32 = arith.constant 0 : i32
    %c0_i32_0 = arith.constant 0 : i32
    %c0_i32_1 = arith.constant 0 : i32
    return %c0_i32, %c0_i32_0 : i32, i32
  }
  func.func @transform_5(%arg0: i32) -> (i32, i32) {
    %c0_i32 = arith.constant 0 : i32
    %c0_i32_0 = arith.constant 0 : i32
    %c0_i32_1 = arith.constant 0 : i32
    return %c0_i32, %c0_i32_0 : i32, i32
  }
  func.func @transform_6(%arg0: i32) -> (i32, i32) {
    %c0_i32 = arith.constant 0 : i32
    %c0_i32_0 = arith.constant 0 : i32
    %c0_i32_1 = arith.constant 0 : i32
    return %c0_i32, %c0_i32_0 : i32, i32
  }
  func.func @transform_7(%arg0: i32) -> (i32, i32) {
    %c0_i32 = arith.constant 0 : i32
    %c0_i32_0 = arith.constant 0 : i32
    %c0_i32_1 = arith.constant 0 : i32
    return %c0_i32, %c0_i32_0 : i32, i32
  }
  func.func @transform_8(%arg0: i32) -> (i32, i32) {
    %c0_i32 = arith.constant 0 : i32
    %c0_i32_0 = arith.constant 0 : i32
    %c0_i32_1 = arith.constant 0 : i32
    return %c0_i32, %c0_i32_0 : i32, i32
  }
  func.func @transform_9(%arg0: i32) -> (i32, i32) {
    %c0_i32 = arith.constant 0 : i32
    %c0_i32_0 = arith.constant 0 : i32
    %c0_i32_1 = arith.constant 0 : i32
    return %c0_i32, %c0_i32_0 : i32, i32
  }
  func.func @transform_10(%arg0: i32) -> (i32, i32) {
    %c0_i32 = arith.constant 0 : i32
    %c0_i32_0 = arith.constant 0 : i32
    %c0_i32_1 = arith.constant 0 : i32
    return %c0_i32, %c0_i32_0 : i32, i32
  }
  func.func @transform_11(%arg0: i32) -> (i32, i32) {
    %c0_i32 = arith.constant 0 : i32
    %c0_i32_0 = arith.constant 0 : i32
    %c0_i32_1 = arith.constant 0 : i32
    return %c0_i32, %c0_i32_0 : i32, i32
  }
  func.func @transform_12(%arg0: i32) -> (i32, i32) {
    %c0_i32 = arith.constant 0 : i32
    %c0_i32_0 = arith.constant 0 : i32
    %c0_i32_1 = arith.constant 0 : i32
    return %c0_i32, %c0_i32_0 : i32, i32
  }
  func.func @transform_13(%arg0: i32) -> (i32, i32) {
    %c0_i32 = arith.constant 0 : i32
    %c0_i32_0 = arith.constant 0 : i32
    return %arg0, %c0_i32 : i32, i32
  }
}

module attributes {stable_mosaic.version = 11 : i64} {
  func.func @attention_enhance_kernel(%arg0: memref<8x256xf32, #tpu.memory_space<vmem>>, %arg1: memref<256x128xbf16, #tpu.memory_space<vmem>>, %arg2: memref<1x128xf32, #tpu.memory_space<vmem>>, %arg3: memref<128x256xbf16, #tpu.memory_space<vmem>>, %arg4: memref<1x256xf32, #tpu.memory_space<vmem>>, %arg5: memref<8x256xf32, #tpu.memory_space<vmem>>) attributes {dimension_semantics = [], scalar_prefetch = 0 : i64, scratch_operands = 0 : i64, tpu.core_type = #tpu.core_type<tc>} {
    %c0 = arith.constant 0 : index
    %c0_0 = arith.constant 0 : index
    %0 = vector.load %arg0[%c0, %c0_0] : memref<8x256xf32, #tpu.memory_space<vmem>>, vector<8x256xf32>
    %1 = arith.truncf %0 : vector<8x256xf32> to vector<8x256xbf16>
    %c0_1 = arith.constant 0 : index
    %c0_2 = arith.constant 0 : index
    %2 = vector.load %arg1[%c0_1, %c0_2] : memref<256x128xbf16, #tpu.memory_space<vmem>>, vector<256x128xbf16>
    %cst = arith.constant dense<0.000000e+00> : vector<8x128xf32>
    %3 = tpu.matmul %1, %2, %cst {dimension_numbers = #tpu.dot_dimension_numbers<[1], [0], [0], [1], [0, 0, 1, 1], [], []>} : vector<8x256xbf16>, vector<256x128xbf16>, vector<8x128xf32> -> vector<8x128xf32>
    %c0_3 = arith.constant 0 : index
    %c0_4 = arith.constant 0 : index
    %4 = vector.load %arg2[%c0_3, %c0_4] : memref<1x128xf32, #tpu.memory_space<vmem>>, vector<1x128xf32>
    %5 = vector.broadcast %4 : vector<1x128xf32> to vector<8x128xf32>
    %6 = arith.addf %3, %5 : vector<8x128xf32>
    %cst_5 = arith.constant 0.000000e+00 : f32
    %7 = vector.broadcast %cst_5 : f32 to vector<8x128xf32>
    %8 = arith.maximumf %6, %7 : vector<8x128xf32>
    %9 = arith.truncf %8 : vector<8x128xf32> to vector<8x128xbf16>
    %c0_6 = arith.constant 0 : index
    %c0_7 = arith.constant 0 : index
    %10 = vector.load %arg3[%c0_6, %c0_7] : memref<128x256xbf16, #tpu.memory_space<vmem>>, vector<128x256xbf16>
    %cst_8 = arith.constant dense<0.000000e+00> : vector<8x256xf32>
    %11 = tpu.matmul %9, %10, %cst_8 {dimension_numbers = #tpu.dot_dimension_numbers<[1], [0], [0], [1], [0, 0, 1, 1], [], []>} : vector<8x128xbf16>, vector<128x256xbf16>, vector<8x256xf32> -> vector<8x256xf32>
    %c0_9 = arith.constant 0 : index
    %c0_10 = arith.constant 0 : index
    %12 = vector.load %arg4[%c0_9, %c0_10] : memref<1x256xf32, #tpu.memory_space<vmem>>, vector<1x256xf32>
    %13 = vector.broadcast %12 : vector<1x256xf32> to vector<8x256xf32>
    %14 = arith.addf %11, %13 : vector<8x256xf32>
    %cst_11 = arith.constant dense<0xFF800000> : vector<8xf32>
    %15 = vector.multi_reduction <maximumf>, %14, %cst_11 [1] : vector<8x256xf32> to vector<8xf32>
    %16 = vector.shape_cast %15 : vector<8xf32> to vector<8x1xf32>
    %17 = vector.broadcast %16 : vector<8x1xf32> to vector<8x256xf32>
    %18 = arith.subf %14, %17 : vector<8x256xf32>
    %19 = math.exp %18 : vector<8x256xf32>
    %cst_12 = arith.constant dense<0.000000e+00> : vector<8xf32>
    %20 = vector.multi_reduction <add>, %19, %cst_12 [1] : vector<8x256xf32> to vector<8xf32>
    %21 = vector.shape_cast %20 : vector<8xf32> to vector<8x1xf32>
    %22 = vector.broadcast %21 : vector<8x1xf32> to vector<8x256xf32>
    %23 = arith.divf %19, %22 : vector<8x256xf32>
    %24 = arith.mulf %0, %23 : vector<8x256xf32>
    %25 = arith.addf %0, %24 : vector<8x256xf32>
    %cst_13 = arith.constant dense<0.000000e+00> : vector<256xf32>
    %26 = vector.multi_reduction <add>, %25, %cst_13 [0] : vector<8x256xf32> to vector<256xf32>
    %27 = vector.shape_cast %26 : vector<256xf32> to vector<1x256xf32>
    %cst_14 = arith.constant 8.000000e+00 : f32
    %28 = vector.broadcast %cst_14 : f32 to vector<1x256xf32>
    %29 = arith.divf %27, %28 : vector<1x256xf32>
    %30 = vector.broadcast %29 : vector<1x256xf32> to vector<8x256xf32>
    %31 = arith.subf %25, %30 : vector<8x256xf32>
    %32 = arith.mulf %31, %31 : vector<8x256xf32>
    %cst_15 = arith.constant dense<0.000000e+00> : vector<256xf32>
    %33 = vector.multi_reduction <add>, %32, %cst_15 [0] : vector<8x256xf32> to vector<256xf32>
    %34 = vector.shape_cast %33 : vector<256xf32> to vector<1x256xf32>
    %cst_16 = arith.constant 7.000000e+00 : f32
    %35 = vector.broadcast %cst_16 : f32 to vector<1x256xf32>
    %36 = arith.divf %34, %35 : vector<1x256xf32>
    %37 = math.sqrt %36 : vector<1x256xf32>
    %cst_17 = arith.constant 1.000000e-01 : f32
    %38 = vector.broadcast %cst_17 : f32 to vector<1x256xf32>
    %39 = arith.mulf %38, %37 : vector<1x256xf32>
    %cst_18 = arith.constant 1.000000e+00 : f32
    %40 = vector.broadcast %cst_18 : f32 to vector<1x256xf32>
    %41 = arith.addf %40, %39 : vector<1x256xf32>
    %42 = vector.broadcast %41 : vector<1x256xf32> to vector<8x256xf32>
    %43 = arith.mulf %25, %42 : vector<8x256xf32>
    %c0_19 = arith.constant 0 : index
    %c0_20 = arith.constant 0 : index
    %44 = vector.load %arg5[%c0_19, %c0_20] : memref<8x256xf32, #tpu.memory_space<vmem>>, vector<8x256xf32>
    tpu.vector_store %arg5[%c0_19, %c0_20], %43 {strides = array<i32>} : memref<8x256xf32, #tpu.memory_space<vmem>>, vector<8x256xf32>,
    return
  }
}

</mosaic_0001>

<llo_original>
// kernel: enhanced_upvote_predictor.2
$region0: #{enhanced_upvote_predictor.2}
  #allocation0 [shape = 'u32[]', space=smem, size = 0x4, offset = 0x4, fixed_abs, tag = 'smem constant byte address 0x4 - core index']
  #allocation1 [shape = 'u32[144,128]{1,0:T(1,128)}', space=vmem, size = 0x12000, scoped, tag = 'internal scratch']
  %s0 = inlined_call_operand.hbm [shape: f32[8,256], index: 0, kind: input, shape index: {}]
  %s1 = inlined_call_operand.hbm [shape: bf16[256,128], index: 1, kind: input, shape index: {}]
  %s2 = inlined_call_operand.vmem [shape: f32[1,128], index: 2, kind: input, shape index: {}]
  %s3 = inlined_call_operand.hbm [shape: bf16[128,256], index: 3, kind: input, shape index: {}]
  %s4 = inlined_call_operand.vmem [shape: f32[1,256], index: 4, kind: input, shape index: {}]
  %s5 = inlined_call_operand.vmem [shape: f32[8,256], index: 5, kind: output, shape index: {}]
  %s6 = sld [smem:[#allocation0]]
  $region42: #{enhanced_upvote_predictor.2} parent=0
    _
  %s8 = ssub.s32 1, %s6
  %s9 = scalar_select 0, %s8, %s6
  $region1: #{enhanced_upvote_predictor.2} parent=0
    #allocation2 [shape = 'u8[8192]{0}', space=vmem, size = 0x2000, scoped, tag = 'input window, operand 0, single buffered']
    #allocation3 [shape = 's32[1]{0}', space=sflag, size = 0x4, scoped, tag = 'scoped memory for enhanced_upvote_predictor.2']
    #allocation4 [shape = 'u8[65536]{0}', space=vmem, size = 0x10000, scoped, tag = 'input window, operand 1, single buffered']
    #allocation5 [shape = 's32[1]{0}', space=sflag, size = 0x4, scoped, tag = 'scoped memory for enhanced_upvote_predictor.2']
    #allocation6 [shape = 'u8[65536]{0}', space=vmem, size = 0x10000, scoped, tag = 'input window, operand 3, single buffered']
    %10 = vsyncpa [#allocation3], 0
    %11 = vsyncpa [#allocation5], 0
    // Predicated region
    $region2: #{enhanced_upvote_predictor.2} parent=1 // pred_check
      _
    $region3: #{enhanced_upvote_predictor.2} parent=1 // pred_check_branch
      %13 = sbr.rel (0) target = $region5
    $region4: #{enhanced_upvote_predictor.2} parent=1 // pred_region
      %s15 = ssub.s32 256, 256
      %16 = vsyncadd [#allocation3], %s15
      %s18 = sshll.u32 [#allocation2], 4
      %s19 = int_to_ptr.vmem [resolvable:$true] %s18
      %21 = dma.hbm_to_vmem [thread:$0]  %s0, 256, %s19, [#allocation3]
    $region5: #{enhanced_upvote_predictor.2} parent=1 // pred_fallthru
      _
    // Predicated region
    $region6: #{enhanced_upvote_predictor.2} parent=1 // pred_check
      _
    $region7: #{enhanced_upvote_predictor.2} parent=1 // pred_check_branch
      %23 = sbr.rel (0) target = $region9
    $region8: #{enhanced_upvote_predictor.2} parent=1 // pred_region
      %s25 = ssub.s32 2048, 2048
      %26 = vsyncadd [#allocation5], %s25
      %s27 = sshll.u32 [#allocation4], 4
      %s28 = int_to_ptr.vmem [resolvable:$true] %s27
      %33 = dma.hbm_to_vmem [thread:$0]  %s1, 2048, %s28, [#allocation5], 64, 64, 4
    $region9: #{enhanced_upvote_predictor.2} parent=1 // pred_fallthru
      _
    // Predicated region
    $region10: #{enhanced_upvote_predictor.2} parent=1 // pred_check
      _
    $region11: #{enhanced_upvote_predictor.2} parent=1 // pred_check_branch
      %35 = sbr.rel (0) target = $region13
    $region12: #{enhanced_upvote_predictor.2} parent=1 // pred_region
      _
    $region13: #{enhanced_upvote_predictor.2} parent=1 // pred_fallthru
      _
    // Predicated region
    $region14: #{enhanced_upvote_predictor.2} parent=1 // pred_check
      _
    $region15: #{enhanced_upvote_predictor.2} parent=1 // pred_check_branch
      %37 = sbr.rel (0) target = $region17
    $region16: #{enhanced_upvote_predictor.2} parent=1 // pred_region
      %s39 = ssub.s32 2048, 2048
      %40 = vsyncadd [#allocation5], %s39
      %s41 = sshll.u32 [#allocation6], 4
      %s42 = int_to_ptr.vmem [resolvable:$true] %s41
      %47 = dma.hbm_to_vmem [thread:$0]  %s3, 2048, %s42, [#allocation5], 128, 128, 8
    $region17: #{enhanced_upvote_predictor.2} parent=1 // pred_fallthru
      _
    // Predicated region
    $region18: #{enhanced_upvote_predictor.2} parent=1 // pred_check
      _
    $region19: #{enhanced_upvote_predictor.2} parent=1 // pred_check_branch
      %49 = sbr.rel (0) target = $region21
    $region20: #{enhanced_upvote_predictor.2} parent=1 // pred_region
      _
    $region21: #{enhanced_upvote_predictor.2} parent=1 // pred_fallthru
      _
    // Predicated region
    $region22: #{enhanced_upvote_predictor.2} parent=1 // pred_check
      _
    $region23: #{enhanced_upvote_predictor.2} parent=1 // pred_check_branch
      %51 = sbr.rel (0) target = $region25
    $region24: #{enhanced_upvote_predictor.2} parent=1 // pred_region
      %52 = dma.done [#allocation3], 256
    $region25: #{enhanced_upvote_predictor.2} parent=1 // pred_fallthru
      _
    // Predicated region
    $region26: #{enhanced_upvote_predictor.2} parent=1 // pred_check
      _
    $region27: #{enhanced_upvote_predictor.2} parent=1 // pred_check_branch
      %54 = sbr.rel (0) target = $region29
    $region28: #{enhanced_upvote_predictor.2} parent=1 // pred_region
      %55 = dma.done [#allocation5], 2048
    $region29: #{enhanced_upvote_predictor.2} parent=1 // pred_fallthru
      _
    // Predicated region
    $region30: #{enhanced_upvote_predictor.2} parent=1 // pred_check
      _
    $region31: #{enhanced_upvote_predictor.2} parent=1 // pred_check_branch
      %57 = sbr.rel (0) target = $region33
    $region32: #{enhanced_upvote_predictor.2} parent=1 // pred_region
      %58 = dma.done [#allocation5], 2048
    $region33: #{enhanced_upvote_predictor.2} parent=1 // pred_fallthru
      _
    %v60 = vld [vmem:[#allocation2] sm:$0xff]
    %v61 = vld [vmem:[#allocation2 + $0x8] sm:$0xff]
    %v62 = vpack.c.bf16 %v60, %v60
    %v63 = vpack.c.bf16 %v61, %v61
    %v64 = vld [vmem:[#allocation4] sm:$0xf]
    %v65 = vld [vmem:[#allocation4 + $0x4] sm:$0xf]
    %v66 = vld [vmem:[#allocation4 + $0x8] sm:$0xf]
    %v67 = vld [vmem:[#allocation4 + $0xc] sm:$0xf]
    %v68 = vld [vmem:[#allocation4 + $0x10] sm:$0xf]
    %v69 = vld [vmem:[#allocation4 + $0x14] sm:$0xf]
    %v70 = vld [vmem:[#allocation4 + $0x18] sm:$0xf]
    %v71 = vld [vmem:[#allocation4 + $0x1c] sm:$0xf]
    %v72 = vld [vmem:[#allocation4 + $0x20] sm:$0xf]
    %v73 = vld [vmem:[#allocation4 + $0x24] sm:$0xf]
    %v74 = vld [vmem:[#allocation4 + $0x28] sm:$0xf]
    %v75 = vld [vmem:[#allocation4 + $0x2c] sm:$0xf]
    %v76 = vld [vmem:[#allocation4 + $0x30] sm:$0xf]
    %v77 = vld [vmem:[#allocation4 + $0x34] sm:$0xf]
    %v78 = vld [vmem:[#allocation4 + $0x38] sm:$0xf]
    %v79 = vld [vmem:[#allocation4 + $0x3c] sm:$0xf]
    %v80 = vld [vmem:[#allocation4 + $0x40] sm:$0xf]
    %v81 = vld [vmem:[#allocation4 + $0x44] sm:$0xf]
    %v82 = vld [vmem:[#allocation4 + $0x48] sm:$0xf]
    %v83 = vld [vmem:[#allocation4 + $0x4c] sm:$0xf]
    %v84 = vld [vmem:[#allocation4 + $0x50] sm:$0xf]
    %v85 = vld [vmem:[#allocation4 + $0x54] sm:$0xf]
    %v86 = vld [vmem:[#allocation4 + $0x58] sm:$0xf]
    %v87 = vld [vmem:[#allocation4 + $0x5c] sm:$0xf]
    %v88 = vld [vmem:[#allocation4 + $0x60] sm:$0xf]
    %v89 = vld [vmem:[#allocation4 + $0x64] sm:$0xf]
    %v90 = vld [vmem:[#allocation4 + $0x68] sm:$0xf]
    %v91 = vld [vmem:[#allocation4 + $0x6c] sm:$0xf]
    %v92 = vld [vmem:[#allocation4 + $0x70] sm:$0xf]
    %v93 = vld [vmem:[#allocation4 + $0x74] sm:$0xf]
    %v94 = vld [vmem:[#allocation4 + $0x78] sm:$0xf]
    %v95 = vld [vmem:[#allocation4 + $0x7c] sm:$0xf]
    %v96 = vld [vmem:[%s2] sm:$0x1]
    %v98 = vlaneseq
    %v99 = vshrl.u32 %v98, 7
    %v100 = vsub.s32 0, %v99
    %v101 = vrot.slane %v96, %v100
    %v135 = vunpack.c.l.b16 %v64
    %v136 = vunpack.c.l.b16 %v65
    %v137 = vunpack.c.l.b16 %v66
    %v138 = vunpack.c.l.b16 %v67
    %v139 = vunpack.c.l.b16 %v68
    %v140 = vunpack.c.l.b16 %v69
    %v141 = vunpack.c.l.b16 %v70
    %v142 = vunpack.c.l.b16 %v71
    %v143 = vunpack.c.l.b16 %v72
    %v144 = vunpack.c.l.b16 %v73
    %v145 = vunpack.c.l.b16 %v74
    %v146 = vunpack.c.l.b16 %v75
    %v147 = vunpack.c.l.b16 %v76
    %v148 = vunpack.c.l.b16 %v77
    %v149 = vunpack.c.l.b16 %v78
    %v150 = vunpack.c.l.b16 %v79
    %v151 = vunpack.c.l.b16 %v80
    %v152 = vunpack.c.l.b16 %v81
    %v153 = vunpack.c.l.b16 %v82
    %v154 = vunpack.c.l.b16 %v83
    %v155 = vunpack.c.l.b16 %v84
    %v156 = vunpack.c.l.b16 %v85
    %v157 = vunpack.c.l.b16 %v86
    %v158 = vunpack.c.l.b16 %v87
    %v159 = vunpack.c.l.b16 %v88
    %v160 = vunpack.c.l.b16 %v89
    %v161 = vunpack.c.l.b16 %v90
    %v162 = vunpack.c.l.b16 %v91
    %v163 = vunpack.c.l.b16 %v92
    %v164 = vunpack.c.l.b16 %v93
    %v165 = vunpack.c.l.b16 %v94
    %v166 = vunpack.c.l.b16 %v95
    %v167 = vpack.c.b16 %v136, %v135
    %v168 = vpack.c.b16 %v138, %v137
    %v169 = vpack.c.b16 %v140, %v139
    %v170 = vpack.c.b16 %v142, %v141
    %v171 = vpack.c.b16 %v144, %v143
    %v172 = vpack.c.b16 %v146, %v145
    %v173 = vpack.c.b16 %v148, %v147
    %v174 = vpack.c.b16 %v150, %v149
    %v175 = vpack.c.b16 %v152, %v151
    %v176 = vpack.c.b16 %v154, %v153
    %v177 = vpack.c.b16 %v156, %v155
    %v178 = vpack.c.b16 %v158, %v157
    %v179 = vpack.c.b16 %v160, %v159
    %v180 = vpack.c.b16 %v162, %v161
    %v181 = vpack.c.b16 %v164, %v163
    %v182 = vpack.c.b16 %v166, %v165
    %199 = vmatprep.subr.bf16.mxu0 0
    %200 = vmatpush1.bf16.msra.mxu0 %v167
    %201 = vmatprep.subr.bf16.mxu0 0
    %202 = vmatpush1.bf16.msra.mxu0 %v168
    %203 = vmatprep.subr.bf16.mxu0 0
    %204 = vmatpush1.bf16.msra.mxu0 %v169
    %205 = vmatprep.subr.bf16.mxu0 0
    %206 = vmatpush1.bf16.msra.mxu0 %v170
    %207 = vmatprep.subr.bf16.mxu0 0
    %208 = vmatpush1.bf16.msra.mxu0 %v171
    %209 = vmatprep.subr.bf16.mxu0 0
    %210 = vmatpush1.bf16.msra.mxu0 %v172
    %211 = vmatprep.subr.bf16.mxu0 0
    %212 = vmatpush1.bf16.msra.mxu0 %v173
    %213 = vmatprep.subr.bf16.mxu0 0
    %214 = vmatpush1.bf16.msra.mxu0 %v174
    %215 = vmatprep.subr.bf16.mxu0 0
    %216 = vmatpush1.bf16.msra.mxu0 %v175
    %217 = vmatprep.subr.bf16.mxu0 0
    %218 = vmatpush1.bf16.msra.mxu0 %v176
    %219 = vmatprep.subr.bf16.mxu0 0
    %220 = vmatpush1.bf16.msra.mxu0 %v177
    %221 = vmatprep.subr.bf16.mxu0 0
    %222 = vmatpush1.bf16.msra.mxu0 %v178
    %223 = vmatprep.subr.bf16.mxu0 0
    %224 = vmatpush1.bf16.msra.mxu0 %v179
    %225 = vmatprep.subr.bf16.mxu0 0
    %226 = vmatpush1.bf16.msra.mxu0 %v180
    %227 = vmatprep.subr.bf16.mxu0 0
    %228 = vmatpush1.bf16.msra.mxu0 %v181
    %229 = vmatprep.subr.bf16.mxu0 0
    %230 = vmatpush1.bf16.msra.mxu0 %v182
    %231 = vmatprep.mubr.bf16.mxu0 %v63
    %232 = vmatmul.mubr.bf16.gmra.mrb[0].mxu0 %v62
    %v233 = vpop.f32.mrb[0].mxu0
    %v234 = vadd.f32 %v101, %v233
    %v235 = vpop.f32.mrb[0].mxu0
    %v236 = vpop.f32.mrb[0].mxu0
    %v237 = vpop.f32.mrb[0].mxu0
    %238 = vdwg.mxu0
    %v239 = vmax.f32 %v234, 0.0
    %v240 = vpack.c.bf16 %v239, %v239
    %v241 = vld [vmem:[#allocation6] sm:$0xff]
    %v242 = vld [vmem:[#allocation6 + $0x8] sm:$0xff]
    %v243 = vld [vmem:[#allocation6 + $0x10] sm:$0xff]
    %v244 = vld [vmem:[#allocation6 + $0x18] sm:$0xff]
    %v245 = vld [vmem:[#allocation6 + $0x20] sm:$0xff]
    %v246 = vld [vmem:[#allocation6 + $0x28] sm:$0xff]
    %v247 = vld [vmem:[#allocation6 + $0x30] sm:$0xff]
    %v248 = vld [vmem:[#allocation6 + $0x38] sm:$0xff]
    %v249 = vld [vmem:[#allocation6 + $0x40] sm:$0xff]
    %v250 = vld [vmem:[#allocation6 + $0x48] sm:$0xff]
    %v251 = vld [vmem:[#allocation6 + $0x50] sm:$0xff]
    %v252 = vld [vmem:[#allocation6 + $0x58] sm:$0xff]
    %v253 = vld [vmem:[#allocation6 + $0x60] sm:$0xff]
    %v254 = vld [vmem:[#allocation6 + $0x68] sm:$0xff]
    %v255 = vld [vmem:[#allocation6 + $0x70] sm:$0xff]
    %v256 = vld [vmem:[#allocation6 + $0x78] sm:$0xff]
    %v257 = vld [vmem:[%s4] sm:$0x3]
    %v259 = vlaneseq
    %v260 = vshrl.u32 %v259, 7
    %v261 = vsub.s32 0, %v260
    %v262 = vrot.slane %v257, %v261
    %v263 = vlaneseq
    %v264 = vshrl.u32 %v263, 7
    %v265 = vsub.s32 1, %v264
    %v266 = vrot.slane %v257, %v265
    %v285 = vunpack.c.l.b16 %v241
    %v286 = vunpack.c.h.b16 %v241
    %v287 = vunpack.c.l.b16 %v242
    %v288 = vunpack.c.h.b16 %v242
    %v289 = vunpack.c.l.b16 %v243
    %v290 = vunpack.c.h.b16 %v243
    %v291 = vunpack.c.l.b16 %v244
    %v292 = vunpack.c.h.b16 %v244
    %v293 = vunpack.c.l.b16 %v245
    %v294 = vunpack.c.h.b16 %v245
    %v295 = vunpack.c.l.b16 %v246
    %v296 = vunpack.c.h.b16 %v246
    %v297 = vunpack.c.l.b16 %v247
    %v298 = vunpack.c.h.b16 %v247
    %v299 = vunpack.c.l.b16 %v248
    %v300 = vunpack.c.h.b16 %v248
    %v301 = vunpack.c.l.b16 %v249
    %v302 = vunpack.c.h.b16 %v249
    %v303 = vunpack.c.l.b16 %v250
    %v304 = vunpack.c.h.b16 %v250
    %v305 = vunpack.c.l.b16 %v251
    %v306 = vunpack.c.h.b16 %v251
    %v307 = vunpack.c.l.b16 %v252
    %v308 = vunpack.c.h.b16 %v252
    %v309 = vunpack.c.l.b16 %v253
    %v310 = vunpack.c.h.b16 %v253
    %v311 = vunpack.c.l.b16 %v254
    %v312 = vunpack.c.h.b16 %v254
    %v313 = vunpack.c.l.b16 %v255
    %v314 = vunpack.c.h.b16 %v255
    %v315 = vunpack.c.l.b16 %v256
    %v316 = vunpack.c.h.b16 %v256
    %v317 = vpack.c.b16 %v287, %v285
    %v318 = vpack.c.b16 %v288, %v286
    %v319 = vpack.c.b16 %v291, %v289
    %v320 = vpack.c.b16 %v292, %v290
    %v321 = vpack.c.b16 %v295, %v293
    %v322 = vpack.c.b16 %v296, %v294
    %v323 = vpack.c.b16 %v299, %v297
    %v324 = vpack.c.b16 %v300, %v298
    %v325 = vpack.c.b16 %v303, %v301
    %v326 = vpack.c.b16 %v304, %v302
    %v327 = vpack.c.b16 %v307, %v305
    %v328 = vpack.c.b16 %v308, %v306
    %v329 = vpack.c.b16 %v311, %v309
    %v330 = vpack.c.b16 %v312, %v310
    %v331 = vpack.c.b16 %v315, %v313
    %v332 = vpack.c.b16 %v316, %v314
    %349 = vmatprep.subr.bf16.mxu0 %v318
    %350 = vmatpush1.bf16.msra.mxu0 %v317
    %351 = vmatprep.subr.bf16.mxu0 %v320
    %352 = vmatpush1.bf16.msra.mxu0 %v319
    %353 = vmatprep.subr.bf16.mxu0 %v322
    %354 = vmatpush1.bf16.msra.mxu0 %v321
    %355 = vmatprep.subr.bf16.mxu0 %v324
    %356 = vmatpush1.bf16.msra.mxu0 %v323
    %357 = vmatprep.subr.bf16.mxu0 %v326
    %358 = vmatpush1.bf16.msra.mxu0 %v325
    %359 = vmatprep.subr.bf16.mxu0 %v328
    %360 = vmatpush1.bf16.msra.mxu0 %v327
    %361 = vmatprep.subr.bf16.mxu0 %v330
    %362 = vmatpush1.bf16.msra.mxu0 %v329
    %363 = vmatprep.subr.bf16.mxu0 %v332
    %364 = vmatpush1.bf16.msra.mxu0 %v331
    %365 = vmatprep.subr.bf16.mxu0 0
    %366 = vmatpush1.bf16.msra.mxu0 0
    %367 = vmatprep.subr.bf16.mxu0 0
    %368 = vmatpush1.bf16.msra.mxu0 0
    %369 = vmatprep.subr.bf16.mxu0 0
    %370 = vmatpush1.bf16.msra.mxu0 0
    %371 = vmatprep.subr.bf16.mxu0 0
    %372 = vmatpush1.bf16.msra.mxu0 0
    %373 = vmatprep.subr.bf16.mxu0 0
    %374 = vmatpush1.bf16.msra.mxu0 0
    %375 = vmatprep.subr.bf16.mxu0 0
    %376 = vmatpush1.bf16.msra.mxu0 0
    %377 = vmatprep.subr.bf16.mxu0 0
    %378 = vmatpush1.bf16.msra.mxu0 0
    %379 = vmatprep.subr.bf16.mxu0 0
    %380 = vmatpush1.bf16.msra.mxu0 0
    %381 = vmatprep.mubr.bf16.mxu0 0
    %382 = vmatmul.mubr.bf16.gmra.mrb[0].mxu0 %v240
    %v383 = vpop.f32.mrb[0].mxu0
    %v384 = vadd.f32 %v262, %v383
    %v385 = vpop.f32.mrb[0].mxu0
    %v386 = vadd.f32 %v266, %v385
    %v387 = vpop.f32.mrb[0].mxu0
    %v388 = vpop.f32.mrb[0].mxu0
    %389 = vdwg.mxu0
    %v390 = vmax.f32 %v384, %v386
    %391 = vmax.xlane.f32.xlu0 %v390
    %v392 = vpop.xlane.xlu0 %391
    %v393 = vsub.f32 %v384, %v392
    %v394 = vsub.f32 %v386, %v392
    %v395 = vmul.f32 %v393, 1.442695
    %v396 = vpow.pop %v395
    %v397 = vmul.f32 %v394, 1.442695
    %v398 = vpow.pop %v397
    %v399 = vadd.f32 %v396, %v398
    %400 = vadd.xlane.f32.xlu0 %v399
    %v401 = vpop.xlane.xlu0 %400
    %v402 = vrcp.pop %v401
    %v403 = vmul.f32 %v396, %v402
    %v404 = vmul.f32 %v398, %v402
    %v405 = vmul.f32 %v60, %v403
    %v406 = vmul.f32 %v61, %v404
    %v407 = vadd.f32 %v60, %v405
    %v408 = vadd.f32 %v61, %v406
    %v409 = vrot.slane %v407, 4
    %v410 = vadd.f32 %v407, %v409
    %v411 = vrot.slane %v410, 2
    %v412 = vadd.f32 %v410, %v411
    %v413 = vrot.slane %v412, 1
    %v414 = vadd.f32 %v412, %v413
    %v415 = vrot.slane %v408, 4
    %v416 = vadd.f32 %v408, %v415
    %v417 = vrot.slane %v416, 2
    %v418 = vadd.f32 %v416, %v417
    %v419 = vrot.slane %v418, 1
    %v420 = vadd.f32 %v418, %v419
    %v421 = vrcp.pop 8.0
    %v422 = vmul.f32 %v414, %v421
    %v423 = vmul.f32 %v420, %v421
    %v424 = vsub.f32 %v407, %v422
    %v425 = vsub.f32 %v408, %v423
    %v426 = vmul.f32 %v424, %v424
    %v427 = vmul.f32 %v425, %v425
    %v428 = vrot.slane %v426, 4
    %v429 = vadd.f32 %v426, %v428
    %v430 = vrot.slane %v429, 2
    %v431 = vadd.f32 %v429, %v430
    %v432 = vrot.slane %v431, 1
    %v433 = vadd.f32 %v431, %v432
    %v434 = vrot.slane %v427, 4
    %v435 = vadd.f32 %v427, %v434
    %v436 = vrot.slane %v435, 2
    %v437 = vadd.f32 %v435, %v436
    %v438 = vrot.slane %v437, 1
    %v439 = vadd.f32 %v437, %v438
    %v440 = vrcp.pop 7.0
    %v441 = vmul.f32 %v433, %v440
    %v442 = vmul.f32 %v439, %v440
    %v443 = vrsqrt.pop %v441
    %v444 = vmul.f32 %v441, %v443
    %vm445 = vcmp.eq.f32.partialorder %v441, inf
    %v446 = vsel %vm445, %v441, %v444
    %vm447 = vcmp.eq.f32.partialorder %v441, 0.0
    %v448 = vand.u32 %v441, 2147483648
    %v449 = vsel %vm447, %v448, %v446
    %v450 = vrsqrt.pop %v442
    %v451 = vmul.f32 %v442, %v450
    %vm452 = vcmp.eq.f32.partialorder %v442, inf
    %v453 = vsel %vm452, %v442, %v451
    %vm454 = vcmp.eq.f32.partialorder %v442, 0.0
    %v455 = vand.u32 %v442, 2147483648
    %v456 = vsel %vm454, %v455, %v453
    %v457 = vmul.f32 %v449, 0.1
    %v458 = vmul.f32 %v456, 0.1
    %v459 = vadd.f32 %v457, 1.0
    %v460 = vadd.f32 %v458, 1.0
    %v461 = vmul.f32 %v407, %v459
    %v462 = vmul.f32 %v408, %v460
    %463 = vst [vmem:[%s5] sm:$0xff] %v461
    %464 = vst [vmem:[%s5 + $0x8] sm:$0xff] %v462
    // Predicated region
    $region34: #{enhanced_upvote_predictor.2} parent=1 // pred_check
      _
    $region35: #{enhanced_upvote_predictor.2} parent=1 // pred_check_branch
      %466 = sbr.rel (0) target = $region37
    $region36: #{enhanced_upvote_predictor.2} parent=1 // pred_region
      _
    $region37: #{enhanced_upvote_predictor.2} parent=1 // pred_fallthru
      _
    // Predicated region
    $region38: #{enhanced_upvote_predictor.2} parent=1 // pred_check
      _
    $region39: #{enhanced_upvote_predictor.2} parent=1 // pred_check_branch
      %468 = sbr.rel (0) target = $region41
    $region40: #{enhanced_upvote_predictor.2} parent=1 // pred_region
      _
    $region41: #{enhanced_upvote_predictor.2} parent=1 // pred_fallthru
      _
    %469 = vsyncpa [#allocation3], 1
    %470 = vsyncpa [#allocation5], 1

// kernel: enhanced_upvote_predictor.3
$region0: #{enhanced_upvote_predictor.3}
  #allocation0 [shape = 'u32[]', space=smem, size = 0x4, offset = 0x4, fixed_abs, tag = 'smem constant byte address 0x4 - core index']
  #allocation1 [shape = 'u32[144,128]{1,0:T(1,128)}', space=vmem, size = 0x12000, scoped, tag = 'internal scratch']
  #allocation2 [shape = 'f32[1,1]{1,0:T(1,128)S(1)}', space=vmem, size = 0x200, scoped, tag = 'scoped memory for enhanced_upvote_predictor.3']
  %s0 = inlined_call_operand.vmem [shape: f32[8,256], index: 0, kind: input, shape index: {}]
  %s1 = inlined_call_operand.hbm [shape: bf16[256,768], index: 1, kind: input, shape index: {}]
  %s2 = inlined_call_operand.vmem [shape: f32[1,768], index: 2, kind: input, shape index: {}]
  %s3 = inlined_call_operand.hbm [shape: bf16[768,512], index: 3, kind: input, shape index: {}]
  %s4 = inlined_call_operand.vmem [shape: f32[1,512], index: 4, kind: input, shape index: {}]
  %s5 = inlined_call_operand.hbm [shape: bf16[512,384], index: 5, kind: input, shape index: {}]
  %s6 = inlined_call_operand.vmem [shape: f32[1,384], index: 6, kind: input, shape index: {}]
  %s7 = inlined_call_operand.hbm [shape: bf16[384,256], index: 7, kind: input, shape index: {}]
  %s8 = inlined_call_operand.vmem [shape: f32[1,256], index: 8, kind: input, shape index: {}]
  %s9 = inlined_call_operand.vmem [shape: bf16[256,128], index: 9, kind: input, shape index: {}]
  %s10 = inlined_call_operand.vmem [shape: f32[1,128], index: 10, kind: input, shape index: {}]
  %s11 = inlined_call_operand.vmem [shape: f32[1,128], index: 11, kind: input, shape index: {}]
  %s12 = inlined_call_operand.<no memory space> [shape: f32[1,1], index: 12, kind: input, shape index: {}]
  %s13 = inlined_call_operand.vmem [shape: f32[8,1], index: 13, kind: output, shape index: {}]
  %s14 = sld [smem:[#allocation0]]
  $region78: #{enhanced_upvote_predictor.3} parent=0
    _
  %s16 = ssub.s32 1, %s14
  %s17 = scalar_select 0, %s16, %s14
  %v18 = vstv %s12
  %19 = vst [vmem:[#allocation2] sm:$0x1] %v18
  $region1: #{enhanced_upvote_predictor.3} parent=0
    #allocation3 [shape = 'u8[393216]{0}', space=vmem, size = 0x60000, scoped, tag = 'input window, operand 1, single buffered']
    #allocation4 [shape = 's32[1]{0}', space=sflag, size = 0x4, scoped, tag = 'scoped memory for enhanced_upvote_predictor.3']
    #allocation5 [shape = 'u8[786432]{0}', space=vmem, size = 0xc0000, scoped, tag = 'input window, operand 3, single buffered']
    #allocation6 [shape = 's32[1]{0}', space=sflag, size = 0x4, scoped, tag = 'scoped memory for enhanced_upvote_predictor.3']
    #allocation7 [shape = 'u8[393216]{0}', space=vmem, size = 0x60000, scoped, tag = 'input window, operand 5, single buffered']
    #allocation8 [shape = 'u8[196608]{0}', space=vmem, size = 0x30000, scoped, tag = 'input window, operand 7, single buffered']
    #allocation9 [shape = 's32[1]{0}', space=sflag, size = 0x4, scoped, tag = 'scoped memory for enhanced_upvote_predictor.3']
    %20 = vsyncpa [#allocation4], 0
    %21 = vsyncpa [#allocation6], 0
    %22 = vsyncpa [#allocation9], 0
    // Predicated region
    $region2: #{enhanced_upvote_predictor.3} parent=1 // pred_check
      _
    $region3: #{enhanced_upvote_predictor.3} parent=1 // pred_check_branch
      %24 = sbr.rel (0) target = $region5
    $region4: #{enhanced_upvote_predictor.3} parent=1 // pred_region
      _
    $region5: #{enhanced_upvote_predictor.3} parent=1 // pred_fallthru
      _
    // Predicated region
    $region6: #{enhanced_upvote_predictor.3} parent=1 // pred_check
      _
    $region7: #{enhanced_upvote_predictor.3} parent=1 // pred_check_branch
      %26 = sbr.rel (0) target = $region9
    $region8: #{enhanced_upvote_predictor.3} parent=1 // pred_region
      %s28 = ssub.s32 12288, 12288
      %29 = vsyncadd [#allocation4], %s28
      %s30 = sshll.u32 [#allocation3], 4
      %s31 = int_to_ptr.vmem [resolvable:$true] %s30
      %36 = dma.hbm_to_vmem [thread:$0]  %s1, 12288, %s31, [#allocation4], 384, 384, 24
    $region9: #{enhanced_upvote_predictor.3} parent=1 // pred_fallthru
      _
    // Predicated region
    $region10: #{enhanced_upvote_predictor.3} parent=1 // pred_check
      _
    $region11: #{enhanced_upvote_predictor.3} parent=1 // pred_check_branch
      %38 = sbr.rel (0) target = $region13
    $region12: #{enhanced_upvote_predictor.3} parent=1 // pred_region
      _
    $region13: #{enhanced_upvote_predictor.3} parent=1 // pred_fallthru
      _
    // Predicated region
    $region14: #{enhanced_upvote_predictor.3} parent=1 // pred_check
      _
    $region15: #{enhanced_upvote_predictor.3} parent=1 // pred_check_branch
      %40 = sbr.rel (0) target = $region17
    $region16: #{enhanced_upvote_predictor.3} parent=1 // pred_region
      %s42 = ssub.s32 24576, 24576
      %43 = vsyncadd [#allocation6], %s42
      %s44 = sshll.u32 [#allocation5], 4
      %s45 = int_to_ptr.vmem [resolvable:$true] %s44
      %50 = dma.hbm_to_vmem [thread:$0]  %s3, 24576, %s45, [#allocation6], 256, 256, 16
    $region17: #{enhanced_upvote_predictor.3} parent=1 // pred_fallthru
      _
    // Predicated region
    $region18: #{enhanced_upvote_predictor.3} parent=1 // pred_check
      _
    $region19: #{enhanced_upvote_predictor.3} parent=1 // pred_check_branch
      %52 = sbr.rel (0) target = $region21
    $region20: #{enhanced_upvote_predictor.3} parent=1 // pred_region
      _
    $region21: #{enhanced_upvote_predictor.3} parent=1 // pred_fallthru
      _
    // Predicated region
    $region22: #{enhanced_upvote_predictor.3} parent=1 // pred_check
      _
    $region23: #{enhanced_upvote_predictor.3} parent=1 // pred_check_branch
      %54 = sbr.rel (0) target = $region25
    $region24: #{enhanced_upvote_predictor.3} parent=1 // pred_region
      %s56 = ssub.s32 12288, 12288
      %57 = vsyncadd [#allocation6], %s56
      %s58 = sshll.u32 [#allocation7], 4
      %s59 = int_to_ptr.vmem [resolvable:$true] %s58
      %64 = dma.hbm_to_vmem [thread:$0]  %s5, 12288, %s59, [#allocation6], 192, 192, 12
    $region25: #{enhanced_upvote_predictor.3} parent=1 // pred_fallthru
      _
    // Predicated region
    $region26: #{enhanced_upvote_predictor.3} parent=1 // pred_check
      _
    $region27: #{enhanced_upvote_predictor.3} parent=1 // pred_check_branch
      %66 = sbr.rel (0) target = $region29
    $region28: #{enhanced_upvote_predictor.3} parent=1 // pred_region
      _
    $region29: #{enhanced_upvote_predictor.3} parent=1 // pred_fallthru
      _
    // Predicated region
    $region30: #{enhanced_upvote_predictor.3} parent=1 // pred_check
      _
    $region31: #{enhanced_upvote_predictor.3} parent=1 // pred_check_branch
      %68 = sbr.rel (0) target = $region33
    $region32: #{enhanced_upvote_predictor.3} parent=1 // pred_region
      %s70 = ssub.s32 6144, 6144
      %71 = vsyncadd [#allocation9], %s70
      %s72 = sshll.u32 [#allocation8], 4
      %s73 = int_to_ptr.vmem [resolvable:$true] %s72
      %78 = dma.hbm_to_vmem [thread:$0]  %s7, 6144, %s73, [#allocation9], 128, 128, 8
    $region33: #{enhanced_upvote_predictor.3} parent=1 // pred_fallthru
      _
    // Predicated region
    $region34: #{enhanced_upvote_predictor.3} parent=1 // pred_check
      _
    $region35: #{enhanced_upvote_predictor.3} parent=1 // pred_check_branch
      %80 = sbr.rel (0) target = $region37
    $region36: #{enhanced_upvote_predictor.3} parent=1 // pred_region
      _
    $region37: #{enhanced_upvote_predictor.3} parent=1 // pred_fallthru
      _
    // Predicated region
    $region38: #{enhanced_upvote_predictor.3} parent=1 // pred_check
      _
    $region39: #{enhanced_upvote_predictor.3} parent=1 // pred_check_branch
      %82 = sbr.rel (0) target = $region41
    $region40: #{enhanced_upvote_predictor.3} parent=1 // pred_region
      _
    $region41: #{enhanced_upvote_predictor.3} parent=1 // pred_fallthru
      _
    // Predicated region
    $region42: #{enhanced_upvote_predictor.3} parent=1 // pred_check
      _
    $region43: #{enhanced_upvote_predictor.3} parent=1 // pred_check_branch
      %84 = sbr.rel (0) target = $region45
    $region44: #{enhanced_upvote_predictor.3} parent=1 // pred_region
      _
    $region45: #{enhanced_upvote_predictor.3} parent=1 // pred_fallthru
      _
    // Predicated region
    $region46: #{enhanced_upvote_predictor.3} parent=1 // pred_check
      _
    $region47: #{enhanced_upvote_predictor.3} parent=1 // pred_check_branch
      %86 = sbr.rel (0) target = $region49
    $region48: #{enhanced_upvote_predictor.3} parent=1 // pred_region
      _
    $region49: #{enhanced_upvote_predictor.3} parent=1 // pred_fallthru
      _
    // Predicated region
    $region50: #{enhanced_upvote_predictor.3} parent=1 // pred_check
      _
    $region51: #{enhanced_upvote_predictor.3} parent=1 // pred_check_branch
      %88 = sbr.rel (0) target = $region53
    $region52: #{enhanced_upvote_predictor.3} parent=1 // pred_region
      _
    $region53: #{enhanced_upvote_predictor.3} parent=1 // pred_fallthru
      _
    // Predicated region
    $region54: #{enhanced_upvote_predictor.3} parent=1 // pred_check
      _
    $region55: #{enhanced_upvote_predictor.3} parent=1 // pred_check_branch
      %90 = sbr.rel (0) target = $region57
    $region56: #{enhanced_upvote_predictor.3} parent=1 // pred_region
      %91 = dma.done [#allocation4], 12288
    $region57: #{enhanced_upvote_predictor.3} parent=1 // pred_fallthru
      _
    // Predicated region
    $region58: #{enhanced_upvote_predictor.3} parent=1 // pred_check
      _
    $region59: #{enhanced_upvote_predictor.3} parent=1 // pred_check_branch
      %93 = sbr.rel (0) target = $region61
    $region60: #{enhanced_upvote_predictor.3} parent=1 // pred_region
      %94 = dma.done [#allocation6], 24576
    $region61: #{enhanced_upvote_predictor.3} parent=1 // pred_fallthru
      _
    // Predicated region
    $region62: #{enhanced_upvote_predictor.3} parent=1 // pred_check
      _
    $region63: #{enhanced_upvote_predictor.3} parent=1 // pred_check_branch
      %96 = sbr.rel (0) target = $region65
    $region64: #{enhanced_upvote_predictor.3} parent=1 // pred_region
      %97 = dma.done [#allocation6], 12288
    $region65: #{enhanced_upvote_predictor.3} parent=1 // pred_fallthru
      _
    // Predicated region
    $region66: #{enhanced_upvote_predictor.3} parent=1 // pred_check
      _
    $region67: #{enhanced_upvote_predictor.3} parent=1 // pred_check_branch
      %99 = sbr.rel (0) target = $region69
    $region68: #{enhanced_upvote_predictor.3} parent=1 // pred_region
      %100 = dma.done [#allocation9], 6144
    $region69: #{enhanced_upvote_predictor.3} parent=1 // pred_fallthru
      _
    %v102 = vld [vmem:[%s0] sm:$0xff]
    %v103 = vld [vmem:[%s0 + $0x8] sm:$0xff]
    %v104 = vpack.c.bf16 %v102, %v102
    %v105 = vpack.c.bf16 %v103, %v103
    %v106 = vld [vmem:[#allocation3] sm:$0xff]
    %v107 = vld [vmem:[#allocation3 + $0x8] sm:$0xff]
    %v108 = vld [vmem:[#allocation3 + $0x10] sm:$0xff]
    %v109 = vld [vmem:[#allocation3 + $0x18] sm:$0xff]
    %v110 = vld [vmem:[#allocation3 + $0x20] sm:$0xff]
    %v111 = vld [vmem:[#allocation3 + $0x28] sm:$0xff]
    %v112 = vld [vmem:[#allocation3 + $0x30] sm:$0xff]
    %v113 = vld [vmem:[#allocation3 + $0x38] sm:$0xff]
    %v114 = vld [vmem:[#allocation3 + $0x40] sm:$0xff]
    %v115 = vld [vmem:[#allocation3 + $0x48] sm:$0xff]
    %v116 = vld [vmem:[#allocation3 + $0x50] sm:$0xff]
    %v117 = vld [vmem:[#allocation3 + $0x58] sm:$0xff]
    %v118 = vld [vmem:[#allocation3 + $0x60] sm:$0xff]
    %v119 = vld [vmem:[#allocation3 + $0x68] sm:$0xff]
    %v120 = vld [vmem:[#allocation3 + $0x70] sm:$0xff]
    %v121 = vld [vmem:[#allocation3 + $0x78] sm:$0xff]
    %v122 = vld [vmem:[#allocation3 + $0x80] sm:$0xff]
    %v123 = vld [vmem:[#allocation3 + $0x88] sm:$0xff]
    %v124 = vld [vmem:[#allocation3 + $0x90] sm:$0xff]
    %v125 = vld [vmem:[#allocation3 + $0x98] sm:$0xff]
    %v126 = vld [vmem:[#allocation3 + $0xa0] sm:$0xff]
    %v127 = vld [vmem:[#allocation3 + $0xa8] sm:$0xff]
    %v128 = vld [vmem:[#allocation3 + $0xb0] sm:$0xff]
    %v129 = vld [vmem:[#allocation3 + $0xb8] sm:$0xff]
    %v130 = vld [vmem:[#allocation3 + $0xc0] sm:$0xff]
    %v131 = vld [vmem:[#allocation3 + $0xc8] sm:$0xff]
    %v132 = vld [vmem:[#allocation3 + $0xd0] sm:$0xff]
    %v133 = vld [vmem:[#allocation3 + $0xd8] sm:$0xff]
    %v134 = vld [vmem:[#allocation3 + $0xe0] sm:$0xff]
    %v135 = vld [vmem:[#allocation3 + $0xe8] sm:$0xff]
    %v136 = vld [vmem:[#allocation3 + $0xf0] sm:$0xff]
    %v137 = vld [vmem:[#allocation3 + $0xf8] sm:$0xff]
    %v138 = vld [vmem:[#allocation3 + $0x100] sm:$0xff]
    %v139 = vld [vmem:[#allocation3 + $0x108] sm:$0xff]
    %v140 = vld [vmem:[#allocation3 + $0x110] sm:$0xff]
    %v141 = vld [vmem:[#allocation3 + $0x118] sm:$0xff]
    %v142 = vld [vmem:[#allocation3 + $0x120] sm:$0xff]
    %v143 = vld [vmem:[#allocation3 + $0x128] sm:$0xff]
    %v144 = vld [vmem:[#allocation3 + $0x130] sm:$0xff]
    %v145 = vld [vmem:[#allocation3 + $0x138] sm:$0xff]
    %v146 = vld [vmem:[#allocation3 + $0x140] sm:$0xff]
    %v147 = vld [vmem:[#allocation3 + $0x148] sm:$0xff]
    %v148 = vld [vmem:[#allocation3 + $0x150] sm:$0xff]
    %v149 = vld [vmem:[#allocation3 + $0x158] sm:$0xff]
    %v150 = vld [vmem:[#allocation3 + $0x160] sm:$0xff]
    %v151 = vld [vmem:[#allocation3 + $0x168] sm:$0xff]
    %v152 = vld [vmem:[#allocation3 + $0x170] sm:$0xff]
    %v153 = vld [vmem:[#allocation3 + $0x178] sm:$0xff]
    %v154 = vld [vmem:[#allocation3 + $0x180] sm:$0xff]
    %v155 = vld [vmem:[#allocation3 + $0x188] sm:$0xff]
    %v156 = vld [vmem:[#allocation3 + $0x190] sm:$0xff]
    %v157 = vld [vmem:[#allocation3 + $0x198] sm:$0xff]
    %v158 = vld [vmem:[#allocation3 + $0x1a0] sm:$0xff]
    %v159 = vld [vmem:[#allocation3 + $0x1a8] sm:$0xff]
    %v160 = vld [vmem:[#allocation3 + $0x1b0] sm:$0xff]
    %v161 = vld [vmem:[#allocation3 + $0x1b8] sm:$0xff]
    %v162 = vld [vmem:[#allocation3 + $0x1c0] sm:$0xff]
    %v163 = vld [vmem:[#allocation3 + $0x1c8] sm:$0xff]
    %v164 = vld [vmem:[#allocation3 + $0x1d0] sm:$0xff]
    %v165 = vld [vmem:[#allocation3 + $0x1d8] sm:$0xff]
    %v166 = vld [vmem:[#allocation3 + $0x1e0] sm:$0xff]
    %v167 = vld [vmem:[#allocation3 + $0x1e8] sm:$0xff]
    %v168 = vld [vmem:[#allocation3 + $0x1f0] sm:$0xff]
    %v169 = vld [vmem:[#allocation3 + $0x1f8] sm:$0xff]
    %v170 = vld [vmem:[#allocation3 + $0x200] sm:$0xff]
    %v171 = vld [vmem:[#allocation3 + $0x208] sm:$0xff]
    %v172 = vld [vmem:[#allocation3 + $0x210] sm:$0xff]
    %v173 = vld [vmem:[#allocation3 + $0x218] sm:$0xff]
    %v174 = vld [vmem:[#allocation3 + $0x220] sm:$0xff]
    %v175 = vld [vmem:[#allocation3 + $0x228] sm:$0xff]
    %v176 = vld [vmem:[#allocation3 + $0x230] sm:$0xff]
    %v177 = vld [vmem:[#allocation3 + $0x238] sm:$0xff]
    %v178 = vld [vmem:[#allocation3 + $0x240] sm:$0xff]
    %v179 = vld [vmem:[#allocation3 + $0x248] sm:$0xff]
    %v180 = vld [vmem:[#allocation3 + $0x250] sm:$0xff]
    %v181 = vld [vmem:[#allocation3 + $0x258] sm:$0xff]
    %v182 = vld [vmem:[#allocation3 + $0x260] sm:$0xff]
    %v183 = vld [vmem:[#allocation3 + $0x268] sm:$0xff]
    %v184 = vld [vmem:[#allocation3 + $0x270] sm:$0xff]
    %v185 = vld [vmem:[#allocation3 + $0x278] sm:$0xff]
    %v186 = vld [vmem:[#allocation3 + $0x280] sm:$0xff]
    %v187 = vld [vmem:[#allocation3 + $0x288] sm:$0xff]
    %v188 = vld [vmem:[#allocation3 + $0x290] sm:$0xff]
    %v189 = vld [vmem:[#allocation3 + $0x298] sm:$0xff]
    %v190 = vld [vmem:[#allocation3 + $0x2a0] sm:$0xff]
    %v191 = vld [vmem:[#allocation3 + $0x2a8] sm:$0xff]
    %v192 = vld [vmem:[#allocation3 + $0x2b0] sm:$0xff]
    %v193 = vld [vmem:[#allocation3 + $0x2b8] sm:$0xff]
    %v194 = vld [vmem:[#allocation3 + $0x2c0] sm:$0xff]
    %v195 = vld [vmem:[#allocation3 + $0x2c8] sm:$0xff]
    %v196 = vld [vmem:[#allocation3 + $0x2d0] sm:$0xff]
    %v197 = vld [vmem:[#allocation3 + $0x2d8] sm:$0xff]
    %v198 = vld [vmem:[#allocation3 + $0x2e0] sm:$0xff]
    %v199 = vld [vmem:[#allocation3 + $0x2e8] sm:$0xff]
    %v200 = vld [vmem:[#allocation3 + $0x2f0] sm:$0xff]
    %v201 = vld [vmem:[#allocation3 + $0x2f8] sm:$0xff]
    %v202 = vld [vmem:[%s2] sm:$0x3f]
    %v204 = vlaneseq
    %v205 = vshrl.u32 %v204, 7
    %v206 = vsub.s32 0, %v205
    %v207 = vrot.slane %v202, %v206
    %v208 = vlaneseq
    %v209 = vshrl.u32 %v208, 7
    %v210 = vsub.s32 1, %v209
    %v211 = vrot.slane %v202, %v210
    %v212 = vlaneseq
    %v213 = vshrl.u32 %v212, 7
    %v214 = vsub.s32 2, %v213
    %v215 = vrot.slane %v202, %v214
    %v216 = vlaneseq
    %v217 = vshrl.u32 %v216, 7
    %v218 = vsub.s32 3, %v217
    %v219 = vrot.slane %v202, %v218
    %v220 = vlaneseq
    %v221 = vshrl.u32 %v220, 7
    %v222 = vsub.s32 4, %v221
    %v223 = vrot.slane %v202, %v222
    %v224 = vlaneseq
    %v225 = vshrl.u32 %v224, 7
    %v226 = vsub.s32 5, %v225
    %v227 = vrot.slane %v202, %v226
    %v330 = vunpack.c.l.b16 %v106
    %v331 = vunpack.c.h.b16 %v106
    %v332 = vunpack.c.l.b16 %v107
    %v333 = vunpack.c.h.b16 %v107
    %v334 = vunpack.c.l.b16 %v108
    %v335 = vunpack.c.h.b16 %v108
    %v336 = vunpack.c.l.b16 %v109
    %v337 = vunpack.c.h.b16 %v109
    %v338 = vunpack.c.l.b16 %v110
    %v339 = vunpack.c.h.b16 %v110
    %v340 = vunpack.c.l.b16 %v111
    %v341 = vunpack.c.h.b16 %v111
    %v342 = vunpack.c.l.b16 %v112
    %v343 = vunpack.c.h.b16 %v112
    %v344 = vunpack.c.l.b16 %v113
    %v345 = vunpack.c.h.b16 %v113
    %v346 = vunpack.c.l.b16 %v114
    %v347 = vunpack.c.h.b16 %v114
    %v348 = vunpack.c.l.b16 %v115
    %v349 = vunpack.c.h.b16 %v115
    %v350 = vunpack.c.l.b16 %v116
    %v351 = vunpack.c.h.b16 %v116
    %v352 = vunpack.c.l.b16 %v117
    %v353 = vunpack.c.h.b16 %v117
    %v354 = vunpack.c.l.b16 %v118
    %v355 = vunpack.c.h.b16 %v118
    %v356 = vunpack.c.l.b16 %v119
    %v357 = vunpack.c.h.b16 %v119
    %v358 = vunpack.c.l.b16 %v120
    %v359 = vunpack.c.h.b16 %v120
    %v360 = vunpack.c.l.b16 %v121
    %v361 = vunpack.c.h.b16 %v121
    %v362 = vunpack.c.l.b16 %v122
    %v363 = vunpack.c.h.b16 %v122
    %v364 = vunpack.c.l.b16 %v123
    %v365 = vunpack.c.h.b16 %v123
    %v366 = vunpack.c.l.b16 %v124
    %v367 = vunpack.c.h.b16 %v124
    %v368 = vunpack.c.l.b16 %v125
    %v369 = vunpack.c.h.b16 %v125
    %v370 = vunpack.c.l.b16 %v126
    %v371 = vunpack.c.h.b16 %v126
    %v372 = vunpack.c.l.b16 %v127
    %v373 = vunpack.c.h.b16 %v127
    %v374 = vunpack.c.l.b16 %v128
    %v375 = vunpack.c.h.b16 %v128
    %v376 = vunpack.c.l.b16 %v129
    %v377 = vunpack.c.h.b16 %v129
    %v378 = vunpack.c.l.b16 %v130
    %v379 = vunpack.c.h.b16 %v130
    %v380 = vunpack.c.l.b16 %v131
    %v381 = vunpack.c.h.b16 %v131
    %v382 = vunpack.c.l.b16 %v132
    %v383 = vunpack.c.h.b16 %v132
    %v384 = vunpack.c.l.b16 %v133
    %v385 = vunpack.c.h.b16 %v133
    %v386 = vunpack.c.l.b16 %v134
    %v387 = vunpack.c.h.b16 %v134
    %v388 = vunpack.c.l.b16 %v135
    %v389 = vunpack.c.h.b16 %v135
    %v390 = vunpack.c.l.b16 %v136
    %v391 = vunpack.c.h.b16 %v136
    %v392 = vunpack.c.l.b16 %v137
    %v393 = vunpack.c.h.b16 %v137
    %v394 = vunpack.c.l.b16 %v138
    %v395 = vunpack.c.h.b16 %v138
    %v396 = vunpack.c.l.b16 %v139
    %v397 = vunpack.c.h.b16 %v139
    %v398 = vunpack.c.l.b16 %v140
    %v399 = vunpack.c.h.b16 %v140
    %v400 = vunpack.c.l.b16 %v141
    %v401 = vunpack.c.h.b16 %v141
    %v402 = vunpack.c.l.b16 %v142
    %v403 = vunpack.c.h.b16 %v142
    %v404 = vunpack.c.l.b16 %v143
    %v405 = vunpack.c.h.b16 %v143
    %v406 = vunpack.c.l.b16 %v144
    %v407 = vunpack.c.h.b16 %v144
    %v408 = vunpack.c.l.b16 %v145
    %v409 = vunpack.c.h.b16 %v145
    %v410 = vunpack.c.l.b16 %v146
    %v411 = vunpack.c.h.b16 %v146
    %v412 = vunpack.c.l.b16 %v147
    %v413 = vunpack.c.h.b16 %v147
    %v414 = vunpack.c.l.b16 %v148
    %v415 = vunpack.c.h.b16 %v148
    %v416 = vunpack.c.l.b16 %v149
    %v417 = vunpack.c.h.b16 %v149
    %v418 = vunpack.c.l.b16 %v150
    %v419 = vunpack.c.h.b16 %v150
    %v420 = vunpack.c.l.b16 %v151
    %v421 = vunpack.c.h.b16 %v151
    %v422 = vunpack.c.l.b16 %v152
    %v423 = vunpack.c.h.b16 %v152
    %v424 = vunpack.c.l.b16 %v153
    %v425 = vunpack.c.h.b16 %v153
    %v426 = vunpack.c.l.b16 %v154
    %v427 = vunpack.c.h.b16 %v154
    %v428 = vunpack.c.l.b16 %v155
    %v429 = vunpack.c.h.b16 %v155
    %v430 = vunpack.c.l.b16 %v156
    %v431 = vunpack.c.h.b16 %v156
    %v432 = vunpack.c.l.b16 %v157
    %v433 = vunpack.c.h.b16 %v157
    %v434 = vunpack.c.l.b16 %v158
    %v435 = vunpack.c.h.b16 %v158
    %v436 = vunpack.c.l.b16 %v159
    %v437 = vunpack.c.h.b16 %v159
    %v438 = vunpack.c.l.b16 %v160
    %v439 = vunpack.c.h.b16 %v160
    %v440 = vunpack.c.l.b16 %v161
    %v441 = vunpack.c.h.b16 %v161
    %v442 = vunpack.c.l.b16 %v162
    %v443 = vunpack.c.h.b16 %v162
    %v444 = vunpack.c.l.b16 %v163
    %v445 = vunpack.c.h.b16 %v163
    %v446 = vunpack.c.l.b16 %v164
    %v447 = vunpack.c.h.b16 %v164
    %v448 = vunpack.c.l.b16 %v165
    %v449 = vunpack.c.h.b16 %v165
    %v450 = vunpack.c.l.b16 %v166
    %v451 = vunpack.c.h.b16 %v166
    %v452 = vunpack.c.l.b16 %v167
    %v453 = vunpack.c.h.b16 %v167
    %v454 = vunpack.c.l.b16 %v168
    %v455 = vunpack.c.h.b16 %v168
    %v456 = vunpack.c.l.b16 %v169
    %v457 = vunpack.c.h.b16 %v169
    %v458 = vunpack.c.l.b16 %v170
    %v459 = vunpack.c.h.b16 %v170
    %v460 = vunpack.c.l.b16 %v171
    %v461 = vunpack.c.h.b16 %v171
    %v462 = vunpack.c.l.b16 %v172
    %v463 = vunpack.c.h.b16 %v172
    %v464 = vunpack.c.l.b16 %v173
    %v465 = vunpack.c.h.b16 %v173
    %v466 = vunpack.c.l.b16 %v174
    %v467 = vunpack.c.h.b16 %v174
    %v468 = vunpack.c.l.b16 %v175
    %v469 = vunpack.c.h.b16 %v175
    %v470 = vunpack.c.l.b16 %v176
    %v471 = vunpack.c.h.b16 %v176
    %v472 = vunpack.c.l.b16 %v177
    %v473 = vunpack.c.h.b16 %v177
    %v474 = vunpack.c.l.b16 %v178
    %v475 = vunpack.c.h.b16 %v178
    %v476 = vunpack.c.l.b16 %v179
    %v477 = vunpack.c.h.b16 %v179
    %v478 = vunpack.c.l.b16 %v180
    %v479 = vunpack.c.h.b16 %v180
    %v480 = vunpack.c.l.b16 %v181
    %v481 = vunpack.c.h.b16 %v181
    %v482 = vunpack.c.l.b16 %v182
    %v483 = vunpack.c.h.b16 %v182
    %v484 = vunpack.c.l.b16 %v183
    %v485 = vunpack.c.h.b16 %v183
    %v486 = vunpack.c.l.b16 %v184
    %v487 = vunpack.c.h.b16 %v184
    %v488 = vunpack.c.l.b16 %v185
    %v489 = vunpack.c.h.b16 %v185
    %v490 = vunpack.c.l.b16 %v186
    %v491 = vunpack.c.h.b16 %v186
    %v492 = vunpack.c.l.b16 %v187
    %v493 = vunpack.c.h.b16 %v187
    %v494 = vunpack.c.l.b16 %v188
    %v495 = vunpack.c.h.b16 %v188
    %v496 = vunpack.c.l.b16 %v189
    %v497 = vunpack.c.h.b16 %v189
    %v498 = vunpack.c.l.b16 %v190
    %v499 = vunpack.c.h.b16 %v190
    %v500 = vunpack.c.l.b16 %v191
    %v501 = vunpack.c.h.b16 %v191
    %v502 = vunpack.c.l.b16 %v192
    %v503 = vunpack.c.h.b16 %v192
    %v504 = vunpack.c.l.b16 %v193
    %v505 = vunpack.c.h.b16 %v193
    %v506 = vunpack.c.l.b16 %v194
    %v507 = vunpack.c.h.b16 %v194
    %v508 = vunpack.c.l.b16 %v195
    %v509 = vunpack.c.h.b16 %v195
    %v510 = vunpack.c.l.b16 %v196
    %v511 = vunpack.c.h.b16 %v196
    %v512 = vunpack.c.l.b16 %v197
    %v513 = vunpack.c.h.b16 %v197
    %v514 = vunpack.c.l.b16 %v198
    %v515 = vunpack.c.h.b16 %v198
    %v516 = vunpack.c.l.b16 %v199
    %v517 = vunpack.c.h.b16 %v199
    %v518 = vunpack.c.l.b16 %v200
    %v519 = vunpack.c.h.b16 %v200
    %v520 = vunpack.c.l.b16 %v201
    %v521 = vunpack.c.h.b16 %v201
    %v522 = vpack.c.b16 %v336, %v330
    %v523 = vpack.c.b16 %v337, %v331
    %v524 = vpack.c.b16 %v338, %v332
    %v525 = vpack.c.b16 %v339, %v333
    %v526 = vpack.c.b16 %v340, %v334
    %v527 = vpack.c.b16 %v341, %v335
    %v528 = vpack.c.b16 %v348, %v342
    %v529 = vpack.c.b16 %v349, %v343
    %v530 = vpack.c.b16 %v350, %v344
    %v531 = vpack.c.b16 %v351, %v345
    %v532 = vpack.c.b16 %v352, %v346
    %v533 = vpack.c.b16 %v353, %v347
    %v534 = vpack.c.b16 %v360, %v354
    %v535 = vpack.c.b16 %v361, %v355
    %v536 = vpack.c.b16 %v362, %v356
    %v537 = vpack.c.b16 %v363, %v357
    %v538 = vpack.c.b16 %v364, %v358
    %v539 = vpack.c.b16 %v365, %v359
    %v540 = vpack.c.b16 %v372, %v366
    %v541 = vpack.c.b16 %v373, %v367
    %v542 = vpack.c.b16 %v374, %v368
    %v543 = vpack.c.b16 %v375, %v369
    %v544 = vpack.c.b16 %v376, %v370
    %v545 = vpack.c.b16 %v377, %v371
    %v546 = vpack.c.b16 %v384, %v378
    %v547 = vpack.c.b16 %v385, %v379
    %v548 = vpack.c.b16 %v386, %v380
    %v549 = vpack.c.b16 %v387, %v381
    %v550 = vpack.c.b16 %v388, %v382
    %v551 = vpack.c.b16 %v389, %v383
    %v552 = vpack.c.b16 %v396, %v390
    %v553 = vpack.c.b16 %v397, %v391
    %v554 = vpack.c.b16 %v398, %v392
    %v555 = vpack.c.b16 %v399, %v393
    %v556 = vpack.c.b16 %v400, %v394
    %v557 = vpack.c.b16 %v401, %v395
    %v558 = vpack.c.b16 %v408, %v402
    %v559 = vpack.c.b16 %v409, %v403
    %v560 = vpack.c.b16 %v410, %v404
    %v561 = vpack.c.b16 %v411, %v405
    %v562 = vpack.c.b16 %v412, %v406
    %v563 = vpack.c.b16 %v413, %v407
    %v564 = vpack.c.b16 %v420, %v414
    %v565 = vpack.c.b16 %v421, %v415
    %v566 = vpack.c.b16 %v422, %v416
    %v567 = vpack.c.b16 %v423, %v417
    %v568 = vpack.c.b16 %v424, %v418
    %v569 = vpack.c.b16 %v425, %v419
    %v570 = vpack.c.b16 %v432, %v426
    %v571 = vpack.c.b16 %v433, %v427
    %v572 = vpack.c.b16 %v434, %v428
    %v573 = vpack.c.b16 %v435, %v429
    %v574 = vpack.c.b16 %v436, %v430
    %v575 = vpack.c.b16 %v437, %v431
    %v576 = vpack.c.b16 %v444, %v438
    %v577 = vpack.c.b16 %v445, %v439
    %v578 = vpack.c.b16 %v446, %v440
    %v579 = vpack.c.b16 %v447, %v441
    %v580 = vpack.c.b16 %v448, %v442
    %v581 = vpack.c.b16 %v449, %v443
    %v582 = vpack.c.b16 %v456, %v450
    %v583 = vpack.c.b16 %v457, %v451
    %v584 = vpack.c.b16 %v458, %v452
    %v585 = vpack.c.b16 %v459, %v453
    %v586 = vpack.c.b16 %v460, %v454
    %v587 = vpack.c.b16 %v461, %v455
    %v588 = vpack.c.b16 %v468, %v462
    %v589 = vpack.c.b16 %v469, %v463
    %v590 = vpack.c.b16 %v470, %v464
    %v591 = vpack.c.b16 %v471, %v465
    %v592 = vpack.c.b16 %v472, %v466
    %v593 = vpack.c.b16 %v473, %v467
    %v594 = vpack.c.b16 %v480, %v474
    %v595 = vpack.c.b16 %v481, %v475
    %v596 = vpack.c.b16 %v482, %v476
    %v597 = vpack.c.b16 %v483, %v477
    %v598 = vpack.c.b16 %v484, %v478
    %v599 = vpack.c.b16 %v485, %v479
    %v600 = vpack.c.b16 %v492, %v486
    %v601 = vpack.c.b16 %v493, %v487
    %v602 = vpack.c.b16 %v494, %v488
    %v603 = vpack.c.b16 %v495, %v489
    %v604 = vpack.c.b16 %v496, %v490
    %v605 = vpack.c.b16 %v497, %v491
    %v606 = vpack.c.b16 %v504, %v498
    %v607 = vpack.c.b16 %v505, %v499
    %v608 = vpack.c.b16 %v506, %v500
    %v609 = vpack.c.b16 %v507, %v501
    %v610 = vpack.c.b16 %v508, %v502
    %v611 = vpack.c.b16 %v509, %v503
    %v612 = vpack.c.b16 %v516, %v510
    %v613 = vpack.c.b16 %v517, %v511
    %v614 = vpack.c.b16 %v518, %v512
    %v615 = vpack.c.b16 %v519, %v513
    %v616 = vpack.c.b16 %v520, %v514
    %v617 = vpack.c.b16 %v521, %v515
    %714 = vmatprep.subr.bf16.mxu0 %v523
    %715 = vmatpush1.bf16.msra.mxu0 %v522
    %716 = vmatprep.subr.bf16.mxu0 %v529
    %717 = vmatpush1.bf16.msra.mxu0 %v528
    %718 = vmatprep.subr.bf16.mxu0 %v535
    %719 = vmatpush1.bf16.msra.mxu0 %v534
    %720 = vmatprep.subr.bf16.mxu0 %v541
    %721 = vmatpush1.bf16.msra.mxu0 %v540
    %722 = vmatprep.subr.bf16.mxu0 %v547
    %723 = vmatpush1.bf16.msra.mxu0 %v546
    %724 = vmatprep.subr.bf16.mxu0 %v553
    %725 = vmatpush1.bf16.msra.mxu0 %v552
    %726 = vmatprep.subr.bf16.mxu0 %v559
    %727 = vmatpush1.bf16.msra.mxu0 %v558
    %728 = vmatprep.subr.bf16.mxu0 %v565
    %729 = vmatpush1.bf16.msra.mxu0 %v564
    %730 = vmatprep.subr.bf16.mxu0 %v571
    %731 = vmatpush1.bf16.msra.mxu0 %v570
    %732 = vmatprep.subr.bf16.mxu0 %v577
    %733 = vmatpush1.bf16.msra.mxu0 %v576
    %734 = vmatprep.subr.bf16.mxu0 %v583
    %735 = vmatpush1.bf16.msra.mxu0 %v582
    %736 = vmatprep.subr.bf16.mxu0 %v589
    %737 = vmatpush1.bf16.msra.mxu0 %v588
    %738 = vmatprep.subr.bf16.mxu0 %v595
    %739 = vmatpush1.bf16.msra.mxu0 %v594
    %740 = vmatprep.subr.bf16.mxu0 %v601
    %741 = vmatpush1.bf16.msra.mxu0 %v600
    %742 = vmatprep.subr.bf16.mxu0 %v607
    %743 = vmatpush1.bf16.msra.mxu0 %v606
    %744 = vmatprep.subr.bf16.mxu0 %v613
    %745 = vmatpush1.bf16.msra.mxu0 %v612
    %746 = vmatprep.mubr.bf16.mxu0 %v105
    %747 = vmatmul.mubr.bf16.gmra.mrb[0].mxu0 %v104
    %v748 = vpop.f32.mrb[0].mxu0
    %v749 = vadd.f32 %v207, %v748
    %v750 = vpop.f32.mrb[0].mxu0
    %v751 = vadd.f32 %v211, %v750
    %v752 = vpop.f32.mrb[0].mxu0
    %v753 = vpop.f32.mrb[0].mxu0
    %754 = vdwg.mxu0
    %755 = vmatprep.subr.bf16.mxu0 %v525
    %756 = vmatpush1.bf16.msra.mxu0 %v524
    %757 = vmatprep.subr.bf16.mxu0 %v531
    %758 = vmatpush1.bf16.msra.mxu0 %v530
    %759 = vmatprep.subr.bf16.mxu0 %v537
    %760 = vmatpush1.bf16.msra.mxu0 %v536
    %761 = vmatprep.subr.bf16.mxu0 %v543
    %762 = vmatpush1.bf16.msra.mxu0 %v542
    %763 = vmatprep.subr.bf16.mxu0 %v549
    %764 = vmatpush1.bf16.msra.mxu0 %v548
    %765 = vmatprep.subr.bf16.mxu0 %v555
    %766 = vmatpush1.bf16.msra.mxu0 %v554
    %767 = vmatprep.subr.bf16.mxu0 %v561
    %768 = vmatpush1.bf16.msra.mxu0 %v560
    %769 = vmatprep.subr.bf16.mxu0 %v567
    %770 = vmatpush1.bf16.msra.mxu0 %v566
    %771 = vmatprep.subr.bf16.mxu0 %v573
    %772 = vmatpush1.bf16.msra.mxu0 %v572
    %773 = vmatprep.subr.bf16.mxu0 %v579
    %774 = vmatpush1.bf16.msra.mxu0 %v578
    %775 = vmatprep.subr.bf16.mxu0 %v585
    %776 = vmatpush1.bf16.msra.mxu0 %v584
    %777 = vmatprep.subr.bf16.mxu0 %v591
    %778 = vmatpush1.bf16.msra.mxu0 %v590
    %779 = vmatprep.subr.bf16.mxu0 %v597
    %780 = vmatpush1.bf16.msra.mxu0 %v596
    %781 = vmatprep.subr.bf16.mxu0 %v603
    %782 = vmatpush1.bf16.msra.mxu0 %v602
    %783 = vmatprep.subr.bf16.mxu0 %v609
    %784 = vmatpush1.bf16.msra.mxu0 %v608
    %785 = vmatprep.subr.bf16.mxu0 %v615
    %786 = vmatpush1.bf16.msra.mxu0 %v614
    %787 = vmatprep.mubr.bf16.mxu0 %v105
    %788 = vmatmul.mubr.bf16.gmra.mrb[0].mxu0 %v104
    %v789 = vpop.f32.mrb[0].mxu0
    %v790 = vadd.f32 %v215, %v789
    %v791 = vpop.f32.mrb[0].mxu0
    %v792 = vadd.f32 %v219, %v791
    %v793 = vpop.f32.mrb[0].mxu0
    %v794 = vpop.f32.mrb[0].mxu0
    %795 = vdwg.mxu0
    %796 = vmatprep.subr.bf16.mxu0 %v527
    %797 = vmatpush1.bf16.msra.mxu0 %v526
    %798 = vmatprep.subr.bf16.mxu0 %v533
    %799 = vmatpush1.bf16.msra.mxu0 %v532
    %800 = vmatprep.subr.bf16.mxu0 %v539
    %801 = vmatpush1.bf16.msra.mxu0 %v538
    %802 = vmatprep.subr.bf16.mxu0 %v545
    %803 = vmatpush1.bf16.msra.mxu0 %v544
    %804 = vmatprep.subr.bf16.mxu0 %v551
    %805 = vmatpush1.bf16.msra.mxu0 %v550
    %806 = vmatprep.subr.bf16.mxu0 %v557
    %807 = vmatpush1.bf16.msra.mxu0 %v556
    %808 = vmatprep.subr.bf16.mxu0 %v563
    %809 = vmatpush1.bf16.msra.mxu0 %v562
    %810 = vmatprep.subr.bf16.mxu0 %v569
    %811 = vmatpush1.bf16.msra.mxu0 %v568
    %812 = vmatprep.subr.bf16.mxu0 %v575
    %813 = vmatpush1.bf16.msra.mxu0 %v574
    %814 = vmatprep.subr.bf16.mxu0 %v581
    %815 = vmatpush1.bf16.msra.mxu0 %v580
    %816 = vmatprep.subr.bf16.mxu0 %v587
    %817 = vmatpush1.bf16.msra.mxu0 %v586
    %818 = vmatprep.subr.bf16.mxu0 %v593
    %819 = vmatpush1.bf16.msra.mxu0 %v592
    %820 = vmatprep.subr.bf16.mxu0 %v599
    %821 = vmatpush1.bf16.msra.mxu0 %v598
    %822 = vmatprep.subr.bf16.mxu0 %v605
    %823 = vmatpush1.bf16.msra.mxu0 %v604
    %824 = vmatprep.subr.bf16.mxu0 %v611
    %825 = vmatpush1.bf16.msra.mxu0 %v610
    %826 = vmatprep.subr.bf16.mxu0 %v617
    %827 = vmatpush1.bf16.msra.mxu0 %v616
    %828 = vmatprep.mubr.bf16.mxu0 %v105
    %829 = vmatmul.mubr.bf16.gmra.mrb[0].mxu0 %v104
    %v830 = vpop.f32.mrb[0].mxu0
    %v831 = vadd.f32 %v223, %v830
    %v832 = vpop.f32.mrb[0].mxu0
    %v833 = vadd.f32 %v227, %v832
    %v834 = vpop.f32.mrb[0].mxu0
    %v835 = vpop.f32.mrb[0].mxu0
    %836 = vdwg.mxu0
    %vm837 = vcmp.gt.f32.partialorder %v749, 0.0
    %vm838 = vcmp.gt.f32.partialorder %v751, 0.0
    %vm839 = vcmp.gt.f32.partialorder %v790, 0.0
    %vm840 = vcmp.gt.f32.partialorder %v792, 0.0
    %vm841 = vcmp.gt.f32.partialorder %v831, 0.0
    %vm842 = vcmp.gt.f32.partialorder %v833, 0.0
    %v843 = vmul.f32 %v749, 0.2
    %v844 = vmul.f32 %v751, 0.2
    %v845 = vmul.f32 %v790, 0.2
    %v846 = vmul.f32 %v792, 0.2
    %v847 = vmul.f32 %v831, 0.2
    %v848 = vmul.f32 %v833, 0.2
    %v849 = vsel %vm837, %v749, %v843
    %v850 = vsel %vm838, %v751, %v844
    %v851 = vsel %vm839, %v790, %v845
    %v852 = vsel %vm840, %v792, %v846
    %v853 = vsel %vm841, %v831, %v847
    %v854 = vsel %vm842, %v833, %v848
    %v855 = vpack.c.bf16 %v849, %v849
    %v856 = vpack.c.bf16 %v850, %v850
    %v857 = vpack.c.bf16 %v851, %v851
    %v858 = vpack.c.bf16 %v852, %v852
    %v859 = vpack.c.bf16 %v853, %v853
    %v860 = vpack.c.bf16 %v854, %v854
    %v861 = vld [vmem:[#allocation5] sm:$0xff]
    %v862 = vld [vmem:[#allocation5 + $0x8] sm:$0xff]
    %v863 = vld [vmem:[#allocation5 + $0x10] sm:$0xff]
    %v864 = vld [vmem:[#allocation5 + $0x18] sm:$0xff]
    %v865 = vld [vmem:[#allocation5 + $0x20] sm:$0xff]
    %v866 = vld [vmem:[#allocation5 + $0x28] sm:$0xff]
    %v867 = vld [vmem:[#allocation5 + $0x30] sm:$0xff]
    %v868 = vld [vmem:[#allocation5 + $0x38] sm:$0xff]
    %v869 = vld [vmem:[#allocation5 + $0x40] sm:$0xff]
    %v870 = vld [vmem:[#allocation5 + $0x48] sm:$0xff]
    %v871 = vld [vmem:[#allocation5 + $0x50] sm:$0xff]
    %v872 = vld [vmem:[#allocation5 + $0x58] sm:$0xff]
    %v873 = vld [vmem:[#allocation5 + $0x60] sm:$0xff]
    %v874 = vld [vmem:[#allocation5 + $0x68] sm:$0xff]
    %v875 = vld [vmem:[#allocation5 + $0x70] sm:$0xff]
    %v876 = vld [vmem:[#allocation5 + $0x78] sm:$0xff]
    %v877 = vld [vmem:[#allocation5 + $0x80] sm:$0xff]
    %v878 = vld [vmem:[#allocation5 + $0x88] sm:$0xff]
    %v879 = vld [vmem:[#allocation5 + $0x90] sm:$0xff]
    %v880 = vld [vmem:[#allocation5 + $0x98] sm:$0xff]
    %v881 = vld [vmem:[#allocation5 + $0xa0] sm:$0xff]
    %v882 = vld [vmem:[#allocation5 + $0xa8] sm:$0xff]
    %v883 = vld [vmem:[#allocation5 + $0xb0] sm:$0xff]
    %v884 = vld [vmem:[#allocation5 + $0xb8] sm:$0xff]
    %v885 = vld [vmem:[#allocation5 + $0xc0] sm:$0xff]
    %v886 = vld [vmem:[#allocation5 + $0xc8] sm:$0xff]
    %v887 = vld [vmem:[#allocation5 + $0xd0] sm:$0xff]
    %v888 = vld [vmem:[#allocation5 + $0xd8] sm:$0xff]
    %v889 = vld [vmem:[#allocation5 + $0xe0] sm:$0xff]
    %v890 = vld [vmem:[#allocation5 + $0xe8] sm:$0xff]
    %v891 = vld [vmem:[#allocation5 + $0xf0] sm:$0xff]
    %v892 = vld [vmem:[#allocation5 + $0xf8] sm:$0xff]
    %v893 = vld [vmem:[#allocation5 + $0x100] sm:$0xff]
    %v894 = vld [vmem:[#allocation5 + $0x108] sm:$0xff]
    %v895 = vld [vmem:[#allocation5 + $0x110] sm:$0xff]
    %v896 = vld [vmem:[#allocation5 + $0x118] sm:$0xff]
    %v897 = vld [vmem:[#allocation5 + $0x120] sm:$0xff]
    %v898 = vld [vmem:[#allocation5 + $0x128] sm:$0xff]
    %v899 = vld [vmem:[#allocation5 + $0x130] sm:$0xff]
    %v900 = vld [vmem:[#allocation5 + $0x138] sm:$0xff]
    %v901 = vld [vmem:[#allocation5 + $0x140] sm:$0xff]
    %v902 = vld [vmem:[#allocation5 + $0x148] sm:$0xff]
    %v903 = vld [vmem:[#allocation5 + $0x150] sm:$0xff]
    %v904 = vld [vmem:[#allocation5 + $0x158] sm:$0xff]
    %v905 = vld [vmem:[#allocation5 + $0x160] sm:$0xff]
    %v906 = vld [vmem:[#allocation5 + $0x168] sm:$0xff]
    %v907 = vld [vmem:[#allocation5 + $0x170] sm:$0xff]
    %v908 = vld [vmem:[#allocation5 + $0x178] sm:$0xff]
    %v909 = vld [vmem:[#allocation5 + $0x180] sm:$0xff]
    %v910 = vld [vmem:[#allocation5 + $0x188] sm:$0xff]
    %v911 = vld [vmem:[#allocation5 + $0x190] sm:$0xff]
    %v912 = vld [vmem:[#allocation5 + $0x198] sm:$0xff]
    %v913 = vld [vmem:[#allocation5 + $0x1a0] sm:$0xff]
    %v914 = vld [vmem:[#allocation5 + $0x1a8] sm:$0xff]
    %v915 = vld [vmem:[#allocation5 + $0x1b0] sm:$0xff]
    %v916 = vld [vmem:[#allocation5 + $0x1b8] sm:$0xff]
    %v917 = vld [vmem:[#allocation5 + $0x1c0] sm:$0xff]
    %v918 = vld [vmem:[#allocation5 + $0x1c8] sm:$0xff]
    %v919 = vld [vmem:[#allocation5 + $0x1d0] sm:$0xff]
    %v920 = vld [vmem:[#allocation5 + $0x1d8] sm:$0xff]
    %v921 = vld [vmem:[#allocation5 + $0x1e0] sm:$0xff]
    %v922 = vld [vmem:[#allocation5 + $0x1e8] sm:$0xff]
    %v923 = vld [vmem:[#allocation5 + $0x1f0] sm:$0xff]
    %v924 = vld [vmem:[#allocation5 + $0x1f8] sm:$0xff]
    %v925 = vld [vmem:[#allocation5 + $0x200] sm:$0xff]
    %v926 = vld [vmem:[#allocation5 + $0x208] sm:$0xff]
    %v927 = vld [vmem:[#allocation5 + $0x210] sm:$0xff]
    %v928 = vld [vmem:[#allocation5 + $0x218] sm:$0xff]
    %v929 = vld [vmem:[#allocation5 + $0x220] sm:$0xff]
    %v930 = vld [vmem:[#allocation5 + $0x228] sm:$0xff]
    %v931 = vld [vmem:[#allocation5 + $0x230] sm:$0xff]
    %v932 = vld [vmem:[#allocation5 + $0x238] sm:$0xff]
    %v933 = vld [vmem:[#allocation5 + $0x240] sm:$0xff]
    %v934 = vld [vmem:[#allocation5 + $0x248] sm:$0xff]
    %v935 = vld [vmem:[#allocation5 + $0x250] sm:$0xff]
    %v936 = vld [vmem:[#allocation5 + $0x258] sm:$0xff]
    %v937 = vld [vmem:[#allocation5 + $0x260] sm:$0xff]
    %v938 = vld [vmem:[#allocation5 + $0x268] sm:$0xff]
    %v939 = vld [vmem:[#allocation5 + $0x270] sm:$0xff]
    %v940 = vld [vmem:[#allocation5 + $0x278] sm:$0xff]
    %v941 = vld [vmem:[#allocation5 + $0x280] sm:$0xff]
    %v942 = vld [vmem:[#allocation5 + $0x288] sm:$0xff]
    %v943 = vld [vmem:[#allocation5 + $0x290] sm:$0xff]
    %v944 = vld [vmem:[#allocation5 + $0x298] sm:$0xff]
    %v945 = vld [vmem:[#allocation5 + $0x2a0] sm:$0xff]
    %v946 = vld [vmem:[#allocation5 + $0x2a8] sm:$0xff]
    %v947 = vld [vmem:[#allocation5 + $0x2b0] sm:$0xff]
    %v948 = vld [vmem:[#allocation5 + $0x2b8] sm:$0xff]
    %v949 = vld [vmem:[#allocation5 + $0x2c0] sm:$0xff]
    %v950 = vld [vmem:[#allocation5 + $0x2c8] sm:$0xff]
    %v951 = vld [vmem:[#allocation5 + $0x2d0] sm:$0xff]
    %v952 = vld [vmem:[#allocation5 + $0x2d8] sm:$0xff]
    %v953 = vld [vmem:[#allocation5 + $0x2e0] sm:$0xff]
    %v954 = vld [vmem:[#allocation5 + $0x2e8] sm:$0xff]
    %v955 = vld [vmem:[#allocation5 + $0x2f0] sm:$0xff]
    %v956 = vld [vmem:[#allocation5 + $0x2f8] sm:$0xff]
    %v957 = vld [vmem:[#allocation5 + $0x300] sm:$0xff]
    %v958 = vld [vmem:[#allocation5 + $0x308] sm:$0xff]
    %v959 = vld [vmem:[#allocation5 + $0x310] sm:$0xff]
    %v960 = vld [vmem:[#allocation5 + $0x318] sm:$0xff]
    %v961 = vld [vmem:[#allocation5 + $0x320] sm:$0xff]
    %v962 = vld [vmem:[#allocation5 + $0x328] sm:$0xff]
    %v963 = vld [vmem:[#allocation5 + $0x330] sm:$0xff]
    %v964 = vld [vmem:[#allocation5 + $0x338] sm:$0xff]
    %v965 = vld [vmem:[#allocation5 + $0x340] sm:$0xff]
    %v966 = vld [vmem:[#allocation5 + $0x348] sm:$0xff]
    %v967 = vld [vmem:[#allocation5 + $0x350] sm:$0xff]
    %v968 = vld [vmem:[#allocation5 + $0x358] sm:$0xff]
    %v969 = vld [vmem:[#allocation5 + $0x360] sm:$0xff]
    %v970 = vld [vmem:[#allocation5 + $0x368] sm:$0xff]
    %v971 = vld [vmem:[#allocation5 + $0x370] sm:$0xff]
    %v972 = vld [vmem:[#allocation5 + $0x378] sm:$0xff]
    %v973 = vld [vmem:[#allocation5 + $0x380] sm:$0xff]
    %v974 = vld [vmem:[#allocation5 + $0x388] sm:$0xff]
    %v975 = vld [vmem:[#allocation5 + $0x390] sm:$0xff]
    %v976 = vld [vmem:[#allocation5 + $0x398] sm:$0xff]
    %v977 = vld [vmem:[#allocation5 + $0x3a0] sm:$0xff]
    %v978 = vld [vmem:[#allocation5 + $0x3a8] sm:$0xff]
    %v979 = vld [vmem:[#allocation5 + $0x3b0] sm:$0xff]
    %v980 = vld [vmem:[#allocation5 + $0x3b8] sm:$0xff]
    %v981 = vld [vmem:[#allocation5 + $0x3c0] sm:$0xff]
    %v982 = vld [vmem:[#allocation5 + $0x3c8] sm:$0xff]
    %v983 = vld [vmem:[#allocation5 + $0x3d0] sm:$0xff]
    %v984 = vld [vmem:[#allocation5 + $0x3d8] sm:$0xff]
    %v985 = vld [vmem:[#allocation5 + $0x3e0] sm:$0xff]
    %v986 = vld [vmem:[#allocation5 + $0x3e8] sm:$0xff]
    %v987 = vld [vmem:[#allocation5 + $0x3f0] sm:$0xff]
    %v988 = vld [vmem:[#allocation5 + $0x3f8] sm:$0xff]
    %v989 = vld [vmem:[#allocation5 + $0x400] sm:$0xff]
    %v990 = vld [vmem:[#allocation5 + $0x408] sm:$0xff]
    %v991 = vld [vmem:[#allocation5 + $0x410] sm:$0xff]
    %v992 = vld [vmem:[#allocation5 + $0x418] sm:$0xff]
    %v993 = vld [vmem:[#allocation5 + $0x420] sm:$0xff]
    %v994 = vld [vmem:[#allocation5 + $0x428] sm:$0xff]
    %v995 = vld [vmem:[#allocation5 + $0x430] sm:$0xff]
    %v996 = vld [vmem:[#allocation5 + $0x438] sm:$0xff]
    %v997 = vld [vmem:[#allocation5 + $0x440] sm:$0xff]
    %v998 = vld [vmem:[#allocation5 + $0x448] sm:$0xff]
    %v999 = vld [vmem:[#allocation5 + $0x450] sm:$0xff]
    %v1000 = vld [vmem:[#allocation5 + $0x458] sm:$0xff]
    %v1001 = vld [vmem:[#allocation5 + $0x460] sm:$0xff]
    %v1002 = vld [vmem:[#allocation5 + $0x468] sm:$0xff]
    %v1003 = vld [vmem:[#allocation5 + $0x470] sm:$0xff]
    %v1004 = vld [vmem:[#allocation5 + $0x478] sm:$0xff]
    %v1005 = vld [vmem:[#allocation5 + $0x480] sm:$0xff]
    %v1006 = vld [vmem:[#allocation5 + $0x488] sm:$0xff]
    %v1007 = vld [vmem:[#allocation5 + $0x490] sm:$0xff]
    %v1008 = vld [vmem:[#allocation5 + $0x498] sm:$0xff]
    %v1009 = vld [vmem:[#allocation5 + $0x4a0] sm:$0xff]
    %v1010 = vld [vmem:[#allocation5 + $0x4a8] sm:$0xff]
    %v1011 = vld [vmem:[#allocation5 + $0x4b0] sm:$0xff]
    %v1012 = vld [vmem:[#allocation5 + $0x4b8] sm:$0xff]
    %v1013 = vld [vmem:[#allocation5 + $0x4c0] sm:$0xff]
    %v1014 = vld [vmem:[#allocation5 + $0x4c8] sm:$0xff]
    %v1015 = vld [vmem:[#allocation5 + $0x4d0] sm:$0xff]
    %v1016 = vld [vmem:[#allocation5 + $0x4d8] sm:$0xff]
    %v1017 = vld [vmem:[#allocation5 + $0x4e0] sm:$0xff]
    %v1018 = vld [vmem:[#allocation5 + $0x4e8] sm:$0xff]
    %v1019 = vld [vmem:[#allocation5 + $0x4f0] sm:$0xff]
    %v1020 = vld [vmem:[#allocation5 + $0x4f8] sm:$0xff]
    %v1021 = vld [vmem:[#allocation5 + $0x500] sm:$0xff]
    %v1022 = vld [vmem:[#allocation5 + $0x508] sm:$0xff]
    %v1023 = vld [vmem:[#allocation5 + $0x510] sm:$0xff]
    %v1024 = vld [vmem:[#allocation5 + $0x518] sm:$0xff]
    %v1025 = vld [vmem:[#allocation5 + $0x520] sm:$0xff]
    %v1026 = vld [vmem:[#allocation5 + $0x528] sm:$0xff]
    %v1027 = vld [vmem:[#allocation5 + $0x530] sm:$0xff]
    %v1028 = vld [vmem:[#allocation5 + $0x538] sm:$0xff]
    %v1029 = vld [vmem:[#allocation5 + $0x540] sm:$0xff]
    %v1030 = vld [vmem:[#allocation5 + $0x548] sm:$0xff]
    %v1031 = vld [vmem:[#allocation5 + $0x550] sm:$0xff]
    %v1032 = vld [vmem:[#allocation5 + $0x558] sm:$0xff]
    %v1033 = vld [vmem:[#allocation5 + $0x560] sm:$0xff]
    %v1034 = vld [vmem:[#allocation5 + $0x568] sm:$0xff]
    %v1035 = vld [vmem:[#allocation5 + $0x570] sm:$0xff]
    %v1036 = vld [vmem:[#allocation5 + $0x578] sm:$0xff]
    %v1037 = vld [vmem:[#allocation5 + $0x580] sm:$0xff]
    %v1038 = vld [vmem:[#allocation5 + $0x588] sm:$0xff]
    %v1039 = vld [vmem:[#allocation5 + $0x590] sm:$0xff]
    %v1040 = vld [vmem:[#allocation5 + $0x598] sm:$0xff]
    %v1041 = vld [vmem:[#allocation5 + $0x5a0] sm:$0xff]
    %v1042 = vld [vmem:[#allocation5 + $0x5a8] sm:$0xff]
    %v1043 = vld [vmem:[#allocation5 + $0x5b0] sm:$0xff]
    %v1044 = vld [vmem:[#allocation5 + $0x5b8] sm:$0xff]
    %v1045 = vld [vmem:[#allocation5 + $0x5c0] sm:$0xff]
    %v1046 = vld [vmem:[#allocation5 + $0x5c8] sm:$0xff]
    %v1047 = vld [vmem:[#allocation5 + $0x5d0] sm:$0xff]
    %v1048 = vld [vmem:[#allocation5 + $0x5d8] sm:$0xff]
    %v1049 = vld [vmem:[#allocation5 + $0x5e0] sm:$0xff]
    %v1050 = vld [vmem:[#allocation5 + $0x5e8] sm:$0xff]
    %v1051 = vld [vmem:[#allocation5 + $0x5f0] sm:$0xff]
    %v1052 = vld [vmem:[#allocation5 + $0x5f8] sm:$0xff]
    %v1053 = vld [vmem:[%s4] sm:$0xf]
    %v1055 = vlaneseq
    %v1056 = vshrl.u32 %v1055, 7
    %v1057 = vsub.s32 0, %v1056
    %v1058 = vrot.slane %v1053, %v1057
    %v1059 = vlaneseq
    %v1060 = vshrl.u32 %v1059, 7
    %v1061 = vsub.s32 1, %v1060
    %v1062 = vrot.slane %v1053, %v1061
    %v1063 = vlaneseq
    %v1064 = vshrl.u32 %v1063, 7
    %v1065 = vsub.s32 2, %v1064
    %v1066 = vrot.slane %v1053, %v1065
    %v1067 = vlaneseq
    %v1068 = vshrl.u32 %v1067, 7
    %v1069 = vsub.s32 3, %v1068
    %v1070 = vrot.slane %v1053, %v1069
    %v1267 = vunpack.c.l.b16 %v861
    %v1268 = vunpack.c.h.b16 %v861
    %v1269 = vunpack.c.l.b16 %v862
    %v1270 = vunpack.c.h.b16 %v862
    %v1271 = vunpack.c.l.b16 %v863
    %v1272 = vunpack.c.h.b16 %v863
    %v1273 = vunpack.c.l.b16 %v864
    %v1274 = vunpack.c.h.b16 %v864
    %v1275 = vunpack.c.l.b16 %v865
    %v1276 = vunpack.c.h.b16 %v865
    %v1277 = vunpack.c.l.b16 %v866
    %v1278 = vunpack.c.h.b16 %v866
    %v1279 = vunpack.c.l.b16 %v867
    %v1280 = vunpack.c.h.b16 %v867
    %v1281 = vunpack.c.l.b16 %v868
    %v1282 = vunpack.c.h.b16 %v868
    %v1283 = vunpack.c.l.b16 %v869
    %v1284 = vunpack.c.h.b16 %v869
    %v1285 = vunpack.c.l.b16 %v870
    %v1286 = vunpack.c.h.b16 %v870
    %v1287 = vunpack.c.l.b16 %v871
    %v1288 = vunpack.c.h.b16 %v871
    %v1289 = vunpack.c.l.b16 %v872
    %v1290 = vunpack.c.h.b16 %v872
    %v1291 = vunpack.c.l.b16 %v873
    %v1292 = vunpack.c.h.b16 %v873
    %v1293 = vunpack.c.l.b16 %v874
    %v1294 = vunpack.c.h.b16 %v874
    %v1295 = vunpack.c.l.b16 %v875
    %v1296 = vunpack.c.h.b16 %v875
    %v1297 = vunpack.c.l.b16 %v876
    %v1298 = vunpack.c.h.b16 %v876
    %v1299 = vunpack.c.l.b16 %v877
    %v1300 = vunpack.c.h.b16 %v877
    %v1301 = vunpack.c.l.b16 %v878
    %v1302 = vunpack.c.h.b16 %v878
    %v1303 = vunpack.c.l.b16 %v879
    %v1304 = vunpack.c.h.b16 %v879
    %v1305 = vunpack.c.l.b16 %v880
    %v1306 = vunpack.c.h.b16 %v880
    %v1307 = vunpack.c.l.b16 %v881
    %v1308 = vunpack.c.h.b16 %v881
    %v1309 = vunpack.c.l.b16 %v882
    %v1310 = vunpack.c.h.b16 %v882
    %v1311 = vunpack.c.l.b16 %v883
    %v1312 = vunpack.c.h.b16 %v883
    %v1313 = vunpack.c.l.b16 %v884
    %v1314 = vunpack.c.h.b16 %v884
    %v1315 = vunpack.c.l.b16 %v885
    %v1316 = vunpack.c.h.b16 %v885
    %v1317 = vunpack.c.l.b16 %v886
    %v1318 = vunpack.c.h.b16 %v886
    %v1319 = vunpack.c.l.b16 %v887
    %v1320 = vunpack.c.h.b16 %v887
    %v1321 = vunpack.c.l.b16 %v888
    %v1322 = vunpack.c.h.b16 %v888
    %v1323 = vunpack.c.l.b16 %v889
    %v1324 = vunpack.c.h.b16 %v889
    %v1325 = vunpack.c.l.b16 %v890
    %v1326 = vunpack.c.h.b16 %v890
    %v1327 = vunpack.c.l.b16 %v891
    %v1328 = vunpack.c.h.b16 %v891
    %v1329 = vunpack.c.l.b16 %v892
    %v1330 = vunpack.c.h.b16 %v892
    %v1331 = vunpack.c.l.b16 %v893
    %v1332 = vunpack.c.h.b16 %v893
    %v1333 = vunpack.c.l.b16 %v894
    %v1334 = vunpack.c.h.b16 %v894
    %v1335 = vunpack.c.l.b16 %v895
    %v1336 = vunpack.c.h.b16 %v895
    %v1337 = vunpack.c.l.b16 %v896
    %v1338 = vunpack.c.h.b16 %v896
    %v1339 = vunpack.c.l.b16 %v897
    %v1340 = vunpack.c.h.b16 %v897
    %v1341 = vunpack.c.l.b16 %v898
    %v1342 = vunpack.c.h.b16 %v898
    %v1343 = vunpack.c.l.b16 %v899
    %v1344 = vunpack.c.h.b16 %v899
    %v1345 = vunpack.c.l.b16 %v900
    %v1346 = vunpack.c.h.b16 %v900
    %v1347 = vunpack.c.l.b16 %v901
    %v1348 = vunpack.c.h.b16 %v901
    %v1349 = vunpack.c.l.b16 %v902
    %v1350 = vunpack.c.h.b16 %v902
    %v1351 = vunpack.c.l.b16 %v903
    %v1352 = vunpack.c.h.b16 %v903
    %v1353 = vunpack.c.l.b16 %v904
    %v1354 = vunpack.c.h.b16 %v904
    %v1355 = vunpack.c.l.b16 %v905
    %v1356 = vunpack.c.h.b16 %v905
    %v1357 = vunpack.c.l.b16 %v906
    %v1358 = vunpack.c.h.b16 %v906
    %v1359 = vunpack.c.l.b16 %v907
    %v1360 = vunpack.c.h.b16 %v907
    %v1361 = vunpack.c.l.b16 %v908
    %v1362 = vunpack.c.h.b16 %v908
    %v1363 = vunpack.c.l.b16 %v909
    %v1364 = vunpack.c.h.b16 %v909
    %v1365 = vunpack.c.l.b16 %v910
    %v1366 = vunpack.c.h.b16 %v910
    %v1367 = vunpack.c.l.b16 %v911
    %v1368 = vunpack.c.h.b16 %v911
    %v1369 = vunpack.c.l.b16 %v912
    %v1370 = vunpack.c.h.b16 %v912
    %v1371 = vunpack.c.l.b16 %v913
    %v1372 = vunpack.c.h.b16 %v913
    %v1373 = vunpack.c.l.b16 %v914
    %v1374 = vunpack.c.h.b16 %v914
    %v1375 = vunpack.c.l.b16 %v915
    %v1376 = vunpack.c.h.b16 %v915
    %v1377 = vunpack.c.l.b16 %v916
    %v1378 = vunpack.c.h.b16 %v916
    %v1379 = vunpack.c.l.b16 %v917
    %v1380 = vunpack.c.h.b16 %v917
    %v1381 = vunpack.c.l.b16 %v918
    %v1382 = vunpack.c.h.b16 %v918
    %v1383 = vunpack.c.l.b16 %v919
    %v1384 = vunpack.c.h.b16 %v919
    %v1385 = vunpack.c.l.b16 %v920
    %v1386 = vunpack.c.h.b16 %v920
    %v1387 = vunpack.c.l.b16 %v921
    %v1388 = vunpack.c.h.b16 %v921
    %v1389 = vunpack.c.l.b16 %v922
    %v1390 = vunpack.c.h.b16 %v922
    %v1391 = vunpack.c.l.b16 %v923
    %v1392 = vunpack.c.h.b16 %v923
    %v1393 = vunpack.c.l.b16 %v924
    %v1394 = vunpack.c.h.b16 %v924
    %v1395 = vunpack.c.l.b16 %v925
    %v1396 = vunpack.c.h.b16 %v925
    %v1397 = vunpack.c.l.b16 %v926
    %v1398 = vunpack.c.h.b16 %v926
    %v1399 = vunpack.c.l.b16 %v927
    %v1400 = vunpack.c.h.b16 %v927
    %v1401 = vunpack.c.l.b16 %v928
    %v1402 = vunpack.c.h.b16 %v928
    %v1403 = vunpack.c.l.b16 %v929
    %v1404 = vunpack.c.h.b16 %v929
    %v1405 = vunpack.c.l.b16 %v930
    %v1406 = vunpack.c.h.b16 %v930
    %v1407 = vunpack.c.l.b16 %v931
    %v1408 = vunpack.c.h.b16 %v931
    %v1409 = vunpack.c.l.b16 %v932
    %v1410 = vunpack.c.h.b16 %v932
    %v1411 = vunpack.c.l.b16 %v933
    %v1412 = vunpack.c.h.b16 %v933
    %v1413 = vunpack.c.l.b16 %v934
    %v1414 = vunpack.c.h.b16 %v934
    %v1415 = vunpack.c.l.b16 %v935
    %v1416 = vunpack.c.h.b16 %v935
    %v1417 = vunpack.c.l.b16 %v936
    %v1418 = vunpack.c.h.b16 %v936
    %v1419 = vunpack.c.l.b16 %v937
    %v1420 = vunpack.c.h.b16 %v937
    %v1421 = vunpack.c.l.b16 %v938
    %v1422 = vunpack.c.h.b16 %v938
    %v1423 = vunpack.c.l.b16 %v939
    %v1424 = vunpack.c.h.b16 %v939
    %v1425 = vunpack.c.l.b16 %v940
    %v1426 = vunpack.c.h.b16 %v940
    %v1427 = vunpack.c.l.b16 %v941
    %v1428 = vunpack.c.h.b16 %v941
    %v1429 = vunpack.c.l.b16 %v942
    %v1430 = vunpack.c.h.b16 %v942
    %v1431 = vunpack.c.l.b16 %v943
    %v1432 = vunpack.c.h.b16 %v943
    %v1433 = vunpack.c.l.b16 %v944
    %v1434 = vunpack.c.h.b16 %v944
    %v1435 = vunpack.c.l.b16 %v945
    %v1436 = vunpack.c.h.b16 %v945
    %v1437 = vunpack.c.l.b16 %v946
    %v1438 = vunpack.c.h.b16 %v946
    %v1439 = vunpack.c.l.b16 %v947
    %v1440 = vunpack.c.h.b16 %v947
    %v1441 = vunpack.c.l.b16 %v948
    %v1442 = vunpack.c.h.b16 %v948
    %v1443 = vunpack.c.l.b16 %v949
    %v1444 = vunpack.c.h.b16 %v949
    %v1445 = vunpack.c.l.b16 %v950
    %v1446 = vunpack.c.h.b16 %v950
    %v1447 = vunpack.c.l.b16 %v951
    %v1448 = vunpack.c.h.b16 %v951
    %v1449 = vunpack.c.l.b16 %v952
    %v1450 = vunpack.c.h.b16 %v952
    %v1451 = vunpack.c.l.b16 %v953
    %v1452 = vunpack.c.h.b16 %v953
    %v1453 = vunpack.c.l.b16 %v954
    %v1454 = vunpack.c.h.b16 %v954
    %v1455 = vunpack.c.l.b16 %v955
    %v1456 = vunpack.c.h.b16 %v955
    %v1457 = vunpack.c.l.b16 %v956
    %v1458 = vunpack.c.h.b16 %v956
    %v1459 = vunpack.c.l.b16 %v957
    %v1460 = vunpack.c.h.b16 %v957
    %v1461 = vunpack.c.l.b16 %v958
    %v1462 = vunpack.c.h.b16 %v958
    %v1463 = vunpack.c.l.b16 %v959
    %v1464 = vunpack.c.h.b16 %v959
    %v1465 = vunpack.c.l.b16 %v960
    %v1466 = vunpack.c.h.b16 %v960
    %v1467 = vunpack.c.l.b16 %v961
    %v1468 = vunpack.c.h.b16 %v961
    %v1469 = vunpack.c.l.b16 %v962
    %v1470 = vunpack.c.h.b16 %v962
    %v1471 = vunpack.c.l.b16 %v963
    %v1472 = vunpack.c.h.b16 %v963
    %v1473 = vunpack.c.l.b16 %v964
    %v1474 = vunpack.c.h.b16 %v964
    %v1475 = vunpack.c.l.b16 %v965
    %v1476 = vunpack.c.h.b16 %v965
    %v1477 = vunpack.c.l.b16 %v966
    %v1478 = vunpack.c.h.b16 %v966
    %v1479 = vunpack.c.l.b16 %v967
    %v1480 = vunpack.c.h.b16 %v967
    %v1481 = vunpack.c.l.b16 %v968
    %v1482 = vunpack.c.h.b16 %v968
    %v1483 = vunpack.c.l.b16 %v969
    %v1484 = vunpack.c.h.b16 %v969
    %v1485 = vunpack.c.l.b16 %v970
    %v1486 = vunpack.c.h.b16 %v970
    %v1487 = vunpack.c.l.b16 %v971
    %v1488 = vunpack.c.h.b16 %v971
    %v1489 = vunpack.c.l.b16 %v972
    %v1490 = vunpack.c.h.b16 %v972
    %v1491 = vunpack.c.l.b16 %v973
    %v1492 = vunpack.c.h.b16 %v973
    %v1493 = vunpack.c.l.b16 %v974
    %v1494 = vunpack.c.h.b16 %v974
    %v1495 = vunpack.c.l.b16 %v975
    %v1496 = vunpack.c.h.b16 %v975
    %v1497 = vunpack.c.l.b16 %v976
    %v1498 = vunpack.c.h.b16 %v976
    %v1499 = vunpack.c.l.b16 %v977
    %v1500 = vunpack.c.h.b16 %v977
    %v1501 = vunpack.c.l.b16 %v978
    %v1502 = vunpack.c.h.b16 %v978
    %v1503 = vunpack.c.l.b16 %v979
    %v1504 = vunpack.c.h.b16 %v979
    %v1505 = vunpack.c.l.b16 %v980
    %v1506 = vunpack.c.h.b16 %v980
    %v1507 = vunpack.c.l.b16 %v981
    %v1508 = vunpack.c.h.b16 %v981
    %v1509 = vunpack.c.l.b16 %v982
    %v1510 = vunpack.c.h.b16 %v982
    %v1511 = vunpack.c.l.b16 %v983
    %v1512 = vunpack.c.h.b16 %v983
    %v1513 = vunpack.c.l.b16 %v984
    %v1514 = vunpack.c.h.b16 %v984
    %v1515 = vunpack.c.l.b16 %v985
    %v1516 = vunpack.c.h.b16 %v985
    %v1517 = vunpack.c.l.b16 %v986
    %v1518 = vunpack.c.h.b16 %v986
    %v1519 = vunpack.c.l.b16 %v987
    %v1520 = vunpack.c.h.b16 %v987
    %v1521 = vunpack.c.l.b16 %v988
    %v1522 = vunpack.c.h.b16 %v988
    %v1523 = vunpack.c.l.b16 %v989
    %v1524 = vunpack.c.h.b16 %v989
    %v1525 = vunpack.c.l.b16 %v990
    %v1526 = vunpack.c.h.b16 %v990
    %v1527 = vunpack.c.l.b16 %v991
    %v1528 = vunpack.c.h.b16 %v991
    %v1529 = vunpack.c.l.b16 %v992
    %v1530 = vunpack.c.h.b16 %v992
    %v1531 = vunpack.c.l.b16 %v993
    %v1532 = vunpack.c.h.b16 %v993
    %v1533 = vunpack.c.l.b16 %v994
    %v1534 = vunpack.c.h.b16 %v994
    %v1535 = vunpack.c.l.b16 %v995
    %v1536 = vunpack.c.h.b16 %v995
    %v1537 = vunpack.c.l.b16 %v996
    %v1538 = vunpack.c.h.b16 %v996
    %v1539 = vunpack.c.l.b16 %v997
    %v1540 = vunpack.c.h.b16 %v997
    %v1541 = vunpack.c.l.b16 %v998
    %v1542 = vunpack.c.h.b16 %v998
    %v1543 = vunpack.c.l.b16 %v999
    %v1544 = vunpack.c.h.b16 %v999
    %v1545 = vunpack.c.l.b16 %v1000
    %v1546 = vunpack.c.h.b16 %v1000
    %v1547 = vunpack.c.l.b16 %v1001
    %v1548 = vunpack.c.h.b16 %v1001
    %v1549 = vunpack.c.l.b16 %v1002
    %v1550 = vunpack.c.h.b16 %v1002
    %v1551 = vunpack.c.l.b16 %v1003
    %v1552 = vunpack.c.h.b16 %v1003
    %v1553 = vunpack.c.l.b16 %v1004
    %v1554 = vunpack.c.h.b16 %v1004
    %v1555 = vunpack.c.l.b16 %v1005
    %v1556 = vunpack.c.h.b16 %v1005
    %v1557 = vunpack.c.l.b16 %v1006
    %v1558 = vunpack.c.h.b16 %v1006
    %v1559 = vunpack.c.l.b16 %v1007
    %v1560 = vunpack.c.h.b16 %v1007
    %v1561 = vunpack.c.l.b16 %v1008
    %v1562 = vunpack.c.h.b16 %v1008
    %v1563 = vunpack.c.l.b16 %v1009
    %v1564 = vunpack.c.h.b16 %v1009
    %v1565 = vunpack.c.l.b16 %v1010
    %v1566 = vunpack.c.h.b16 %v1010
    %v1567 = vunpack.c.l.b16 %v1011
    %v1568 = vunpack.c.h.b16 %v1011
    %v1569 = vunpack.c.l.b16 %v1012
    %v1570 = vunpack.c.h.b16 %v1012
    %v1571 = vunpack.c.l.b16 %v1013
    %v1572 = vunpack.c.h.b16 %v1013
    %v1573 = vunpack.c.l.b16 %v1014
    %v1574 = vunpack.c.h.b16 %v1014
    %v1575 = vunpack.c.l.b16 %v1015
    %v1576 = vunpack.c.h.b16 %v1015
    %v1577 = vunpack.c.l.b16 %v1016
    %v1578 = vunpack.c.h.b16 %v1016
    %v1579 = vunpack.c.l.b16 %v1017
    %v1580 = vunpack.c.h.b16 %v1017
    %v1581 = vunpack.c.l.b16 %v1018
    %v1582 = vunpack.c.h.b16 %v1018
    %v1583 = vunpack.c.l.b16 %v1019
    %v1584 = vunpack.c.h.b16 %v1019
    %v1585 = vunpack.c.l.b16 %v1020
    %v1586 = vunpack.c.h.b16 %v1020
    %v1587 = vunpack.c.l.b16 %v1021
    %v1588 = vunpack.c.h.b16 %v1021
    %v1589 = vunpack.c.l.b16 %v1022
    %v1590 = vunpack.c.h.b16 %v1022
    %v1591 = vunpack.c.l.b16 %v1023
    %v1592 = vunpack.c.h.b16 %v1023
    %v1593 = vunpack.c.l.b16 %v1024
    %v1594 = vunpack.c.h.b16 %v1024
    %v1595 = vunpack.c.l.b16 %v1025
    %v1596 = vunpack.c.h.b16 %v1025
    %v1597 = vunpack.c.l.b16 %v1026
    %v1598 = vunpack.c.h.b16 %v1026
    %v1599 = vunpack.c.l.b16 %v1027
    %v1600 = vunpack.c.h.b16 %v1027
    %v1601 = vunpack.c.l.b16 %v1028
    %v1602 = vunpack.c.h.b16 %v1028
    %v1603 = vunpack.c.l.b16 %v1029
    %v1604 = vunpack.c.h.b16 %v1029
    %v1605 = vunpack.c.l.b16 %v1030
    %v1606 = vunpack.c.h.b16 %v1030
    %v1607 = vunpack.c.l.b16 %v1031
    %v1608 = vunpack.c.h.b16 %v1031
    %v1609 = vunpack.c.l.b16 %v1032
    %v1610 = vunpack.c.h.b16 %v1032
    %v1611 = vunpack.c.l.b16 %v1033
    %v1612 = vunpack.c.h.b16 %v1033
    %v1613 = vunpack.c.l.b16 %v1034
    %v1614 = vunpack.c.h.b16 %v1034
    %v1615 = vunpack.c.l.b16 %v1035
    %v1616 = vunpack.c.h.b16 %v1035
    %v1617 = vunpack.c.l.b16 %v1036
    %v1618 = vunpack.c.h.b16 %v1036
    %v1619 = vunpack.c.l.b16 %v1037
    %v1620 = vunpack.c.h.b16 %v1037
    %v1621 = vunpack.c.l.b16 %v1038
    %v1622 = vunpack.c.h.b16 %v1038
    %v1623 = vunpack.c.l.b16 %v1039
    %v1624 = vunpack.c.h.b16 %v1039
    %v1625 = vunpack.c.l.b16 %v1040
    %v1626 = vunpack.c.h.b16 %v1040
    %v1627 = vunpack.c.l.b16 %v1041
    %v1628 = vunpack.c.h.b16 %v1041
    %v1629 = vunpack.c.l.b16 %v1042
    %v1630 = vunpack.c.h.b16 %v1042
    %v1631 = vunpack.c.l.b16 %v1043
    %v1632 = vunpack.c.h.b16 %v1043
    %v1633 = vunpack.c.l.b16 %v1044
    %v1634 = vunpack.c.h.b16 %v1044
    %v1635 = vunpack.c.l.b16 %v1045
    %v1636 = vunpack.c.h.b16 %v1045
    %v1637 = vunpack.c.l.b16 %v1046
    %v1638 = vunpack.c.h.b16 %v1046
    %v1639 = vunpack.c.l.b16 %v1047
    %v1640 = vunpack.c.h.b16 %v1047
    %v1641 = vunpack.c.l.b16 %v1048
    %v1642 = vunpack.c.h.b16 %v1048
    %v1643 = vunpack.c.l.b16 %v1049
    %v1644 = vunpack.c.h.b16 %v1049
    %v1645 = vunpack.c.l.b16 %v1050
    %v1646 = vunpack.c.h.b16 %v1050
    %v1647 = vunpack.c.l.b16 %v1051
    %v1648 = vunpack.c.h.b16 %v1051
    %v1649 = vunpack.c.l.b16 %v1052
    %v1650 = vunpack.c.h.b16 %v1052
    %v1651 = vpack.c.b16 %v1271, %v1267
    %v1652 = vpack.c.b16 %v1272, %v1268
    %v1653 = vpack.c.b16 %v1273, %v1269
    %v1654 = vpack.c.b16 %v1274, %v1270
    %v1655 = vpack.c.b16 %v1279, %v1275
    %v1656 = vpack.c.b16 %v1280, %v1276
    %v1657 = vpack.c.b16 %v1281, %v1277
    %v1658 = vpack.c.b16 %v1282, %v1278
    %v1659 = vpack.c.b16 %v1287, %v1283
    %v1660 = vpack.c.b16 %v1288, %v1284
    %v1661 = vpack.c.b16 %v1289, %v1285
    %v1662 = vpack.c.b16 %v1290, %v1286
    %v1663 = vpack.c.b16 %v1295, %v1291
    %v1664 = vpack.c.b16 %v1296, %v1292
    %v1665 = vpack.c.b16 %v1297, %v1293
    %v1666 = vpack.c.b16 %v1298, %v1294
    %v1667 = vpack.c.b16 %v1303, %v1299
    %v1668 = vpack.c.b16 %v1304, %v1300
    %v1669 = vpack.c.b16 %v1305, %v1301
    %v1670 = vpack.c.b16 %v1306, %v1302
    %v1671 = vpack.c.b16 %v1311, %v1307
    %v1672 = vpack.c.b16 %v1312, %v1308
    %v1673 = vpack.c.b16 %v1313, %v1309
    %v1674 = vpack.c.b16 %v1314, %v1310
    %v1675 = vpack.c.b16 %v1319, %v1315
    %v1676 = vpack.c.b16 %v1320, %v1316
    %v1677 = vpack.c.b16 %v1321, %v1317
    %v1678 = vpack.c.b16 %v1322, %v1318
    %v1679 = vpack.c.b16 %v1327, %v1323
    %v1680 = vpack.c.b16 %v1328, %v1324
    %v1681 = vpack.c.b16 %v1329, %v1325
    %v1682 = vpack.c.b16 %v1330, %v1326
    %v1683 = vpack.c.b16 %v1335, %v1331
    %v1684 = vpack.c.b16 %v1336, %v1332
    %v1685 = vpack.c.b16 %v1337, %v1333
    %v1686 = vpack.c.b16 %v1338, %v1334
    %v1687 = vpack.c.b16 %v1343, %v1339
    %v1688 = vpack.c.b16 %v1344, %v1340
    %v1689 = vpack.c.b16 %v1345, %v1341
    %v1690 = vpack.c.b16 %v1346, %v1342
    %v1691 = vpack.c.b16 %v1351, %v1347
    %v1692 = vpack.c.b16 %v1352, %v1348
    %v1693 = vpack.c.b16 %v1353, %v1349
    %v1694 = vpack.c.b16 %v1354, %v1350
    %v1695 = vpack.c.b16 %v1359, %v1355
    %v1696 = vpack.c.b16 %v1360, %v1356
    %v1697 = vpack.c.b16 %v1361, %v1357
    %v1698 = vpack.c.b16 %v1362, %v1358
    %v1699 = vpack.c.b16 %v1367, %v1363
    %v1700 = vpack.c.b16 %v1368, %v1364
    %v1701 = vpack.c.b16 %v1369, %v1365
    %v1702 = vpack.c.b16 %v1370, %v1366
    %v1703 = vpack.c.b16 %v1375, %v1371
    %v1704 = vpack.c.b16 %v1376, %v1372
    %v1705 = vpack.c.b16 %v1377, %v1373
    %v1706 = vpack.c.b16 %v1378, %v1374
    %v1707 = vpack.c.b16 %v1383, %v1379
    %v1708 = vpack.c.b16 %v1384, %v1380
    %v1709 = vpack.c.b16 %v1385, %v1381
    %v1710 = vpack.c.b16 %v1386, %v1382
    %v1711 = vpack.c.b16 %v1391, %v1387
    %v1712 = vpack.c.b16 %v1392, %v1388
    %v1713 = vpack.c.b16 %v1393, %v1389
    %v1714 = vpack.c.b16 %v1394, %v1390
    %v1715 = vpack.c.b16 %v1399, %v1395
    %v1716 = vpack.c.b16 %v1400, %v1396
    %v1717 = vpack.c.b16 %v1401, %v1397
    %v1718 = vpack.c.b16 %v1402, %v1398
    %v1719 = vpack.c.b16 %v1407, %v1403
    %v1720 = vpack.c.b16 %v1408, %v1404
    %v1721 = vpack.c.b16 %v1409, %v1405
    %v1722 = vpack.c.b16 %v1410, %v1406
    %v1723 = vpack.c.b16 %v1415, %v1411
    %v1724 = vpack.c.b16 %v1416, %v1412
    %v1725 = vpack.c.b16 %v1417, %v1413
    %v1726 = vpack.c.b16 %v1418, %v1414
    %v1727 = vpack.c.b16 %v1423, %v1419
    %v1728 = vpack.c.b16 %v1424, %v1420
    %v1729 = vpack.c.b16 %v1425, %v1421
    %v1730 = vpack.c.b16 %v1426, %v1422
    %v1731 = vpack.c.b16 %v1431, %v1427
    %v1732 = vpack.c.b16 %v1432, %v1428
    %v1733 = vpack.c.b16 %v1433, %v1429
    %v1734 = vpack.c.b16 %v1434, %v1430
    %v1735 = vpack.c.b16 %v1439, %v1435
    %v1736 = vpack.c.b16 %v1440, %v1436
    %v1737 = vpack.c.b16 %v1441, %v1437
    %v1738 = vpack.c.b16 %v1442, %v1438
    %v1739 = vpack.c.b16 %v1447, %v1443
    %v1740 = vpack.c.b16 %v1448, %v1444
    %v1741 = vpack.c.b16 %v1449, %v1445
    %v1742 = vpack.c.b16 %v1450, %v1446
    %v1743 = vpack.c.b16 %v1455, %v1451
    %v1744 = vpack.c.b16 %v1456, %v1452
    %v1745 = vpack.c.b16 %v1457, %v1453
    %v1746 = vpack.c.b16 %v1458, %v1454
    %v1747 = vpack.c.b16 %v1463, %v1459
    %v1748 = vpack.c.b16 %v1464, %v1460
    %v1749 = vpack.c.b16 %v1465, %v1461
    %v1750 = vpack.c.b16 %v1466, %v1462
    %v1751 = vpack.c.b16 %v1471, %v1467
    %v1752 = vpack.c.b16 %v1472, %v1468
    %v1753 = vpack.c.b16 %v1473, %v1469
    %v1754 = vpack.c.b16 %v1474, %v1470
    %v1755 = vpack.c.b16 %v1479, %v1475
    %v1756 = vpack.c.b16 %v1480, %v1476
    %v1757 = vpack.c.b16 %v1481, %v1477
    %v1758 = vpack.c.b16 %v1482, %v1478
    %v1759 = vpack.c.b16 %v1487, %v1483
    %v1760 = vpack.c.b16 %v1488, %v1484
    %v1761 = vpack.c.b16 %v1489, %v1485
    %v1762 = vpack.c.b16 %v1490, %v1486
    %v1763 = vpack.c.b16 %v1495, %v1491
    %v1764 = vpack.c.b16 %v1496, %v1492
    %v1765 = vpack.c.b16 %v1497, %v1493
    %v1766 = vpack.c.b16 %v1498, %v1494
    %v1767 = vpack.c.b16 %v1503, %v1499
    %v1768 = vpack.c.b16 %v1504, %v1500
    %v1769 = vpack.c.b16 %v1505, %v1501
    %v1770 = vpack.c.b16 %v1506, %v1502
    %v1771 = vpack.c.b16 %v1511, %v1507
    %v1772 = vpack.c.b16 %v1512, %v1508
    %v1773 = vpack.c.b16 %v1513, %v1509
    %v1774 = vpack.c.b16 %v1514, %v1510
    %v1775 = vpack.c.b16 %v1519, %v1515
    %v1776 = vpack.c.b16 %v1520, %v1516
    %v1777 = vpack.c.b16 %v1521, %v1517
    %v1778 = vpack.c.b16 %v1522, %v1518
    %v1779 = vpack.c.b16 %v1527, %v1523
    %v1780 = vpack.c.b16 %v1528, %v1524
    %v1781 = vpack.c.b16 %v1529, %v1525
    %v1782 = vpack.c.b16 %v1530, %v1526
    %v1783 = vpack.c.b16 %v1535, %v1531
    %v1784 = vpack.c.b16 %v1536, %v1532
    %v1785 = vpack.c.b16 %v1537, %v1533
    %v1786 = vpack.c.b16 %v1538, %v1534
    %v1787 = vpack.c.b16 %v1543, %v1539
    %v1788 = vpack.c.b16 %v1544, %v1540
    %v1789 = vpack.c.b16 %v1545, %v1541
    %v1790 = vpack.c.b16 %v1546, %v1542
    %v1791 = vpack.c.b16 %v1551, %v1547
    %v1792 = vpack.c.b16 %v1552, %v1548
    %v1793 = vpack.c.b16 %v1553, %v1549
    %v1794 = vpack.c.b16 %v1554, %v1550
    %v1795 = vpack.c.b16 %v1559, %v1555
    %v1796 = vpack.c.b16 %v1560, %v1556
    %v1797 = vpack.c.b16 %v1561, %v1557
    %v1798 = vpack.c.b16 %v1562, %v1558
    %v1799 = vpack.c.b16 %v1567, %v1563
    %v1800 = vpack.c.b16 %v1568, %v1564
    %v1801 = vpack.c.b16 %v1569, %v1565
    %v1802 = vpack.c.b16 %v1570, %v1566
    %v1803 = vpack.c.b16 %v1575, %v1571
    %v1804 = vpack.c.b16 %v1576, %v1572
    %v1805 = vpack.c.b16 %v1577, %v1573
    %v1806 = vpack.c.b16 %v1578, %v1574
    %v1807 = vpack.c.b16 %v1583, %v1579
    %v1808 = vpack.c.b16 %v1584, %v1580
    %v1809 = vpack.c.b16 %v1585, %v1581
    %v1810 = vpack.c.b16 %v1586, %v1582
    %v1811 = vpack.c.b16 %v1591, %v1587
    %v1812 = vpack.c.b16 %v1592, %v1588
    %v1813 = vpack.c.b16 %v1593, %v1589
    %v1814 = vpack.c.b16 %v1594, %v1590
    %v1815 = vpack.c.b16 %v1599, %v1595
    %v1816 = vpack.c.b16 %v1600, %v1596
    %v1817 = vpack.c.b16 %v1601, %v1597
    %v1818 = vpack.c.b16 %v1602, %v1598
    %v1819 = vpack.c.b16 %v1607, %v1603
    %v1820 = vpack.c.b16 %v1608, %v1604
    %v1821 = vpack.c.b16 %v1609, %v1605
    %v1822 = vpack.c.b16 %v1610, %v1606
    %v1823 = vpack.c.b16 %v1615, %v1611
    %v1824 = vpack.c.b16 %v1616, %v1612
    %v1825 = vpack.c.b16 %v1617, %v1613
    %v1826 = vpack.c.b16 %v1618, %v1614
    %v1827 = vpack.c.b16 %v1623, %v1619
    %v1828 = vpack.c.b16 %v1624, %v1620
    %v1829 = vpack.c.b16 %v1625, %v1621
    %v1830 = vpack.c.b16 %v1626, %v1622
    %v1831 = vpack.c.b16 %v1631, %v1627
    %v1832 = vpack.c.b16 %v1632, %v1628
    %v1833 = vpack.c.b16 %v1633, %v1629
    %v1834 = vpack.c.b16 %v1634, %v1630
    %v1835 = vpack.c.b16 %v1639, %v1635
    %v1836 = vpack.c.b16 %v1640, %v1636
    %v1837 = vpack.c.b16 %v1641, %v1637
    %v1838 = vpack.c.b16 %v1642, %v1638
    %v1839 = vpack.c.b16 %v1647, %v1643
    %v1840 = vpack.c.b16 %v1648, %v1644
    %v1841 = vpack.c.b16 %v1649, %v1645
    %v1842 = vpack.c.b16 %v1650, %v1646
    %2035 = vmatprep.subr.bf16.mxu0 %v1652
    %2036 = vmatpush1.bf16.msra.mxu0 %v1651
    %2037 = vmatprep.subr.bf16.mxu0 %v1656
    %2038 = vmatpush1.bf16.msra.mxu0 %v1655
    %2039 = vmatprep.subr.bf16.mxu0 %v1660
    %2040 = vmatpush1.bf16.msra.mxu0 %v1659
    %2041 = vmatprep.subr.bf16.mxu0 %v1664
    %2042 = vmatpush1.bf16.msra.mxu0 %v1663
    %2043 = vmatprep.subr.bf16.mxu0 %v1668
    %2044 = vmatpush1.bf16.msra.mxu0 %v1667
    %2045 = vmatprep.subr.bf16.mxu0 %v1672
    %2046 = vmatpush1.bf16.msra.mxu0 %v1671
    %2047 = vmatprep.subr.bf16.mxu0 %v1676
    %2048 = vmatpush1.bf16.msra.mxu0 %v1675
    %2049 = vmatprep.subr.bf16.mxu0 %v1680
    %2050 = vmatpush1.bf16.msra.mxu0 %v1679
    %2051 = vmatprep.subr.bf16.mxu0 %v1684
    %2052 = vmatpush1.bf16.msra.mxu0 %v1683
    %2053 = vmatprep.subr.bf16.mxu0 %v1688
    %2054 = vmatpush1.bf16.msra.mxu0 %v1687
    %2055 = vmatprep.subr.bf16.mxu0 %v1692
    %2056 = vmatpush1.bf16.msra.mxu0 %v1691
    %2057 = vmatprep.subr.bf16.mxu0 %v1696
    %2058 = vmatpush1.bf16.msra.mxu0 %v1695
    %2059 = vmatprep.subr.bf16.mxu0 %v1700
    %2060 = vmatpush1.bf16.msra.mxu0 %v1699
    %2061 = vmatprep.subr.bf16.mxu0 %v1704
    %2062 = vmatpush1.bf16.msra.mxu0 %v1703
    %2063 = vmatprep.subr.bf16.mxu0 %v1708
    %2064 = vmatpush1.bf16.msra.mxu0 %v1707
    %2065 = vmatprep.subr.bf16.mxu0 %v1712
    %2066 = vmatpush1.bf16.msra.mxu0 %v1711
    %2067 = vmatprep.mubr.bf16.mxu0 %v856
    %2068 = vmatmul.mubr.bf16.gmra.mrb[0].mxu0 %v855
    %v2069 = vpop.f32.mrb[0].mxu0
    %v2070 = vadd.f32 %v1058, %v2069
    %v2071 = vpop.f32.mrb[0].mxu0
    %v2072 = vadd.f32 %v1062, %v2071
    %v2073 = vpop.f32.mrb[0].mxu0
    %v2074 = vpop.f32.mrb[0].mxu0
    %2075 = vdwg.mxu0
    %2076 = vmatprep.subr.bf16.mxu0 %v1716
    %2077 = vmatpush1.bf16.msra.mxu0 %v1715
    %2078 = vmatprep.subr.bf16.mxu0 %v1720
    %2079 = vmatpush1.bf16.msra.mxu0 %v1719
    %2080 = vmatprep.subr.bf16.mxu0 %v1724
    %2081 = vmatpush1.bf16.msra.mxu0 %v1723
    %2082 = vmatprep.subr.bf16.mxu0 %v1728
    %2083 = vmatpush1.bf16.msra.mxu0 %v1727
    %2084 = vmatprep.subr.bf16.mxu0 %v1732
    %2085 = vmatpush1.bf16.msra.mxu0 %v1731
    %2086 = vmatprep.subr.bf16.mxu0 %v1736
    %2087 = vmatpush1.bf16.msra.mxu0 %v1735
    %2088 = vmatprep.subr.bf16.mxu0 %v1740
    %2089 = vmatpush1.bf16.msra.mxu0 %v1739
    %2090 = vmatprep.subr.bf16.mxu0 %v1744
    %2091 = vmatpush1.bf16.msra.mxu0 %v1743
    %2092 = vmatprep.subr.bf16.mxu0 %v1748
    %2093 = vmatpush1.bf16.msra.mxu0 %v1747
    %2094 = vmatprep.subr.bf16.mxu0 %v1752
    %2095 = vmatpush1.bf16.msra.mxu0 %v1751
    %2096 = vmatprep.subr.bf16.mxu0 %v1756
    %2097 = vmatpush1.bf16.msra.mxu0 %v1755
    %2098 = vmatprep.subr.bf16.mxu0 %v1760
    %2099 = vmatpush1.bf16.msra.mxu0 %v1759
    %2100 = vmatprep.subr.bf16.mxu0 %v1764
    %2101 = vmatpush1.bf16.msra.mxu0 %v1763
    %2102 = vmatprep.subr.bf16.mxu0 %v1768
    %2103 = vmatpush1.bf16.msra.mxu0 %v1767
    %2104 = vmatprep.subr.bf16.mxu0 %v1772
    %2105 = vmatpush1.bf16.msra.mxu0 %v1771
    %2106 = vmatprep.subr.bf16.mxu0 %v1776
    %2107 = vmatpush1.bf16.msra.mxu0 %v1775
    %2108 = vmatprep.mubr.bf16.mxu0 %v858
    %2109 = vmatmul.mubr.bf16.gmra.mrb[0].mxu0 %v857
    %v2110 = vpop.f32.mrb[0].mxu0
    %v2111 = vadd.f32 %v2070, %v2110
    %v2112 = vpop.f32.mrb[0].mxu0
    %v2113 = vadd.f32 %v2072, %v2112
    %v2114 = vpop.f32.mrb[0].mxu0
    %v2115 = vpop.f32.mrb[0].mxu0
    %2116 = vdwg.mxu0
    %2117 = vmatprep.subr.bf16.mxu0 %v1780
    %2118 = vmatpush1.bf16.msra.mxu0 %v1779
    %2119 = vmatprep.subr.bf16.mxu0 %v1784
    %2120 = vmatpush1.bf16.msra.mxu0 %v1783
    %2121 = vmatprep.subr.bf16.mxu0 %v1788
    %2122 = vmatpush1.bf16.msra.mxu0 %v1787
    %2123 = vmatprep.subr.bf16.mxu0 %v1792
    %2124 = vmatpush1.bf16.msra.mxu0 %v1791
    %2125 = vmatprep.subr.bf16.mxu0 %v1796
    %2126 = vmatpush1.bf16.msra.mxu0 %v1795
    %2127 = vmatprep.subr.bf16.mxu0 %v1800
    %2128 = vmatpush1.bf16.msra.mxu0 %v1799
    %2129 = vmatprep.subr.bf16.mxu0 %v1804
    %2130 = vmatpush1.bf16.msra.mxu0 %v1803
    %2131 = vmatprep.subr.bf16.mxu0 %v1808
    %2132 = vmatpush1.bf16.msra.mxu0 %v1807
    %2133 = vmatprep.subr.bf16.mxu0 %v1812
    %2134 = vmatpush1.bf16.msra.mxu0 %v1811
    %2135 = vmatprep.subr.bf16.mxu0 %v1816
    %2136 = vmatpush1.bf16.msra.mxu0 %v1815
    %2137 = vmatprep.subr.bf16.mxu0 %v1820
    %2138 = vmatpush1.bf16.msra.mxu0 %v1819
    %2139 = vmatprep.subr.bf16.mxu0 %v1824
    %2140 = vmatpush1.bf16.msra.mxu0 %v1823
    %2141 = vmatprep.subr.bf16.mxu0 %v1828
    %2142 = vmatpush1.bf16.msra.mxu0 %v1827
    %2143 = vmatprep.subr.bf16.mxu0 %v1832
    %2144 = vmatpush1.bf16.msra.mxu0 %v1831
    %2145 = vmatprep.subr.bf16.mxu0 %v1836
    %2146 = vmatpush1.bf16.msra.mxu0 %v1835
    %2147 = vmatprep.subr.bf16.mxu0 %v1840
    %2148 = vmatpush1.bf16.msra.mxu0 %v1839
    %2149 = vmatprep.mubr.bf16.mxu0 %v860
    %2150 = vmatmul.mubr.bf16.gmra.mrb[0].mxu0 %v859
    %v2151 = vpop.f32.mrb[0].mxu0
    %v2152 = vadd.f32 %v2111, %v2151
    %v2153 = vpop.f32.mrb[0].mxu0
    %v2154 = vadd.f32 %v2113, %v2153
    %v2155 = vpop.f32.mrb[0].mxu0
    %v2156 = vpop.f32.mrb[0].mxu0
    %2157 = vdwg.mxu0
    %2158 = vmatprep.subr.bf16.mxu0 %v1654
    %2159 = vmatpush1.bf16.msra.mxu0 %v1653
    %2160 = vmatprep.subr.bf16.mxu0 %v1658
    %2161 = vmatpush1.bf16.msra.mxu0 %v1657
    %2162 = vmatprep.subr.bf16.mxu0 %v1662
    %2163 = vmatpush1.bf16.msra.mxu0 %v1661
    %2164 = vmatprep.subr.bf16.mxu0 %v1666
    %2165 = vmatpush1.bf16.msra.mxu0 %v1665
    %2166 = vmatprep.subr.bf16.mxu0 %v1670
    %2167 = vmatpush1.bf16.msra.mxu0 %v1669
    %2168 = vmatprep.subr.bf16.mxu0 %v1674
    %2169 = vmatpush1.bf16.msra.mxu0 %v1673
    %2170 = vmatprep.subr.bf16.mxu0 %v1678
    %2171 = vmatpush1.bf16.msra.mxu0 %v1677
    %2172 = vmatprep.subr.bf16.mxu0 %v1682
    %2173 = vmatpush1.bf16.msra.mxu0 %v1681
    %2174 = vmatprep.subr.bf16.mxu0 %v1686
    %2175 = vmatpush1.bf16.msra.mxu0 %v1685
    %2176 = vmatprep.subr.bf16.mxu0 %v1690
    %2177 = vmatpush1.bf16.msra.mxu0 %v1689
    %2178 = vmatprep.subr.bf16.mxu0 %v1694
    %2179 = vmatpush1.bf16.msra.mxu0 %v1693
    %2180 = vmatprep.subr.bf16.mxu0 %v1698
    %2181 = vmatpush1.bf16.msra.mxu0 %v1697
    %2182 = vmatprep.subr.bf16.mxu0 %v1702
    %2183 = vmatpush1.bf16.msra.mxu0 %v1701
    %2184 = vmatprep.subr.bf16.mxu0 %v1706
    %2185 = vmatpush1.bf16.msra.mxu0 %v1705
    %2186 = vmatprep.subr.bf16.mxu0 %v1710
    %2187 = vmatpush1.bf16.msra.mxu0 %v1709
    %2188 = vmatprep.subr.bf16.mxu0 %v1714
    %2189 = vmatpush1.bf16.msra.mxu0 %v1713
    %2190 = vmatprep.mubr.bf16.mxu0 %v856
    %2191 = vmatmul.mubr.bf16.gmra.mrb[0].mxu0 %v855
    %v2192 = vpop.f32.mrb[0].mxu0
    %v2193 = vadd.f32 %v1066, %v2192
    %v2194 = vpop.f32.mrb[0].mxu0
    %v2195 = vadd.f32 %v1070, %v2194
    %v2196 = vpop.f32.mrb[0].mxu0
    %v2197 = vpop.f32.mrb[0].mxu0
    %2198 = vdwg.mxu0
    %2199 = vmatprep.subr.bf16.mxu0 %v1718
    %2200 = vmatpush1.bf16.msra.mxu0 %v1717
    %2201 = vmatprep.subr.bf16.mxu0 %v1722
    %2202 = vmatpush1.bf16.msra.mxu0 %v1721
    %2203 = vmatprep.subr.bf16.mxu0 %v1726
    %2204 = vmatpush1.bf16.msra.mxu0 %v1725
    %2205 = vmatprep.subr.bf16.mxu0 %v1730
    %2206 = vmatpush1.bf16.msra.mxu0 %v1729
    %2207 = vmatprep.subr.bf16.mxu0 %v1734
    %2208 = vmatpush1.bf16.msra.mxu0 %v1733
    %2209 = vmatprep.subr.bf16.mxu0 %v1738
    %2210 = vmatpush1.bf16.msra.mxu0 %v1737
    %2211 = vmatprep.subr.bf16.mxu0 %v1742
    %2212 = vmatpush1.bf16.msra.mxu0 %v1741
    %2213 = vmatprep.subr.bf16.mxu0 %v1746
    %2214 = vmatpush1.bf16.msra.mxu0 %v1745
    %2215 = vmatprep.subr.bf16.mxu0 %v1750
    %2216 = vmatpush1.bf16.msra.mxu0 %v1749
    %2217 = vmatprep.subr.bf16.mxu0 %v1754
    %2218 = vmatpush1.bf16.msra.mxu0 %v1753
    %2219 = vmatprep.subr.bf16.mxu0 %v1758
    %2220 = vmatpush1.bf16.msra.mxu0 %v1757
    %2221 = vmatprep.subr.bf16.mxu0 %v1762
    %2222 = vmatpush1.bf16.msra.mxu0 %v1761
    %2223 = vmatprep.subr.bf16.mxu0 %v1766
    %2224 = vmatpush1.bf16.msra.mxu0 %v1765
    %2225 = vmatprep.subr.bf16.mxu0 %v1770
    %2226 = vmatpush1.bf16.msra.mxu0 %v1769
    %2227 = vmatprep.subr.bf16.mxu0 %v1774
    %2228 = vmatpush1.bf16.msra.mxu0 %v1773
    %2229 = vmatprep.subr.bf16.mxu0 %v1778
    %2230 = vmatpush1.bf16.msra.mxu0 %v1777
    %2231 = vmatprep.mubr.bf16.mxu0 %v858
    %2232 = vmatmul.mubr.bf16.gmra.mrb[0].mxu0 %v857
    %v2233 = vpop.f32.mrb[0].mxu0
    %v2234 = vadd.f32 %v2193, %v2233
    %v2235 = vpop.f32.mrb[0].mxu0
    %v2236 = vadd.f32 %v2195, %v2235
    %v2237 = vpop.f32.mrb[0].mxu0
    %v2238 = vpop.f32.mrb[0].mxu0
    %2239 = vdwg.mxu0
    %2240 = vmatprep.subr.bf16.mxu0 %v1782
    %2241 = vmatpush1.bf16.msra.mxu0 %v1781
    %2242 = vmatprep.subr.bf16.mxu0 %v1786
    %2243 = vmatpush1.bf16.msra.mxu0 %v1785
    %2244 = vmatprep.subr.bf16.mxu0 %v1790
    %2245 = vmatpush1.bf16.msra.mxu0 %v1789
    %2246 = vmatprep.subr.bf16.mxu0 %v1794
    %2247 = vmatpush1.bf16.msra.mxu0 %v1793
    %2248 = vmatprep.subr.bf16.mxu0 %v1798
    %2249 = vmatpush1.bf16.msra.mxu0 %v1797
    %2250 = vmatprep.subr.bf16.mxu0 %v1802
    %2251 = vmatpush1.bf16.msra.mxu0 %v1801
    %2252 = vmatprep.subr.bf16.mxu0 %v1806
    %2253 = vmatpush1.bf16.msra.mxu0 %v1805
    %2254 = vmatprep.subr.bf16.mxu0 %v1810
    %2255 = vmatpush1.bf16.msra.mxu0 %v1809
    %2256 = vmatprep.subr.bf16.mxu0 %v1814
    %2257 = vmatpush1.bf16.msra.mxu0 %v1813
    %2258 = vmatprep.subr.bf16.mxu0 %v1818
    %2259 = vmatpush1.bf16.msra.mxu0 %v1817
    %2260 = vmatprep.subr.bf16.mxu0 %v1822
    %2261 = vmatpush1.bf16.msra.mxu0 %v1821
    %2262 = vmatprep.subr.bf16.mxu0 %v1826
    %2263 = vmatpush1.bf16.msra.mxu0 %v1825
    %2264 = vmatprep.subr.bf16.mxu0 %v1830
    %2265 = vmatpush1.bf16.msra.mxu0 %v1829
    %2266 = vmatprep.subr.bf16.mxu0 %v1834
    %2267 = vmatpush1.bf16.msra.mxu0 %v1833
    %2268 = vmatprep.subr.bf16.mxu0 %v1838
    %2269 = vmatpush1.bf16.msra.mxu0 %v1837
    %2270 = vmatprep.subr.bf16.mxu0 %v1842
    %2271 = vmatpush1.bf16.msra.mxu0 %v1841
    %2272 = vmatprep.mubr.bf16.mxu0 %v860
    %2273 = vmatmul.mubr.bf16.gmra.mrb[0].mxu0 %v859
    %v2274 = vpop.f32.mrb[0].mxu0
    %v2275 = vadd.f32 %v2234, %v2274
    %v2276 = vpop.f32.mrb[0].mxu0
    %v2277 = vadd.f32 %v2236, %v2276
    %v2278 = vpop.f32.mrb[0].mxu0
    %v2279 = vpop.f32.mrb[0].mxu0
    %2280 = vdwg.mxu0
    %vm2281 = vcmp.gt.f32.partialorder %v2152, 0.0
    %vm2282 = vcmp.gt.f32.partialorder %v2154, 0.0
    %vm2283 = vcmp.gt.f32.partialorder %v2275, 0.0
    %vm2284 = vcmp.gt.f32.partialorder %v2277, 0.0
    %v2285 = vmul.f32 %v2152, 0.2
    %v2286 = vmul.f32 %v2154, 0.2
    %v2287 = vmul.f32 %v2275, 0.2
    %v2288 = vmul.f32 %v2277, 0.2
    %v2289 = vsel %vm2281, %v2152, %v2285
    %v2290 = vsel %vm2282, %v2154, %v2286
    %v2291 = vsel %vm2283, %v2275, %v2287
    %v2292 = vsel %vm2284, %v2277, %v2288
    %v2293 = vpack.c.bf16 %v2289, %v2289
    %v2294 = vpack.c.bf16 %v2290, %v2290
    %v2295 = vpack.c.bf16 %v2291, %v2291
    %v2296 = vpack.c.bf16 %v2292, %v2292
    %v2297 = vld [vmem:[#allocation7] sm:$0xff]
    %v2298 = vld [vmem:[#allocation7 + $0x8] sm:$0xf]
    %v2299 = vld [vmem:[#allocation7 + $0xc] sm:$0xff]
    %v2300 = vld [vmem:[#allocation7 + $0x14] sm:$0xf]
    %v2301 = vld [vmem:[#allocation7 + $0x18] sm:$0xff]
    %v2302 = vld [vmem:[#allocation7 + $0x20] sm:$0xf]
    %v2303 = vld [vmem:[#allocation7 + $0x24] sm:$0xff]
    %v2304 = vld [vmem:[#allocation7 + $0x2c] sm:$0xf]
    %v2305 = vld [vmem:[#allocation7 + $0x30] sm:$0xff]
    %v2306 = vld [vmem:[#allocation7 + $0x38] sm:$0xf]
    %v2307 = vld [vmem:[#allocation7 + $0x3c] sm:$0xff]
    %v2308 = vld [vmem:[#allocation7 + $0x44] sm:$0xf]
    %v2309 = vld [vmem:[#allocation7 + $0x48] sm:$0xff]
    %v2310 = vld [vmem:[#allocation7 + $0x50] sm:$0xf]
    %v2311 = vld [vmem:[#allocation7 + $0x54] sm:$0xff]
    %v2312 = vld [vmem:[#allocation7 + $0x5c] sm:$0xf]
    %v2313 = vld [vmem:[#allocation7 + $0x60] sm:$0xff]
    %v2314 = vld [vmem:[#allocation7 + $0x68] sm:$0xf]
    %v2315 = vld [vmem:[#allocation7 + $0x6c] sm:$0xff]
    %v2316 = vld [vmem:[#allocation7 + $0x74] sm:$0xf]
    %v2317 = vld [vmem:[#allocation7 + $0x78] sm:$0xff]
    %v2318 = vld [vmem:[#allocation7 + $0x80] sm:$0xf]
    %v2319 = vld [vmem:[#allocation7 + $0x84] sm:$0xff]
    %v2320 = vld [vmem:[#allocation7 + $0x8c] sm:$0xf]
    %v2321 = vld [vmem:[#allocation7 + $0x90] sm:$0xff]
    %v2322 = vld [vmem:[#allocation7 + $0x98] sm:$0xf]
    %v2323 = vld [vmem:[#allocation7 + $0x9c] sm:$0xff]
    %v2324 = vld [vmem:[#allocation7 + $0xa4] sm:$0xf]
    %v2325 = vld [vmem:[#allocation7 + $0xa8] sm:$0xff]
    %v2326 = vld [vmem:[#allocation7 + $0xb0] sm:$0xf]
    %v2327 = vld [vmem:[#allocation7 + $0xb4] sm:$0xff]
    %v2328 = vld [vmem:[#allocation7 + $0xbc] sm:$0xf]
    %v2329 = vld [vmem:[#allocation7 + $0xc0] sm:$0xff]
    %v2330 = vld [vmem:[#allocation7 + $0xc8] sm:$0xf]
    %v2331 = vld [vmem:[#allocation7 + $0xcc] sm:$0xff]
    %v2332 = vld [vmem:[#allocation7 + $0xd4] sm:$0xf]
    %v2333 = vld [vmem:[#allocation7 + $0xd8] sm:$0xff]
    %v2334 = vld [vmem:[#allocation7 + $0xe0] sm:$0xf]
    %v2335 = vld [vmem:[#allocation7 + $0xe4] sm:$0xff]
    %v2336 = vld [vmem:[#allocation7 + $0xec] sm:$0xf]
    %v2337 = vld [vmem:[#allocation7 + $0xf0] sm:$0xff]
    %v2338 = vld [vmem:[#allocation7 + $0xf8] sm:$0xf]
    %v2339 = vld [vmem:[#allocation7 + $0xfc] sm:$0xff]
    %v2340 = vld [vmem:[#allocation7 + $0x104] sm:$0xf]
    %v2341 = vld [vmem:[#allocation7 + $0x108] sm:$0xff]
    %v2342 = vld [vmem:[#allocation7 + $0x110] sm:$0xf]
    %v2343 = vld [vmem:[#allocation7 + $0x114] sm:$0xff]
    %v2344 = vld [vmem:[#allocation7 + $0x11c] sm:$0xf]
    %v2345 = vld [vmem:[#allocation7 + $0x120] sm:$0xff]
    %v2346 = vld [vmem:[#allocation7 + $0x128] sm:$0xf]
    %v2347 = vld [vmem:[#allocation7 + $0x12c] sm:$0xff]
    %v2348 = vld [vmem:[#allocation7 + $0x134] sm:$0xf]
    %v2349 = vld [vmem:[#allocation7 + $0x138] sm:$0xff]
    %v2350 = vld [vmem:[#allocation7 + $0x140] sm:$0xf]
    %v2351 = vld [vmem:[#allocation7 + $0x144] sm:$0xff]
    %v2352 = vld [vmem:[#allocation7 + $0x14c] sm:$0xf]
    %v2353 = vld [vmem:[#allocation7 + $0x150] sm:$0xff]
    %v2354 = vld [vmem:[#allocation7 + $0x158] sm:$0xf]
    %v2355 = vld [vmem:[#allocation7 + $0x15c] sm:$0xff]
    %v2356 = vld [vmem:[#allocation7 + $0x164] sm:$0xf]
    %v2357 = vld [vmem:[#allocation7 + $0x168] sm:$0xff]
    %v2358 = vld [vmem:[#allocation7 + $0x170] sm:$0xf]
    %v2359 = vld [vmem:[#allocation7 + $0x174] sm:$0xff]
    %v2360 = vld [vmem:[#allocation7 + $0x17c] sm:$0xf]
    %v2361 = vld [vmem:[#allocation7 + $0x180] sm:$0xff]
    %v2362 = vld [vmem:[#allocation7 + $0x188] sm:$0xf]
    %v2363 = vld [vmem:[#allocation7 + $0x18c] sm:$0xff]
    %v2364 = vld [vmem:[#allocation7 + $0x194] sm:$0xf]
    %v2365 = vld [vmem:[#allocation7 + $0x198] sm:$0xff]
    %v2366 = vld [vmem:[#allocation7 + $0x1a0] sm:$0xf]
    %v2367 = vld [vmem:[#allocation7 + $0x1a4] sm:$0xff]
    %v2368 = vld [vmem:[#allocation7 + $0x1ac] sm:$0xf]
    %v2369 = vld [vmem:[#allocation7 + $0x1b0] sm:$0xff]
    %v2370 = vld [vmem:[#allocation7 + $0x1b8] sm:$0xf]
    %v2371 = vld [vmem:[#allocation7 + $0x1bc] sm:$0xff]
    %v2372 = vld [vmem:[#allocation7 + $0x1c4] sm:$0xf]
    %v2373 = vld [vmem:[#allocation7 + $0x1c8] sm:$0xff]
    %v2374 = vld [vmem:[#allocation7 + $0x1d0] sm:$0xf]
    %v2375 = vld [vmem:[#allocation7 + $0x1d4] sm:$0xff]
    %v2376 = vld [vmem:[#allocation7 + $0x1dc] sm:$0xf]
    %v2377 = vld [vmem:[#allocation7 + $0x1e0] sm:$0xff]
    %v2378 = vld [vmem:[#allocation7 + $0x1e8] sm:$0xf]
    %v2379 = vld [vmem:[#allocation7 + $0x1ec] sm:$0xff]
    %v2380 = vld [vmem:[#allocation7 + $0x1f4] sm:$0xf]
    %v2381 = vld [vmem:[#allocation7 + $0x1f8] sm:$0xff]
    %v2382 = vld [vmem:[#allocation7 + $0x200] sm:$0xf]
    %v2383 = vld [vmem:[#allocation7 + $0x204] sm:$0xff]
    %v2384 = vld [vmem:[#allocation7 + $0x20c] sm:$0xf]
    %v2385 = vld [vmem:[#allocation7 + $0x210] sm:$0xff]
    %v2386 = vld [vmem:[#allocation7 + $0x218] sm:$0xf]
    %v2387 = vld [vmem:[#allocation7 + $0x21c] sm:$0xff]
    %v2388 = vld [vmem:[#allocation7 + $0x224] sm:$0xf]
    %v2389 = vld [vmem:[#allocation7 + $0x228] sm:$0xff]
    %v2390 = vld [vmem:[#allocation7 + $0x230] sm:$0xf]
    %v2391 = vld [vmem:[#allocation7 + $0x234] sm:$0xff]
    %v2392 = vld [vmem:[#allocation7 + $0x23c] sm:$0xf]
    %v2393 = vld [vmem:[#allocation7 + $0x240] sm:$0xff]
    %v2394 = vld [vmem:[#allocation7 + $0x248] sm:$0xf]
    %v2395 = vld [vmem:[#allocation7 + $0x24c] sm:$0xff]
    %v2396 = vld [vmem:[#allocation7 + $0x254] sm:$0xf]
    %v2397 = vld [vmem:[#allocation7 + $0x258] sm:$0xff]
    %v2398 = vld [vmem:[#allocation7 + $0x260] sm:$0xf]
    %v2399 = vld [vmem:[#allocation7 + $0x264] sm:$0xff]
    %v2400 = vld [vmem:[#allocation7 + $0x26c] sm:$0xf]
    %v2401 = vld [vmem:[#allocation7 + $0x270] sm:$0xff]
    %v2402 = vld [vmem:[#allocation7 + $0x278] sm:$0xf]
    %v2403 = vld [vmem:[#allocation7 + $0x27c] sm:$0xff]
    %v2404 = vld [vmem:[#allocation7 + $0x284] sm:$0xf]
    %v2405 = vld [vmem:[#allocation7 + $0x288] sm:$0xff]
    %v2406 = vld [vmem:[#allocation7 + $0x290] sm:$0xf]
    %v2407 = vld [vmem:[#allocation7 + $0x294] sm:$0xff]
    %v2408 = vld [vmem:[#allocation7 + $0x29c] sm:$0xf]
    %v2409 = vld [vmem:[#allocation7 + $0x2a0] sm:$0xff]
    %v2410 = vld [vmem:[#allocation7 + $0x2a8] sm:$0xf]
    %v2411 = vld [vmem:[#allocation7 + $0x2ac] sm:$0xff]
    %v2412 = vld [vmem:[#allocation7 + $0x2b4] sm:$0xf]
    %v2413 = vld [vmem:[#allocation7 + $0x2b8] sm:$0xff]
    %v2414 = vld [vmem:[#allocation7 + $0x2c0] sm:$0xf]
    %v2415 = vld [vmem:[#allocation7 + $0x2c4] sm:$0xff]
    %v2416 = vld [vmem:[#allocation7 + $0x2cc] sm:$0xf]
    %v2417 = vld [vmem:[#allocation7 + $0x2d0] sm:$0xff]
    %v2418 = vld [vmem:[#allocation7 + $0x2d8] sm:$0xf]
    %v2419 = vld [vmem:[#allocation7 + $0x2dc] sm:$0xff]
    %v2420 = vld [vmem:[#allocation7 + $0x2e4] sm:$0xf]
    %v2421 = vld [vmem:[#allocation7 + $0x2e8] sm:$0xff]
    %v2422 = vld [vmem:[#allocation7 + $0x2f0] sm:$0xf]
    %v2423 = vld [vmem:[#allocation7 + $0x2f4] sm:$0xff]
    %v2424 = vld [vmem:[#allocation7 + $0x2fc] sm:$0xf]
    %v2425 = vld [vmem:[%s6] sm:$0x7]
    %v2427 = vlaneseq
    %v2428 = vshrl.u32 %v2427, 7
    %v2429 = vsub.s32 0, %v2428
    %v2430 = vrot.slane %v2425, %v2429
    %v2431 = vlaneseq
    %v2432 = vshrl.u32 %v2431, 7
    %v2433 = vsub.s32 1, %v2432
    %v2434 = vrot.slane %v2425, %v2433
    %v2435 = vlaneseq
    %v2436 = vshrl.u32 %v2435, 7
    %v2437 = vsub.s32 2, %v2436
    %v2438 = vrot.slane %v2425, %v2437
    %v2570 = vunpack.c.l.b16 %v2297
    %v2571 = vunpack.c.h.b16 %v2297
    %v2572 = vunpack.c.l.b16 %v2298
    %v2573 = vunpack.c.l.b16 %v2299
    %v2574 = vunpack.c.h.b16 %v2299
    %v2575 = vunpack.c.l.b16 %v2300
    %v2576 = vunpack.c.l.b16 %v2301
    %v2577 = vunpack.c.h.b16 %v2301
    %v2578 = vunpack.c.l.b16 %v2302
    %v2579 = vunpack.c.l.b16 %v2303
    %v2580 = vunpack.c.h.b16 %v2303
    %v2581 = vunpack.c.l.b16 %v2304
    %v2582 = vunpack.c.l.b16 %v2305
    %v2583 = vunpack.c.h.b16 %v2305
    %v2584 = vunpack.c.l.b16 %v2306
    %v2585 = vunpack.c.l.b16 %v2307
    %v2586 = vunpack.c.h.b16 %v2307
    %v2587 = vunpack.c.l.b16 %v2308
    %v2588 = vunpack.c.l.b16 %v2309
    %v2589 = vunpack.c.h.b16 %v2309
    %v2590 = vunpack.c.l.b16 %v2310
    %v2591 = vunpack.c.l.b16 %v2311
    %v2592 = vunpack.c.h.b16 %v2311
    %v2593 = vunpack.c.l.b16 %v2312
    %v2594 = vunpack.c.l.b16 %v2313
    %v2595 = vunpack.c.h.b16 %v2313
    %v2596 = vunpack.c.l.b16 %v2314
    %v2597 = vunpack.c.l.b16 %v2315
    %v2598 = vunpack.c.h.b16 %v2315
    %v2599 = vunpack.c.l.b16 %v2316
    %v2600 = vunpack.c.l.b16 %v2317
    %v2601 = vunpack.c.h.b16 %v2317
    %v2602 = vunpack.c.l.b16 %v2318
    %v2603 = vunpack.c.l.b16 %v2319
    %v2604 = vunpack.c.h.b16 %v2319
    %v2605 = vunpack.c.l.b16 %v2320
    %v2606 = vunpack.c.l.b16 %v2321
    %v2607 = vunpack.c.h.b16 %v2321
    %v2608 = vunpack.c.l.b16 %v2322
    %v2609 = vunpack.c.l.b16 %v2323
    %v2610 = vunpack.c.h.b16 %v2323
    %v2611 = vunpack.c.l.b16 %v2324
    %v2612 = vunpack.c.l.b16 %v2325
    %v2613 = vunpack.c.h.b16 %v2325
    %v2614 = vunpack.c.l.b16 %v2326
    %v2615 = vunpack.c.l.b16 %v2327
    %v2616 = vunpack.c.h.b16 %v2327
    %v2617 = vunpack.c.l.b16 %v2328
    %v2618 = vunpack.c.l.b16 %v2329
    %v2619 = vunpack.c.h.b16 %v2329
    %v2620 = vunpack.c.l.b16 %v2330
    %v2621 = vunpack.c.l.b16 %v2331
    %v2622 = vunpack.c.h.b16 %v2331
    %v2623 = vunpack.c.l.b16 %v2332
    %v2624 = vunpack.c.l.b16 %v2333
    %v2625 = vunpack.c.h.b16 %v2333
    %v2626 = vunpack.c.l.b16 %v2334
    %v2627 = vunpack.c.l.b16 %v2335
    %v2628 = vunpack.c.h.b16 %v2335
    %v2629 = vunpack.c.l.b16 %v2336
    %v2630 = vunpack.c.l.b16 %v2337
    %v2631 = vunpack.c.h.b16 %v2337
    %v2632 = vunpack.c.l.b16 %v2338
    %v2633 = vunpack.c.l.b16 %v2339
    %v2634 = vunpack.c.h.b16 %v2339
    %v2635 = vunpack.c.l.b16 %v2340
    %v2636 = vunpack.c.l.b16 %v2341
    %v2637 = vunpack.c.h.b16 %v2341
    %v2638 = vunpack.c.l.b16 %v2342
    %v2639 = vunpack.c.l.b16 %v2343
    %v2640 = vunpack.c.h.b16 %v2343
    %v2641 = vunpack.c.l.b16 %v2344
    %v2642 = vunpack.c.l.b16 %v2345
    %v2643 = vunpack.c.h.b16 %v2345
    %v2644 = vunpack.c.l.b16 %v2346
    %v2645 = vunpack.c.l.b16 %v2347
    %v2646 = vunpack.c.h.b16 %v2347
    %v2647 = vunpack.c.l.b16 %v2348
    %v2648 = vunpack.c.l.b16 %v2349
    %v2649 = vunpack.c.h.b16 %v2349
    %v2650 = vunpack.c.l.b16 %v2350
    %v2651 = vunpack.c.l.b16 %v2351
    %v2652 = vunpack.c.h.b16 %v2351
    %v2653 = vunpack.c.l.b16 %v2352
    %v2654 = vunpack.c.l.b16 %v2353
    %v2655 = vunpack.c.h.b16 %v2353
    %v2656 = vunpack.c.l.b16 %v2354
    %v2657 = vunpack.c.l.b16 %v2355
    %v2658 = vunpack.c.h.b16 %v2355
    %v2659 = vunpack.c.l.b16 %v2356
    %v2660 = vunpack.c.l.b16 %v2357
    %v2661 = vunpack.c.h.b16 %v2357
    %v2662 = vunpack.c.l.b16 %v2358
    %v2663 = vunpack.c.l.b16 %v2359
    %v2664 = vunpack.c.h.b16 %v2359
    %v2665 = vunpack.c.l.b16 %v2360
    %v2666 = vunpack.c.l.b16 %v2361
    %v2667 = vunpack.c.h.b16 %v2361
    %v2668 = vunpack.c.l.b16 %v2362
    %v2669 = vunpack.c.l.b16 %v2363
    %v2670 = vunpack.c.h.b16 %v2363
    %v2671 = vunpack.c.l.b16 %v2364
    %v2672 = vunpack.c.l.b16 %v2365
    %v2673 = vunpack.c.h.b16 %v2365
    %v2674 = vunpack.c.l.b16 %v2366
    %v2675 = vunpack.c.l.b16 %v2367
    %v2676 = vunpack.c.h.b16 %v2367
    %v2677 = vunpack.c.l.b16 %v2368
    %v2678 = vunpack.c.l.b16 %v2369
    %v2679 = vunpack.c.h.b16 %v2369
    %v2680 = vunpack.c.l.b16 %v2370
    %v2681 = vunpack.c.l.b16 %v2371
    %v2682 = vunpack.c.h.b16 %v2371
    %v2683 = vunpack.c.l.b16 %v2372
    %v2684 = vunpack.c.l.b16 %v2373
    %v2685 = vunpack.c.h.b16 %v2373
    %v2686 = vunpack.c.l.b16 %v2374
    %v2687 = vunpack.c.l.b16 %v2375
    %v2688 = vunpack.c.h.b16 %v2375
    %v2689 = vunpack.c.l.b16 %v2376
    %v2690 = vunpack.c.l.b16 %v2377
    %v2691 = vunpack.c.h.b16 %v2377
    %v2692 = vunpack.c.l.b16 %v2378
    %v2693 = vunpack.c.l.b16 %v2379
    %v2694 = vunpack.c.h.b16 %v2379
    %v2695 = vunpack.c.l.b16 %v2380
    %v2696 = vunpack.c.l.b16 %v2381
    %v2697 = vunpack.c.h.b16 %v2381
    %v2698 = vunpack.c.l.b16 %v2382
    %v2699 = vunpack.c.l.b16 %v2383
    %v2700 = vunpack.c.h.b16 %v2383
    %v2701 = vunpack.c.l.b16 %v2384
    %v2702 = vunpack.c.l.b16 %v2385
    %v2703 = vunpack.c.h.b16 %v2385
    %v2704 = vunpack.c.l.b16 %v2386
    %v2705 = vunpack.c.l.b16 %v2387
    %v2706 = vunpack.c.h.b16 %v2387
    %v2707 = vunpack.c.l.b16 %v2388
    %v2708 = vunpack.c.l.b16 %v2389
    %v2709 = vunpack.c.h.b16 %v2389
    %v2710 = vunpack.c.l.b16 %v2390
    %v2711 = vunpack.c.l.b16 %v2391
    %v2712 = vunpack.c.h.b16 %v2391
    %v2713 = vunpack.c.l.b16 %v2392
    %v2714 = vunpack.c.l.b16 %v2393
    %v2715 = vunpack.c.h.b16 %v2393
    %v2716 = vunpack.c.l.b16 %v2394
    %v2717 = vunpack.c.l.b16 %v2395
    %v2718 = vunpack.c.h.b16 %v2395
    %v2719 = vunpack.c.l.b16 %v2396
    %v2720 = vunpack.c.l.b16 %v2397
    %v2721 = vunpack.c.h.b16 %v2397
    %v2722 = vunpack.c.l.b16 %v2398
    %v2723 = vunpack.c.l.b16 %v2399
    %v2724 = vunpack.c.h.b16 %v2399
    %v2725 = vunpack.c.l.b16 %v2400
    %v2726 = vunpack.c.l.b16 %v2401
    %v2727 = vunpack.c.h.b16 %v2401
    %v2728 = vunpack.c.l.b16 %v2402
    %v2729 = vunpack.c.l.b16 %v2403
    %v2730 = vunpack.c.h.b16 %v2403
    %v2731 = vunpack.c.l.b16 %v2404
    %v2732 = vunpack.c.l.b16 %v2405
    %v2733 = vunpack.c.h.b16 %v2405
    %v2734 = vunpack.c.l.b16 %v2406
    %v2735 = vunpack.c.l.b16 %v2407
    %v2736 = vunpack.c.h.b16 %v2407
    %v2737 = vunpack.c.l.b16 %v2408
    %v2738 = vunpack.c.l.b16 %v2409
    %v2739 = vunpack.c.h.b16 %v2409
    %v2740 = vunpack.c.l.b16 %v2410
    %v2741 = vunpack.c.l.b16 %v2411
    %v2742 = vunpack.c.h.b16 %v2411
    %v2743 = vunpack.c.l.b16 %v2412
    %v2744 = vunpack.c.l.b16 %v2413
    %v2745 = vunpack.c.h.b16 %v2413
    %v2746 = vunpack.c.l.b16 %v2414
    %v2747 = vunpack.c.l.b16 %v2415
    %v2748 = vunpack.c.h.b16 %v2415
    %v2749 = vunpack.c.l.b16 %v2416
    %v2750 = vunpack.c.l.b16 %v2417
    %v2751 = vunpack.c.h.b16 %v2417
    %v2752 = vunpack.c.l.b16 %v2418
    %v2753 = vunpack.c.l.b16 %v2419
    %v2754 = vunpack.c.h.b16 %v2419
    %v2755 = vunpack.c.l.b16 %v2420
    %v2756 = vunpack.c.l.b16 %v2421
    %v2757 = vunpack.c.h.b16 %v2421
    %v2758 = vunpack.c.l.b16 %v2422
    %v2759 = vunpack.c.l.b16 %v2423
    %v2760 = vunpack.c.h.b16 %v2423
    %v2761 = vunpack.c.l.b16 %v2424
    %v2762 = vpack.c.b16 %v2573, %v2570
    %v2763 = vpack.c.b16 %v2574, %v2571
    %v2764 = vpack.c.b16 %v2575, %v2572
    %v2765 = vpack.c.b16 %v2579, %v2576
    %v2766 = vpack.c.b16 %v2580, %v2577
    %v2767 = vpack.c.b16 %v2581, %v2578
    %v2768 = vpack.c.b16 %v2585, %v2582
    %v2769 = vpack.c.b16 %v2586, %v2583
    %v2770 = vpack.c.b16 %v2587, %v2584
    %v2771 = vpack.c.b16 %v2591, %v2588
    %v2772 = vpack.c.b16 %v2592, %v2589
    %v2773 = vpack.c.b16 %v2593, %v2590
    %v2774 = vpack.c.b16 %v2597, %v2594
    %v2775 = vpack.c.b16 %v2598, %v2595
    %v2776 = vpack.c.b16 %v2599, %v2596
    %v2777 = vpack.c.b16 %v2603, %v2600
    %v2778 = vpack.c.b16 %v2604, %v2601
    %v2779 = vpack.c.b16 %v2605, %v2602
    %v2780 = vpack.c.b16 %v2609, %v2606
    %v2781 = vpack.c.b16 %v2610, %v2607
    %v2782 = vpack.c.b16 %v2611, %v2608
    %v2783 = vpack.c.b16 %v2615, %v2612
    %v2784 = vpack.c.b16 %v2616, %v2613
    %v2785 = vpack.c.b16 %v2617, %v2614
    %v2786 = vpack.c.b16 %v2621, %v2618
    %v2787 = vpack.c.b16 %v2622, %v2619
    %v2788 = vpack.c.b16 %v2623, %v2620
    %v2789 = vpack.c.b16 %v2627, %v2624
    %v2790 = vpack.c.b16 %v2628, %v2625
    %v2791 = vpack.c.b16 %v2629, %v2626
    %v2792 = vpack.c.b16 %v2633, %v2630
    %v2793 = vpack.c.b16 %v2634, %v2631
    %v2794 = vpack.c.b16 %v2635, %v2632
    %v2795 = vpack.c.b16 %v2639, %v2636
    %v2796 = vpack.c.b16 %v2640, %v2637
    %v2797 = vpack.c.b16 %v2641, %v2638
    %v2798 = vpack.c.b16 %v2645, %v2642
    %v2799 = vpack.c.b16 %v2646, %v2643
    %v2800 = vpack.c.b16 %v2647, %v2644
    %v2801 = vpack.c.b16 %v2651, %v2648
    %v2802 = vpack.c.b16 %v2652, %v2649
    %v2803 = vpack.c.b16 %v2653, %v2650
    %v2804 = vpack.c.b16 %v2657, %v2654
    %v2805 = vpack.c.b16 %v2658, %v2655
    %v2806 = vpack.c.b16 %v2659, %v2656
    %v2807 = vpack.c.b16 %v2663, %v2660
    %v2808 = vpack.c.b16 %v2664, %v2661
    %v2809 = vpack.c.b16 %v2665, %v2662
    %v2810 = vpack.c.b16 %v2669, %v2666
    %v2811 = vpack.c.b16 %v2670, %v2667
    %v2812 = vpack.c.b16 %v2671, %v2668
    %v2813 = vpack.c.b16 %v2675, %v2672
    %v2814 = vpack.c.b16 %v2676, %v2673
    %v2815 = vpack.c.b16 %v2677, %v2674
    %v2816 = vpack.c.b16 %v2681, %v2678
    %v2817 = vpack.c.b16 %v2682, %v2679
    %v2818 = vpack.c.b16 %v2683, %v2680
    %v2819 = vpack.c.b16 %v2687, %v2684
    %v2820 = vpack.c.b16 %v2688, %v2685
    %v2821 = vpack.c.b16 %v2689, %v2686
    %v2822 = vpack.c.b16 %v2693, %v2690
    %v2823 = vpack.c.b16 %v2694, %v2691
    %v2824 = vpack.c.b16 %v2695, %v2692
    %v2825 = vpack.c.b16 %v2699, %v2696
    %v2826 = vpack.c.b16 %v2700, %v2697
    %v2827 = vpack.c.b16 %v2701, %v2698
    %v2828 = vpack.c.b16 %v2705, %v2702
    %v2829 = vpack.c.b16 %v2706, %v2703
    %v2830 = vpack.c.b16 %v2707, %v2704
    %v2831 = vpack.c.b16 %v2711, %v2708
    %v2832 = vpack.c.b16 %v2712, %v2709
    %v2833 = vpack.c.b16 %v2713, %v2710
    %v2834 = vpack.c.b16 %v2717, %v2714
    %v2835 = vpack.c.b16 %v2718, %v2715
    %v2836 = vpack.c.b16 %v2719, %v2716
    %v2837 = vpack.c.b16 %v2723, %v2720
    %v2838 = vpack.c.b16 %v2724, %v2721
    %v2839 = vpack.c.b16 %v2725, %v2722
    %v2840 = vpack.c.b16 %v2729, %v2726
    %v2841 = vpack.c.b16 %v2730, %v2727
    %v2842 = vpack.c.b16 %v2731, %v2728
    %v2843 = vpack.c.b16 %v2735, %v2732
    %v2844 = vpack.c.b16 %v2736, %v2733
    %v2845 = vpack.c.b16 %v2737, %v2734
    %v2846 = vpack.c.b16 %v2741, %v2738
    %v2847 = vpack.c.b16 %v2742, %v2739
    %v2848 = vpack.c.b16 %v2743, %v2740
    %v2849 = vpack.c.b16 %v2747, %v2744
    %v2850 = vpack.c.b16 %v2748, %v2745
    %v2851 = vpack.c.b16 %v2749, %v2746
    %v2852 = vpack.c.b16 %v2753, %v2750
    %v2853 = vpack.c.b16 %v2754, %v2751
    %v2854 = vpack.c.b16 %v2755, %v2752
    %v2855 = vpack.c.b16 %v2759, %v2756
    %v2856 = vpack.c.b16 %v2760, %v2757
    %v2857 = vpack.c.b16 %v2761, %v2758
    %2954 = vmatprep.subr.bf16.mxu0 %v2763
    %2955 = vmatpush1.bf16.msra.mxu0 %v2762
    %2956 = vmatprep.subr.bf16.mxu0 %v2766
    %2957 = vmatpush1.bf16.msra.mxu0 %v2765
    %2958 = vmatprep.subr.bf16.mxu0 %v2769
    %2959 = vmatpush1.bf16.msra.mxu0 %v2768
    %2960 = vmatprep.subr.bf16.mxu0 %v2772
    %2961 = vmatpush1.bf16.msra.mxu0 %v2771
    %2962 = vmatprep.subr.bf16.mxu0 %v2775
    %2963 = vmatpush1.bf16.msra.mxu0 %v2774
    %2964 = vmatprep.subr.bf16.mxu0 %v2778
    %2965 = vmatpush1.bf16.msra.mxu0 %v2777
    %2966 = vmatprep.subr.bf16.mxu0 %v2781
    %2967 = vmatpush1.bf16.msra.mxu0 %v2780
    %2968 = vmatprep.subr.bf16.mxu0 %v2784
    %2969 = vmatpush1.bf16.msra.mxu0 %v2783
    %2970 = vmatprep.subr.bf16.mxu0 %v2787
    %2971 = vmatpush1.bf16.msra.mxu0 %v2786
    %2972 = vmatprep.subr.bf16.mxu0 %v2790
    %2973 = vmatpush1.bf16.msra.mxu0 %v2789
    %2974 = vmatprep.subr.bf16.mxu0 %v2793
    %2975 = vmatpush1.bf16.msra.mxu0 %v2792
    %2976 = vmatprep.subr.bf16.mxu0 %v2796
    %2977 = vmatpush1.bf16.msra.mxu0 %v2795
    %2978 = vmatprep.subr.bf16.mxu0 %v2799
    %2979 = vmatpush1.bf16.msra.mxu0 %v2798
    %2980 = vmatprep.subr.bf16.mxu0 %v2802
    %2981 = vmatpush1.bf16.msra.mxu0 %v2801
    %2982 = vmatprep.subr.bf16.mxu0 %v2805
    %2983 = vmatpush1.bf16.msra.mxu0 %v2804
    %2984 = vmatprep.subr.bf16.mxu0 %v2808
    %2985 = vmatpush1.bf16.msra.mxu0 %v2807
    %2986 = vmatprep.mubr.bf16.mxu0 %v2294
    %2987 = vmatmul.mubr.bf16.gmra.mrb[0].mxu0 %v2293
    %v2988 = vpop.f32.mrb[0].mxu0
    %v2989 = vadd.f32 %v2430, %v2988
    %v2990 = vpop.f32.mrb[0].mxu0
    %v2991 = vadd.f32 %v2434, %v2990
    %v2992 = vpop.f32.mrb[0].mxu0
    %v2993 = vpop.f32.mrb[0].mxu0
    %2994 = vdwg.mxu0
    %2995 = vmatprep.subr.bf16.mxu0 %v2811
    %2996 = vmatpush1.bf16.msra.mxu0 %v2810
    %2997 = vmatprep.subr.bf16.mxu0 %v2814
    %2998 = vmatpush1.bf16.msra.mxu0 %v2813
    %2999 = vmatprep.subr.bf16.mxu0 %v2817
    %3000 = vmatpush1.bf16.msra.mxu0 %v2816
    %3001 = vmatprep.subr.bf16.mxu0 %v2820
    %3002 = vmatpush1.bf16.msra.mxu0 %v2819
    %3003 = vmatprep.subr.bf16.mxu0 %v2823
    %3004 = vmatpush1.bf16.msra.mxu0 %v2822
    %3005 = vmatprep.subr.bf16.mxu0 %v2826
    %3006 = vmatpush1.bf16.msra.mxu0 %v2825
    %3007 = vmatprep.subr.bf16.mxu0 %v2829
    %3008 = vmatpush1.bf16.msra.mxu0 %v2828
    %3009 = vmatprep.subr.bf16.mxu0 %v2832
    %3010 = vmatpush1.bf16.msra.mxu0 %v2831
    %3011 = vmatprep.subr.bf16.mxu0 %v2835
    %3012 = vmatpush1.bf16.msra.mxu0 %v2834
    %3013 = vmatprep.subr.bf16.mxu0 %v2838
    %3014 = vmatpush1.bf16.msra.mxu0 %v2837
    %3015 = vmatprep.subr.bf16.mxu0 %v2841
    %3016 = vmatpush1.bf16.msra.mxu0 %v2840
    %3017 = vmatprep.subr.bf16.mxu0 %v2844
    %3018 = vmatpush1.bf16.msra.mxu0 %v2843
    %3019 = vmatprep.subr.bf16.mxu0 %v2847
    %3020 = vmatpush1.bf16.msra.mxu0 %v2846
    %3021 = vmatprep.subr.bf16.mxu0 %v2850
    %3022 = vmatpush1.bf16.msra.mxu0 %v2849
    %3023 = vmatprep.subr.bf16.mxu0 %v2853
    %3024 = vmatpush1.bf16.msra.mxu0 %v2852
    %3025 = vmatprep.subr.bf16.mxu0 %v2856
    %3026 = vmatpush1.bf16.msra.mxu0 %v2855
    %3027 = vmatprep.mubr.bf16.mxu0 %v2296
    %3028 = vmatmul.mubr.bf16.gmra.mrb[0].mxu0 %v2295
    %v3029 = vpop.f32.mrb[0].mxu0
    %v3030 = vadd.f32 %v2989, %v3029
    %v3031 = vpop.f32.mrb[0].mxu0
    %v3032 = vadd.f32 %v2991, %v3031
    %v3033 = vpop.f32.mrb[0].mxu0
    %v3034 = vpop.f32.mrb[0].mxu0
    %3035 = vdwg.mxu0
    %3036 = vmatprep.subr.bf16.mxu0 0
    %3037 = vmatpush1.bf16.msra.mxu0 %v2764
    %3038 = vmatprep.subr.bf16.mxu0 0
    %3039 = vmatpush1.bf16.msra.mxu0 %v2767
    %3040 = vmatprep.subr.bf16.mxu0 0
    %3041 = vmatpush1.bf16.msra.mxu0 %v2770
    %3042 = vmatprep.subr.bf16.mxu0 0
    %3043 = vmatpush1.bf16.msra.mxu0 %v2773
    %3044 = vmatprep.subr.bf16.mxu0 0
    %3045 = vmatpush1.bf16.msra.mxu0 %v2776
    %3046 = vmatprep.subr.bf16.mxu0 0
    %3047 = vmatpush1.bf16.msra.mxu0 %v2779
    %3048 = vmatprep.subr.bf16.mxu0 0
    %3049 = vmatpush1.bf16.msra.mxu0 %v2782
    %3050 = vmatprep.subr.bf16.mxu0 0
    %3051 = vmatpush1.bf16.msra.mxu0 %v2785
    %3052 = vmatprep.subr.bf16.mxu0 0
    %3053 = vmatpush1.bf16.msra.mxu0 %v2788
    %3054 = vmatprep.subr.bf16.mxu0 0
    %3055 = vmatpush1.bf16.msra.mxu0 %v2791
    %3056 = vmatprep.subr.bf16.mxu0 0
    %3057 = vmatpush1.bf16.msra.mxu0 %v2794
    %3058 = vmatprep.subr.bf16.mxu0 0
    %3059 = vmatpush1.bf16.msra.mxu0 %v2797
    %3060 = vmatprep.subr.bf16.mxu0 0
    %3061 = vmatpush1.bf16.msra.mxu0 %v2800
    %3062 = vmatprep.subr.bf16.mxu0 0
    %3063 = vmatpush1.bf16.msra.mxu0 %v2803
    %3064 = vmatprep.subr.bf16.mxu0 0
    %3065 = vmatpush1.bf16.msra.mxu0 %v2806
    %3066 = vmatprep.subr.bf16.mxu0 0
    %3067 = vmatpush1.bf16.msra.mxu0 %v2809
    %3068 = vmatprep.mubr.bf16.mxu0 %v2294
    %3069 = vmatmul.mubr.bf16.gmra.mrb[0].mxu0 %v2293
    %v3070 = vpop.f32.mrb[0].mxu0
    %v3071 = vadd.f32 %v2438, %v3070
    %v3072 = vpop.f32.mrb[0].mxu0
    %v3073 = vpop.f32.mrb[0].mxu0
    %v3074 = vpop.f32.mrb[0].mxu0
    %3075 = vdwg.mxu0
    %3076 = vmatprep.subr.bf16.mxu0 0
    %3077 = vmatpush1.bf16.msra.mxu0 %v2812
    %3078 = vmatprep.subr.bf16.mxu0 0
    %3079 = vmatpush1.bf16.msra.mxu0 %v2815
    %3080 = vmatprep.subr.bf16.mxu0 0
    %3081 = vmatpush1.bf16.msra.mxu0 %v2818
    %3082 = vmatprep.subr.bf16.mxu0 0
    %3083 = vmatpush1.bf16.msra.mxu0 %v2821
    %3084 = vmatprep.subr.bf16.mxu0 0
    %3085 = vmatpush1.bf16.msra.mxu0 %v2824
    %3086 = vmatprep.subr.bf16.mxu0 0
    %3087 = vmatpush1.bf16.msra.mxu0 %v2827
    %3088 = vmatprep.subr.bf16.mxu0 0
    %3089 = vmatpush1.bf16.msra.mxu0 %v2830
    %3090 = vmatprep.subr.bf16.mxu0 0
    %3091 = vmatpush1.bf16.msra.mxu0 %v2833
    %3092 = vmatprep.subr.bf16.mxu0 0
    %3093 = vmatpush1.bf16.msra.mxu0 %v2836
    %3094 = vmatprep.subr.bf16.mxu0 0
    %3095 = vmatpush1.bf16.msra.mxu0 %v2839
    %3096 = vmatprep.subr.bf16.mxu0 0
    %3097 = vmatpush1.bf16.msra.mxu0 %v2842
    %3098 = vmatprep.subr.bf16.mxu0 0
    %3099 = vmatpush1.bf16.msra.mxu0 %v2845
    %3100 = vmatprep.subr.bf16.mxu0 0
    %3101 = vmatpush1.bf16.msra.mxu0 %v2848
    %3102 = vmatprep.subr.bf16.mxu0 0
    %3103 = vmatpush1.bf16.msra.mxu0 %v2851
    %3104 = vmatprep.subr.bf16.mxu0 0
    %3105 = vmatpush1.bf16.msra.mxu0 %v2854
    %3106 = vmatprep.subr.bf16.mxu0 0
    %3107 = vmatpush1.bf16.msra.mxu0 %v2857
    %3108 = vmatprep.mubr.bf16.mxu0 %v2296
    %3109 = vmatmul.mubr.bf16.gmra.mrb[0].mxu0 %v2295
    %v3110 = vpop.f32.mrb[0].mxu0
    %v3111 = vadd.f32 %v3071, %v3110
    %v3112 = vpop.f32.mrb[0].mxu0
    %v3113 = vpop.f32.mrb[0].mxu0
    %v3114 = vpop.f32.mrb[0].mxu0
    %3115 = vdwg.mxu0
    %vm3116 = vcmp.gt.f32.partialorder %v3030, 0.0
    %vm3117 = vcmp.gt.f32.partialorder %v3032, 0.0
    %vm3118 = vcmp.gt.f32.partialorder %v3111, 0.0
    %v3119 = vmul.f32 %v3030, 0.2
    %v3120 = vmul.f32 %v3032, 0.2
    %v3121 = vmul.f32 %v3111, 0.2
    %v3122 = vsel %vm3116, %v3030, %v3119
    %v3123 = vsel %vm3117, %v3032, %v3120
    %v3124 = vsel %vm3118, %v3111, %v3121
    %v3125 = vpack.c.bf16 %v3122, %v3122
    %v3126 = vpack.c.bf16 %v3123, %v3123
    %v3127 = vpack.c.bf16 %v3124, %v3124
    %v3128 = vld [vmem:[#allocation8] sm:$0xff]
    %v3129 = vld [vmem:[#allocation8 + $0x8] sm:$0xff]
    %v3130 = vld [vmem:[#allocation8 + $0x10] sm:$0xff]
    %v3131 = vld [vmem:[#allocation8 + $0x18] sm:$0xff]
    %v3132 = vld [vmem:[#allocation8 + $0x20] sm:$0xff]
    %v3133 = vld [vmem:[#allocation8 + $0x28] sm:$0xff]
    %v3134 = vld [vmem:[#allocation8 + $0x30] sm:$0xff]
    %v3135 = vld [vmem:[#allocation8 + $0x38] sm:$0xff]
    %v3136 = vld [vmem:[#allocation8 + $0x40] sm:$0xff]
    %v3137 = vld [vmem:[#allocation8 + $0x48] sm:$0xff]
    %v3138 = vld [vmem:[#allocation8 + $0x50] sm:$0xff]
    %v3139 = vld [vmem:[#allocation8 + $0x58] sm:$0xff]
    %v3140 = vld [vmem:[#allocation8 + $0x60] sm:$0xff]
    %v3141 = vld [vmem:[#allocation8 + $0x68] sm:$0xff]
    %v3142 = vld [vmem:[#allocation8 + $0x70] sm:$0xff]
    %v3143 = vld [vmem:[#allocation8 + $0x78] sm:$0xff]
    %v3144 = vld [vmem:[#allocation8 + $0x80] sm:$0xff]
    %v3145 = vld [vmem:[#allocation8 + $0x88] sm:$0xff]
    %v3146 = vld [vmem:[#allocation8 + $0x90] sm:$0xff]
    %v3147 = vld [vmem:[#allocation8 + $0x98] sm:$0xff]
    %v3148 = vld [vmem:[#allocation8 + $0xa0] sm:$0xff]
    %v3149 = vld [vmem:[#allocation8 + $0xa8] sm:$0xff]
    %v3150 = vld [vmem:[#allocation8 + $0xb0] sm:$0xff]
    %v3151 = vld [vmem:[#allocation8 + $0xb8] sm:$0xff]
    %v3152 = vld [vmem:[#allocation8 + $0xc0] sm:$0xff]
    %v3153 = vld [vmem:[#allocation8 + $0xc8] sm:$0xff]
    %v3154 = vld [vmem:[#allocation8 + $0xd0] sm:$0xff]
    %v3155 = vld [vmem:[#allocation8 + $0xd8] sm:$0xff]
    %v3156 = vld [vmem:[#allocation8 + $0xe0] sm:$0xff]
    %v3157 = vld [vmem:[#allocation8 + $0xe8] sm:$0xff]
    %v3158 = vld [vmem:[#allocation8 + $0xf0] sm:$0xff]
    %v3159 = vld [vmem:[#allocation8 + $0xf8] sm:$0xff]
    %v3160 = vld [vmem:[#allocation8 + $0x100] sm:$0xff]
    %v3161 = vld [vmem:[#allocation8 + $0x108] sm:$0xff]
    %v3162 = vld [vmem:[#allocation8 + $0x110] sm:$0xff]
    %v3163 = vld [vmem:[#allocation8 + $0x118] sm:$0xff]
    %v3164 = vld [vmem:[#allocation8 + $0x120] sm:$0xff]
    %v3165 = vld [vmem:[#allocation8 + $0x128] sm:$0xff]
    %v3166 = vld [vmem:[#allocation8 + $0x130] sm:$0xff]
    %v3167 = vld [vmem:[#allocation8 + $0x138] sm:$0xff]
    %v3168 = vld [vmem:[#allocation8 + $0x140] sm:$0xff]
    %v3169 = vld [vmem:[#allocation8 + $0x148] sm:$0xff]
    %v3170 = vld [vmem:[#allocation8 + $0x150] sm:$0xff]
    %v3171 = vld [vmem:[#allocation8 + $0x158] sm:$0xff]
    %v3172 = vld [vmem:[#allocation8 + $0x160] sm:$0xff]
    %v3173 = vld [vmem:[#allocation8 + $0x168] sm:$0xff]
    %v3174 = vld [vmem:[#allocation8 + $0x170] sm:$0xff]
    %v3175 = vld [vmem:[#allocation8 + $0x178] sm:$0xff]
    %v3176 = vld [vmem:[%s8] sm:$0x3]
    %v3178 = vlaneseq
    %v3179 = vshrl.u32 %v3178, 7
    %v3180 = vsub.s32 0, %v3179
    %v3181 = vrot.slane %v3176, %v3180
    %v3182 = vlaneseq
    %v3183 = vshrl.u32 %v3182, 7
    %v3184 = vsub.s32 1, %v3183
    %v3185 = vrot.slane %v3176, %v3184
    %v3236 = vunpack.c.l.b16 %v3128
    %v3237 = vunpack.c.h.b16 %v3128
    %v3238 = vunpack.c.l.b16 %v3129
    %v3239 = vunpack.c.h.b16 %v3129
    %v3240 = vunpack.c.l.b16 %v3130
    %v3241 = vunpack.c.h.b16 %v3130
    %v3242 = vunpack.c.l.b16 %v3131
    %v3243 = vunpack.c.h.b16 %v3131
    %v3244 = vunpack.c.l.b16 %v3132
    %v3245 = vunpack.c.h.b16 %v3132
    %v3246 = vunpack.c.l.b16 %v3133
    %v3247 = vunpack.c.h.b16 %v3133
    %v3248 = vunpack.c.l.b16 %v3134
    %v3249 = vunpack.c.h.b16 %v3134
    %v3250 = vunpack.c.l.b16 %v3135
    %v3251 = vunpack.c.h.b16 %v3135
    %v3252 = vunpack.c.l.b16 %v3136
    %v3253 = vunpack.c.h.b16 %v3136
    %v3254 = vunpack.c.l.b16 %v3137
    %v3255 = vunpack.c.h.b16 %v3137
    %v3256 = vunpack.c.l.b16 %v3138
    %v3257 = vunpack.c.h.b16 %v3138
    %v3258 = vunpack.c.l.b16 %v3139
    %v3259 = vunpack.c.h.b16 %v3139
    %v3260 = vunpack.c.l.b16 %v3140
    %v3261 = vunpack.c.h.b16 %v3140
    %v3262 = vunpack.c.l.b16 %v3141
    %v3263 = vunpack.c.h.b16 %v3141
    %v3264 = vunpack.c.l.b16 %v3142
    %v3265 = vunpack.c.h.b16 %v3142
    %v3266 = vunpack.c.l.b16 %v3143
    %v3267 = vunpack.c.h.b16 %v3143
    %v3268 = vunpack.c.l.b16 %v3144
    %v3269 = vunpack.c.h.b16 %v3144
    %v3270 = vunpack.c.l.b16 %v3145
    %v3271 = vunpack.c.h.b16 %v3145
    %v3272 = vunpack.c.l.b16 %v3146
    %v3273 = vunpack.c.h.b16 %v3146
    %v3274 = vunpack.c.l.b16 %v3147
    %v3275 = vunpack.c.h.b16 %v3147
    %v3276 = vunpack.c.l.b16 %v3148
    %v3277 = vunpack.c.h.b16 %v3148
    %v3278 = vunpack.c.l.b16 %v3149
    %v3279 = vunpack.c.h.b16 %v3149
    %v3280 = vunpack.c.l.b16 %v3150
    %v3281 = vunpack.c.h.b16 %v3150
    %v3282 = vunpack.c.l.b16 %v3151
    %v3283 = vunpack.c.h.b16 %v3151
    %v3284 = vunpack.c.l.b16 %v3152
    %v3285 = vunpack.c.h.b16 %v3152
    %v3286 = vunpack.c.l.b16 %v3153
    %v3287 = vunpack.c.h.b16 %v3153
    %v3288 = vunpack.c.l.b16 %v3154
    %v3289 = vunpack.c.h.b16 %v3154
    %v3290 = vunpack.c.l.b16 %v3155
    %v3291 = vunpack.c.h.b16 %v3155
    %v3292 = vunpack.c.l.b16 %v3156
    %v3293 = vunpack.c.h.b16 %v3156
    %v3294 = vunpack.c.l.b16 %v3157
    %v3295 = vunpack.c.h.b16 %v3157
    %v3296 = vunpack.c.l.b16 %v3158
    %v3297 = vunpack.c.h.b16 %v3158
    %v3298 = vunpack.c.l.b16 %v3159
    %v3299 = vunpack.c.h.b16 %v3159
    %v3300 = vunpack.c.l.b16 %v3160
    %v3301 = vunpack.c.h.b16 %v3160
    %v3302 = vunpack.c.l.b16 %v3161
    %v3303 = vunpack.c.h.b16 %v3161
    %v3304 = vunpack.c.l.b16 %v3162
    %v3305 = vunpack.c.h.b16 %v3162
    %v3306 = vunpack.c.l.b16 %v3163
    %v3307 = vunpack.c.h.b16 %v3163
    %v3308 = vunpack.c.l.b16 %v3164
    %v3309 = vunpack.c.h.b16 %v3164
    %v3310 = vunpack.c.l.b16 %v3165
    %v3311 = vunpack.c.h.b16 %v3165
    %v3312 = vunpack.c.l.b16 %v3166
    %v3313 = vunpack.c.h.b16 %v3166
    %v3314 = vunpack.c.l.b16 %v3167
    %v3315 = vunpack.c.h.b16 %v3167
    %v3316 = vunpack.c.l.b16 %v3168
    %v3317 = vunpack.c.h.b16 %v3168
    %v3318 = vunpack.c.l.b16 %v3169
    %v3319 = vunpack.c.h.b16 %v3169
    %v3320 = vunpack.c.l.b16 %v3170
    %v3321 = vunpack.c.h.b16 %v3170
    %v3322 = vunpack.c.l.b16 %v3171
    %v3323 = vunpack.c.h.b16 %v3171
    %v3324 = vunpack.c.l.b16 %v3172
    %v3325 = vunpack.c.h.b16 %v3172
    %v3326 = vunpack.c.l.b16 %v3173
    %v3327 = vunpack.c.h.b16 %v3173
    %v3328 = vunpack.c.l.b16 %v3174
    %v3329 = vunpack.c.h.b16 %v3174
    %v3330 = vunpack.c.l.b16 %v3175
    %v3331 = vunpack.c.h.b16 %v3175
    %v3332 = vpack.c.b16 %v3238, %v3236
    %v3333 = vpack.c.b16 %v3239, %v3237
    %v3334 = vpack.c.b16 %v3242, %v3240
    %v3335 = vpack.c.b16 %v3243, %v3241
    %v3336 = vpack.c.b16 %v3246, %v3244
    %v3337 = vpack.c.b16 %v3247, %v3245
    %v3338 = vpack.c.b16 %v3250, %v3248
    %v3339 = vpack.c.b16 %v3251, %v3249
    %v3340 = vpack.c.b16 %v3254, %v3252
    %v3341 = vpack.c.b16 %v3255, %v3253
    %v3342 = vpack.c.b16 %v3258, %v3256
    %v3343 = vpack.c.b16 %v3259, %v3257
    %v3344 = vpack.c.b16 %v3262, %v3260
    %v3345 = vpack.c.b16 %v3263, %v3261
    %v3346 = vpack.c.b16 %v3266, %v3264
    %v3347 = vpack.c.b16 %v3267, %v3265
    %v3348 = vpack.c.b16 %v3270, %v3268
    %v3349 = vpack.c.b16 %v3271, %v3269
    %v3350 = vpack.c.b16 %v3274, %v3272
    %v3351 = vpack.c.b16 %v3275, %v3273
    %v3352 = vpack.c.b16 %v3278, %v3276
    %v3353 = vpack.c.b16 %v3279, %v3277
    %v3354 = vpack.c.b16 %v3282, %v3280
    %v3355 = vpack.c.b16 %v3283, %v3281
    %v3356 = vpack.c.b16 %v3286, %v3284
    %v3357 = vpack.c.b16 %v3287, %v3285
    %v3358 = vpack.c.b16 %v3290, %v3288
    %v3359 = vpack.c.b16 %v3291, %v3289
    %v3360 = vpack.c.b16 %v3294, %v3292
    %v3361 = vpack.c.b16 %v3295, %v3293
    %v3362 = vpack.c.b16 %v3298, %v3296
    %v3363 = vpack.c.b16 %v3299, %v3297
    %v3364 = vpack.c.b16 %v3302, %v3300
    %v3365 = vpack.c.b16 %v3303, %v3301
    %v3366 = vpack.c.b16 %v3306, %v3304
    %v3367 = vpack.c.b16 %v3307, %v3305
    %v3368 = vpack.c.b16 %v3310, %v3308
    %v3369 = vpack.c.b16 %v3311, %v3309
    %v3370 = vpack.c.b16 %v3314, %v3312
    %v3371 = vpack.c.b16 %v3315, %v3313
    %v3372 = vpack.c.b16 %v3318, %v3316
    %v3373 = vpack.c.b16 %v3319, %v3317
    %v3374 = vpack.c.b16 %v3322, %v3320
    %v3375 = vpack.c.b16 %v3323, %v3321
    %v3376 = vpack.c.b16 %v3326, %v3324
    %v3377 = vpack.c.b16 %v3327, %v3325
    %v3378 = vpack.c.b16 %v3330, %v3328
    %v3379 = vpack.c.b16 %v3331, %v3329
    %3428 = vmatprep.subr.bf16.mxu0 %v3333
    %3429 = vmatpush1.bf16.msra.mxu0 %v3332
    %3430 = vmatprep.subr.bf16.mxu0 %v3335
    %3431 = vmatpush1.bf16.msra.mxu0 %v3334
    %3432 = vmatprep.subr.bf16.mxu0 %v3337
    %3433 = vmatpush1.bf16.msra.mxu0 %v3336
    %3434 = vmatprep.subr.bf16.mxu0 %v3339
    %3435 = vmatpush1.bf16.msra.mxu0 %v3338
    %3436 = vmatprep.subr.bf16.mxu0 %v3341
    %3437 = vmatpush1.bf16.msra.mxu0 %v3340
    %3438 = vmatprep.subr.bf16.mxu0 %v3343
    %3439 = vmatpush1.bf16.msra.mxu0 %v3342
    %3440 = vmatprep.subr.bf16.mxu0 %v3345
    %3441 = vmatpush1.bf16.msra.mxu0 %v3344
    %3442 = vmatprep.subr.bf16.mxu0 %v3347
    %3443 = vmatpush1.bf16.msra.mxu0 %v3346
    %3444 = vmatprep.subr.bf16.mxu0 %v3349
    %3445 = vmatpush1.bf16.msra.mxu0 %v3348
    %3446 = vmatprep.subr.bf16.mxu0 %v3351
    %3447 = vmatpush1.bf16.msra.mxu0 %v3350
    %3448 = vmatprep.subr.bf16.mxu0 %v3353
    %3449 = vmatpush1.bf16.msra.mxu0 %v3352
    %3450 = vmatprep.subr.bf16.mxu0 %v3355
    %3451 = vmatpush1.bf16.msra.mxu0 %v3354
    %3452 = vmatprep.subr.bf16.mxu0 %v3357
    %3453 = vmatpush1.bf16.msra.mxu0 %v3356
    %3454 = vmatprep.subr.bf16.mxu0 %v3359
    %3455 = vmatpush1.bf16.msra.mxu0 %v3358
    %3456 = vmatprep.subr.bf16.mxu0 %v3361
    %3457 = vmatpush1.bf16.msra.mxu0 %v3360
    %3458 = vmatprep.subr.bf16.mxu0 %v3363
    %3459 = vmatpush1.bf16.msra.mxu0 %v3362
    %3460 = vmatprep.mubr.bf16.mxu0 %v3126
    %3461 = vmatmul.mubr.bf16.gmra.mrb[0].mxu0 %v3125
    %v3462 = vpop.f32.mrb[0].mxu0
    %v3463 = vadd.f32 %v3181, %v3462
    %v3464 = vpop.f32.mrb[0].mxu0
    %v3465 = vadd.f32 %v3185, %v3464
    %v3466 = vpop.f32.mrb[0].mxu0
    %v3467 = vpop.f32.mrb[0].mxu0
    %3468 = vdwg.mxu0
    %3469 = vmatprep.subr.bf16.mxu0 %v3365
    %3470 = vmatpush1.bf16.msra.mxu0 %v3364
    %3471 = vmatprep.subr.bf16.mxu0 %v3367
    %3472 = vmatpush1.bf16.msra.mxu0 %v3366
    %3473 = vmatprep.subr.bf16.mxu0 %v3369
    %3474 = vmatpush1.bf16.msra.mxu0 %v3368
    %3475 = vmatprep.subr.bf16.mxu0 %v3371
    %3476 = vmatpush1.bf16.msra.mxu0 %v3370
    %3477 = vmatprep.subr.bf16.mxu0 %v3373
    %3478 = vmatpush1.bf16.msra.mxu0 %v3372
    %3479 = vmatprep.subr.bf16.mxu0 %v3375
    %3480 = vmatpush1.bf16.msra.mxu0 %v3374
    %3481 = vmatprep.subr.bf16.mxu0 %v3377
    %3482 = vmatpush1.bf16.msra.mxu0 %v3376
    %3483 = vmatprep.subr.bf16.mxu0 %v3379
    %3484 = vmatpush1.bf16.msra.mxu0 %v3378
    %3485 = vmatprep.subr.bf16.mxu0 0
    %3486 = vmatpush1.bf16.msra.mxu0 0
    %3487 = vmatprep.subr.bf16.mxu0 0
    %3488 = vmatpush1.bf16.msra.mxu0 0
    %3489 = vmatprep.subr.bf16.mxu0 0
    %3490 = vmatpush1.bf16.msra.mxu0 0
    %3491 = vmatprep.subr.bf16.mxu0 0
    %3492 = vmatpush1.bf16.msra.mxu0 0
    %3493 = vmatprep.subr.bf16.mxu0 0
    %3494 = vmatpush1.bf16.msra.mxu0 0
    %3495 = vmatprep.subr.bf16.mxu0 0
    %3496 = vmatpush1.bf16.msra.mxu0 0
    %3497 = vmatprep.subr.bf16.mxu0 0
    %3498 = vmatpush1.bf16.msra.mxu0 0
    %3499 = vmatprep.subr.bf16.mxu0 0
    %3500 = vmatpush1.bf16.msra.mxu0 0
    %3501 = vmatprep.mubr.bf16.mxu0 0
    %3502 = vmatmul.mubr.bf16.gmra.mrb[0].mxu0 %v3127
    %v3503 = vpop.f32.mrb[0].mxu0
    %v3504 = vadd.f32 %v3463, %v3503
    %v3505 = vpop.f32.mrb[0].mxu0
    %v3506 = vadd.f32 %v3465, %v3505
    %v3507 = vpop.f32.mrb[0].mxu0
    %v3508 = vpop.f32.mrb[0].mxu0
    %3509 = vdwg.mxu0
    %vm3510 = vcmp.gt.f32.partialorder %v3504, 0.0
    %vm3511 = vcmp.gt.f32.partialorder %v3506, 0.0
    %v3512 = vmul.f32 %v3504, 0.2
    %v3513 = vmul.f32 %v3506, 0.2
    %v3514 = vsel %vm3510, %v3504, %v3512
    %v3515 = vsel %vm3511, %v3506, %v3513
    %v3516 = vpack.c.bf16 %v3514, %v3514
    %v3517 = vpack.c.bf16 %v3515, %v3515
    %v3518 = vld [vmem:[%s9] sm:$0xf]
    %v3519 = vld [vmem:[%s9 + $0x4] sm:$0xf]
    %v3520 = vld [vmem:[%s9 + $0x8] sm:$0xf]
    %v3521 = vld [vmem:[%s9 + $0xc] sm:$0xf]
    %v3522 = vld [vmem:[%s9 + $0x10] sm:$0xf]
    %v3523 = vld [vmem:[%s9 + $0x14] sm:$0xf]
    %v3524 = vld [vmem:[%s9 + $0x18] sm:$0xf]
    %v3525 = vld [vmem:[%s9 + $0x1c] sm:$0xf]
    %v3526 = vld [vmem:[%s9 + $0x20] sm:$0xf]
    %v3527 = vld [vmem:[%s9 + $0x24] sm:$0xf]
    %v3528 = vld [vmem:[%s9 + $0x28] sm:$0xf]
    %v3529 = vld [vmem:[%s9 + $0x2c] sm:$0xf]
    %v3530 = vld [vmem:[%s9 + $0x30] sm:$0xf]
    %v3531 = vld [vmem:[%s9 + $0x34] sm:$0xf]
    %v3532 = vld [vmem:[%s9 + $0x38] sm:$0xf]
    %v3533 = vld [vmem:[%s9 + $0x3c] sm:$0xf]
    %v3534 = vld [vmem:[%s9 + $0x40] sm:$0xf]
    %v3535 = vld [vmem:[%s9 + $0x44] sm:$0xf]
    %v3536 = vld [vmem:[%s9 + $0x48] sm:$0xf]
    %v3537 = vld [vmem:[%s9 + $0x4c] sm:$0xf]
    %v3538 = vld [vmem:[%s9 + $0x50] sm:$0xf]
    %v3539 = vld [vmem:[%s9 + $0x54] sm:$0xf]
    %v3540 = vld [vmem:[%s9 + $0x58] sm:$0xf]
    %v3541 = vld [vmem:[%s9 + $0x5c] sm:$0xf]
    %v3542 = vld [vmem:[%s9 + $0x60] sm:$0xf]
    %v3543 = vld [vmem:[%s9 + $0x64] sm:$0xf]
    %v3544 = vld [vmem:[%s9 + $0x68] sm:$0xf]
    %v3545 = vld [vmem:[%s9 + $0x6c] sm:$0xf]
    %v3546 = vld [vmem:[%s9 + $0x70] sm:$0xf]
    %v3547 = vld [vmem:[%s9 + $0x74] sm:$0xf]
    %v3548 = vld [vmem:[%s9 + $0x78] sm:$0xf]
    %v3549 = vld [vmem:[%s9 + $0x7c] sm:$0xf]
    %v3550 = vld [vmem:[%s10] sm:$0x1]
    %v3552 = vlaneseq
    %v3553 = vshrl.u32 %v3552, 7
    %v3554 = vsub.s32 0, %v3553
    %v3555 = vrot.slane %v3550, %v3554
    %v3589 = vunpack.c.l.b16 %v3518
    %v3590 = vunpack.c.l.b16 %v3519
    %v3591 = vunpack.c.l.b16 %v3520
    %v3592 = vunpack.c.l.b16 %v3521
    %v3593 = vunpack.c.l.b16 %v3522
    %v3594 = vunpack.c.l.b16 %v3523
    %v3595 = vunpack.c.l.b16 %v3524
    %v3596 = vunpack.c.l.b16 %v3525
    %v3597 = vunpack.c.l.b16 %v3526
    %v3598 = vunpack.c.l.b16 %v3527
    %v3599 = vunpack.c.l.b16 %v3528
    %v3600 = vunpack.c.l.b16 %v3529
    %v3601 = vunpack.c.l.b16 %v3530
    %v3602 = vunpack.c.l.b16 %v3531
    %v3603 = vunpack.c.l.b16 %v3532
    %v3604 = vunpack.c.l.b16 %v3533
    %v3605 = vunpack.c.l.b16 %v3534
    %v3606 = vunpack.c.l.b16 %v3535
    %v3607 = vunpack.c.l.b16 %v3536
    %v3608 = vunpack.c.l.b16 %v3537
    %v3609 = vunpack.c.l.b16 %v3538
    %v3610 = vunpack.c.l.b16 %v3539
    %v3611 = vunpack.c.l.b16 %v3540
    %v3612 = vunpack.c.l.b16 %v3541
    %v3613 = vunpack.c.l.b16 %v3542
    %v3614 = vunpack.c.l.b16 %v3543
    %v3615 = vunpack.c.l.b16 %v3544
    %v3616 = vunpack.c.l.b16 %v3545
    %v3617 = vunpack.c.l.b16 %v3546
    %v3618 = vunpack.c.l.b16 %v3547
    %v3619 = vunpack.c.l.b16 %v3548
    %v3620 = vunpack.c.l.b16 %v3549
    %v3621 = vpack.c.b16 %v3590, %v3589
    %v3622 = vpack.c.b16 %v3592, %v3591
    %v3623 = vpack.c.b16 %v3594, %v3593
    %v3624 = vpack.c.b16 %v3596, %v3595
    %v3625 = vpack.c.b16 %v3598, %v3597
    %v3626 = vpack.c.b16 %v3600, %v3599
    %v3627 = vpack.c.b16 %v3602, %v3601
    %v3628 = vpack.c.b16 %v3604, %v3603
    %v3629 = vpack.c.b16 %v3606, %v3605
    %v3630 = vpack.c.b16 %v3608, %v3607
    %v3631 = vpack.c.b16 %v3610, %v3609
    %v3632 = vpack.c.b16 %v3612, %v3611
    %v3633 = vpack.c.b16 %v3614, %v3613
    %v3634 = vpack.c.b16 %v3616, %v3615
    %v3635 = vpack.c.b16 %v3618, %v3617
    %v3636 = vpack.c.b16 %v3620, %v3619
    %3653 = vmatprep.subr.bf16.mxu0 0
    %3654 = vmatpush1.bf16.msra.mxu0 %v3621
    %3655 = vmatprep.subr.bf16.mxu0 0
    %3656 = vmatpush1.bf16.msra.mxu0 %v3622
    %3657 = vmatprep.subr.bf16.mxu0 0
    %3658 = vmatpush1.bf16.msra.mxu0 %v3623
    %3659 = vmatprep.subr.bf16.mxu0 0
    %3660 = vmatpush1.bf16.msra.mxu0 %v3624
    %3661 = vmatprep.subr.bf16.mxu0 0
    %3662 = vmatpush1.bf16.msra.mxu0 %v3625
    %3663 = vmatprep.subr.bf16.mxu0 0
    %3664 = vmatpush1.bf16.msra.mxu0 %v3626
    %3665 = vmatprep.subr.bf16.mxu0 0
    %3666 = vmatpush1.bf16.msra.mxu0 %v3627
    %3667 = vmatprep.subr.bf16.mxu0 0
    %3668 = vmatpush1.bf16.msra.mxu0 %v3628
    %3669 = vmatprep.subr.bf16.mxu0 0
    %3670 = vmatpush1.bf16.msra.mxu0 %v3629
    %3671 = vmatprep.subr.bf16.mxu0 0
    %3672 = vmatpush1.bf16.msra.mxu0 %v3630
    %3673 = vmatprep.subr.bf16.mxu0 0
    %3674 = vmatpush1.bf16.msra.mxu0 %v3631
    %3675 = vmatprep.subr.bf16.mxu0 0
    %3676 = vmatpush1.bf16.msra.mxu0 %v3632
    %3677 = vmatprep.subr.bf16.mxu0 0
    %3678 = vmatpush1.bf16.msra.mxu0 %v3633
    %3679 = vmatprep.subr.bf16.mxu0 0
    %3680 = vmatpush1.bf16.msra.mxu0 %v3634
    %3681 = vmatprep.subr.bf16.mxu0 0
    %3682 = vmatpush1.bf16.msra.mxu0 %v3635
    %3683 = vmatprep.subr.bf16.mxu0 0
    %3684 = vmatpush1.bf16.msra.mxu0 %v3636
    %3685 = vmatprep.mubr.bf16.mxu0 %v3517
    %3686 = vmatmul.mubr.bf16.gmra.mrb[0].mxu0 %v3516
    %v3687 = vpop.f32.mrb[0].mxu0
    %v3688 = vadd.f32 %v3555, %v3687
    %v3689 = vpop.f32.mrb[0].mxu0
    %v3690 = vpop.f32.mrb[0].mxu0
    %v3691 = vpop.f32.mrb[0].mxu0
    %3692 = vdwg.mxu0
    %vm3693 = vcmp.gt.f32.partialorder %v3688, 0.0
    %v3694 = vmul.f32 %v3688, 0.2
    %v3695 = vsel %vm3693, %v3688, %v3694
    %v3696 = vld [vmem:[%s11] sm:$0x1]
    %v3698 = vlaneseq
    %v3699 = vshrl.u32 %v3698, 7
    %v3700 = vsub.s32 0, %v3699
    %v3701 = vrot.slane %v3696, %v3700
    %v3703 = vmul.f32 %v3695, %v3701
    %3704 = vadd.xlane.f32.xlu0 %v3703
    %v3705 = vpop.xlane.xlu0 %3704
    %v3706 = vld [vmem:[#allocation2] sm:$0x1]
    %v3708 = vlaneseq
    %v3709 = vshrl.u32 %v3708, 7
    %v3710 = vsub.s32 0, %v3709
    %v3711 = vrot.slane %v3706, %v3710
    %v3713 = vadd.f32 %v3705, %v3711
    %vm3714 = vcmask 7168
    %3715 = vst.msk [vmem:[%s13] sm:$0xff] %vm3714, %v3713
    // Predicated region
    $region70: #{enhanced_upvote_predictor.3} parent=1 // pred_check
      _
    $region71: #{enhanced_upvote_predictor.3} parent=1 // pred_check_branch
      %3717 = sbr.rel (0) target = $region73
    $region72: #{enhanced_upvote_predictor.3} parent=1 // pred_region
      _
    $region73: #{enhanced_upvote_predictor.3} parent=1 // pred_fallthru
      _
    // Predicated region
    $region74: #{enhanced_upvote_predictor.3} parent=1 // pred_check
      _
    $region75: #{enhanced_upvote_predictor.3} parent=1 // pred_check_branch
      %3719 = sbr.rel (0) target = $region77
    $region76: #{enhanced_upvote_predictor.3} parent=1 // pred_region
      _
    $region77: #{enhanced_upvote_predictor.3} parent=1 // pred_fallthru
      _
    %3720 = vsyncpa [#allocation4], 1
    %3721 = vsyncpa [#allocation6], 1
    %3722 = vsyncpa [#allocation9], 1

</llo_original>
